<compile_context>
chip_gen: v7x
topology: tpu7x:2x2x1
jax: 0.10.0
libtpu: 0.0.40
codegen_flags: <defaults>
</compile_context>

<pallas_src>
import functools

import jax
import jax.numpy as jnp
from jax.experimental import pallas as pl
from jax.experimental.pallas import tpu as pltpu


# ---- padded, lane-dense geometry ----
LANE = 128
TILE_B = 256      # batch tile: fills the v6e/v7x MXU M dimension, multiple of 8
IN_PAD = 128      # input_size (32)  -> 128
HID_PAD = 128     # hidden (64)      -> 128
LAT_PAD = 128     # latent_size (64) -> 128


def _silu(x):
    return x * jax.nn.sigmoid(x)


def vae_kernel(
    x_ref,
    ew1_ref, eb1_ref, ew2_ref, eb2_ref,
    ewm_ref, ebm_ref, ewv_ref, ebv_ref,
    dw1_ref, db1_ref, dw2_ref, db2_ref, dw3_ref, db3_ref,
    out_ref, div_ref,
    *, batch_size, tile_b,
):
    """One batch tile of the fused VAE forward pass.

    Activations are (TILE_B, 128): batch rows on sublanes, features lane-dense.
    Weights are pre-transposed [in, out] (y = x @ W + b == torch x @ W.T + b)
    and stay resident in VMEM across grid steps.
    """
    xb = x_ref[...]                                      # bf16 (TILE_B, IN_PAD)

    # ---------------- encoder ----------------
    h = jnp.dot(xb, ew1_ref[...], preferred_element_type=jnp.float32) + eb1_ref[...]
    h = _silu(h).astype(jnp.bfloat16)
    h = jnp.dot(h, ew2_ref[...], preferred_element_type=jnp.float32) + eb2_ref[...]
    h = _silu(h).astype(jnp.bfloat16)

    # Separate lane-aligned mean / logvar heads (replaces the lane-64 slice).
    mean = jnp.dot(h, ewm_ref[...], preferred_element_type=jnp.float32) + ebm_ref[...]
    logvar = jnp.dot(h, ewv_ref[...], preferred_element_type=jnp.float32) + ebv_ref[...]

    # ---------------- KL divergence: per-tile partial sums ----------------
    # kl(mean, logvar, 0, 0) elementwise; padded latent lanes have
    # mean = logvar = 0 -> contribute exactly 0.  Rows past the real batch
    # (zero-padded batch rows) only need masking when B % TILE_B != 0.
    latent_kl = 0.5 * (-1.0 - logvar + jnp.exp(logvar) + mean * mean)
    if batch_size % tile_b != 0:
        row = (jax.lax.broadcasted_iota(jnp.int32, latent_kl.shape, 0)
               + pl.program_id(0) * tile_b)
        latent_kl = jnp.where(row < batch_size, latent_kl, 0.0)

    # Tree-reduce the tile's rows down to a single (8, 128) register
    # (static, sublane-tile-aligned slices -> pure VPU adds, no XLU,
    #  log2(TILE_B/8) dependency depth).
    part = latent_kl
    rows = tile_b
    while rows > 8:
        half = rows // 2
        part = part[:half, :] + part[half:rows, :]
        rows = half
    div_ref[...] = part.reshape(1, 8, LAT_PAD).astype(div_ref.dtype)

    # ---------------- reparameteriser (eval path) ----------------
    sample = mean.astype(jnp.bfloat16)

    # ---------------- decoder ----------------
    d = jnp.dot(sample, dw1_ref[...], preferred_element_type=jnp.float32) + db1_ref[...]
    d = _silu(d).astype(jnp.bfloat16)
    d = jnp.dot(d, dw2_ref[...], preferred_element_type=jnp.float32) + db2_ref[...]
    d = _silu(d).astype(jnp.bfloat16)
    recon = jnp.dot(d, dw3_ref[...], preferred_element_type=jnp.float32) + db3_ref[...]

    out_ref[...] = recon.astype(out_ref.dtype)


def vae_forward(x, params, input_size, latent_size):
    B = x.shape[0]
    num_tiles = pl.cdiv(B, TILE_B)
    b_pad = num_tiles * TILE_B

    # Zero-pad batch rows and feature lanes; bf16 halves the x DMA bytes.
    x_pad = jnp.zeros((b_pad, IN_PAD), jnp.float32).at[:B, :input_size].set(x)
    x_pad = x_pad.astype(jnp.bfloat16)

    weight_spec = pl.BlockSpec((LANE, LANE), lambda i: (0, 0))   # resident
    bias_spec = pl.BlockSpec((1, LANE), lambda i: (0, 0))        # resident
    in_specs = [pl.BlockSpec((TILE_B, IN_PAD), lambda i: (i, 0))]
    for _ in range(7):
        in_specs.extend([weight_spec, bias_spec])

    out_shape = (
        jax.ShapeDtypeStruct((b_pad, IN_PAD), jnp.float32),
        jax.ShapeDtypeStruct((num_tiles, 8, LAT_PAD), jnp.float32),
    )
    out_specs = (
        pl.BlockSpec((TILE_B, IN_PAD), lambda i: (i, 0)),
        pl.BlockSpec((1, 8, LAT_PAD), lambda i: (i, 0, 0)),
    )

    # Advisory cost estimate for XLA's scheduler.
    flops = 2 * b_pad * (IN_PAD * HID_PAD + HID_PAD * HID_PAD
                         + 2 * HID_PAD * LAT_PAD
                         + LAT_PAD * HID_PAD + HID_PAD * HID_PAD
                         + HID_PAD * IN_PAD)
    transcendentals = b_pad * (4 * HID_PAD + LAT_PAD)
    bytes_accessed = (x_pad.size * x_pad.dtype.itemsize
                      + sum(p.size * p.dtype.itemsize for p in params)
                      + b_pad * IN_PAD * 4 + num_tiles * 8 * LAT_PAD * 4)

    fn = pl.pallas_call(
        functools.partial(vae_kernel, batch_size=B, tile_b=TILE_B),
        grid=(num_tiles,),
        in_specs=in_specs,
        out_specs=out_specs,
        out_shape=out_shape,
        compiler_params=pltpu.CompilerParams(
            dimension_semantics=("parallel",)),
        cost_estimate=pl.CostEstimate(
            flops=flops, transcendentals=transcendentals,
            bytes_accessed=bytes_accessed),
    )
    recon_pad, div_parts = fn(x_pad, *params)
    recon = recon_pad[:B, :input_size]
    div = jnp.sum(div_parts) / B          # sum over latent of batch-mean KL
    return recon, div


def init_params(key, input_size, latent_size):
    """Synthetic parameters matching the torch module, zero-padded lane-dense.

    Real weights live in the top-left corner of (128,128) bf16 matrices
    (pre-transposed [in, out]); biases are (1,128) f32.  Zero padding keeps
    padded lanes exactly zero through every layer.
    """
    real_dims = [
        (input_size, 64),          # encoder L1
        (64, 64),                  # encoder L2
        (64, latent_size),         # encoder mean head   (enc3 cols [:latent])
        (64, latent_size),         # encoder logvar head (enc3 cols [latent:])
        (latent_size, 64),         # decoder L1
        (64, 64),                  # decoder L2
        (64, input_size),          # decoder L3
    ]
    params = []
    for din, dout in real_dims:
        key, kw, kb = jax.random.split(key, 3)
        scale = 1.0 / jnp.sqrt(din)
        w = jax.random.uniform(kw, (din, dout), jnp.float32, -scale, scale)
        b = jax.random.uniform(kb, (1, dout), jnp.float32, -scale, scale)
        w_pad = jnp.zeros((LANE, LANE), jnp.float32).at[:din, :dout].set(w)
        b_pad = jnp.zeros((1, LANE), jnp.float32).at[:, :dout].set(b)
        params.extend([w_pad.astype(jnp.bfloat16), b_pad])
    return tuple(params)


def reference_forward(x, params, input_size, latent_size):
    """Pure-JAX reference with the same padded / bf16-operand numerics."""
    (ew1, eb1, ew2, eb2, ewm, ebm, ewv, ebv,
     dw1, db1, dw2, db2, dw3, db3) = params
    B = x.shape[0]
    xb = jnp.zeros((B, IN_PAD), jnp.float32).at[:, :input_size].set(x)
    xb = xb.astype(jnp.bfloat16)

    h = _silu(jnp.dot(xb, ew1, preferred_element_type=jnp.float32) + eb1)
    h = _silu(jnp.dot(h.astype(jnp.bfloat16), ew2,
                      preferred_element_type=jnp.float32) + eb2).astype(jnp.bfloat16)
    mean = jnp.dot(h, ewm, preferred_element_type=jnp.float32) + ebm
    logvar = jnp.dot(h, ewv, preferred_element_type=jnp.float32) + ebv

    m = mean[:, :latent_size]
    lv = logvar[:, :latent_size]
    div = jnp.sum(jnp.mean(0.5 * (-1.0 - lv + jnp.exp(lv) + m * m), axis=0))

    s = mean.astype(jnp.bfloat16)
    d = _silu(jnp.dot(s, dw1, preferred_element_type=jnp.float32) + db1)
    d = _silu(jnp.dot(d.astype(jnp.bfloat16), dw2,
                      preferred_element_type=jnp.float32) + db2)
    recon = jnp.dot(d.astype(jnp.bfloat16), dw3,
                    preferred_element_type=jnp.float32) + db3
    return recon[:, :input_size], div


if __name__ == "__main__":
    batch = 300          # NOT a multiple of TILE_B -> exercises 2 tiles + masking
    input_size = 32
    latent_size = 64

    key = jax.random.PRNGKey(0)
    kx, kp = jax.random.split(key)
    x = jax.random.normal(kx, (batch, input_size), jnp.float32)
    params = init_params(kp, input_size, latent_size)

    recon, div = vae_forward(x, params, input_size, latent_size)
    recon = jax.block_until_ready(recon)
    div = jax.block_until_ready(div)

    ref_recon, ref_div = reference_forward(x, params, input_size, latent_size)
    assert recon.shape == (batch, input_size)
    assert jnp.allclose(recon, ref_recon, atol=2e-3, rtol=2e-3), (
        float(jnp.max(jnp.abs(recon - ref_recon))))
    assert jnp.allclose(div, ref_div, atol=2e-3, rtol=2e-3), (
        float(div), float(ref_div))

    print("KERNEL_OK")
</pallas_src>

<mosaic_0001>
module attributes {stable_mosaic.version = 11 : i64} {
  func.func @vae_kernel(%arg0: i32, %arg1: memref<256x128xbf16, #tpu.memory_space<vmem>>, %arg2: memref<128x128xbf16, #tpu.memory_space<vmem>>, %arg3: memref<1x128xf32, #tpu.memory_space<vmem>>, %arg4: memref<128x128xbf16, #tpu.memory_space<vmem>>, %arg5: memref<1x128xf32, #tpu.memory_space<vmem>>, %arg6: memref<128x128xbf16, #tpu.memory_space<vmem>>, %arg7: memref<1x128xf32, #tpu.memory_space<vmem>>, %arg8: memref<128x128xbf16, #tpu.memory_space<vmem>>, %arg9: memref<1x128xf32, #tpu.memory_space<vmem>>, %arg10: memref<128x128xbf16, #tpu.memory_space<vmem>>, %arg11: memref<1x128xf32, #tpu.memory_space<vmem>>, %arg12: memref<128x128xbf16, #tpu.memory_space<vmem>>, %arg13: memref<1x128xf32, #tpu.memory_space<vmem>>, %arg14: memref<128x128xbf16, #tpu.memory_space<vmem>>, %arg15: memref<1x128xf32, #tpu.memory_space<vmem>>, %arg16: memref<256x128xf32, #tpu.memory_space<vmem>>, %arg17: memref<1x8x128xf32, #tpu.memory_space<vmem>>) attributes {dimension_semantics = [#tpu.dimension_semantics<parallel>], iteration_bounds = array<i64: 2>, scalar_prefetch = 0 : i64, scratch_operands = 0 : i64, tpu.core_type = #tpu.core_type<tc>, window_params = [{transform_indices = @transform_0, window_bounds = array<i64: 256, 128>}, {pipeline_mode = #tpu.pipeline_mode<synchronous>, transform_indices = @transform_1, window_bounds = array<i64: 128, 128>}, {pipeline_mode = #tpu.pipeline_mode<synchronous>, transform_indices = @transform_2, window_bounds = array<i64: 1, 128>}, {pipeline_mode = #tpu.pipeline_mode<synchronous>, transform_indices = @transform_3, window_bounds = array<i64: 128, 128>}, {pipeline_mode = #tpu.pipeline_mode<synchronous>, transform_indices = @transform_4, window_bounds = array<i64: 1, 128>}, {pipeline_mode = #tpu.pipeline_mode<synchronous>, transform_indices = @transform_5, window_bounds = array<i64: 128, 128>}, {pipeline_mode = #tpu.pipeline_mode<synchronous>, transform_indices = @transform_6, window_bounds = array<i64: 1, 128>}, {pipeline_mode = #tpu.pipeline_mode<synchronous>, transform_indices = @transform_7, window_bounds = array<i64: 128, 128>}, {pipeline_mode = #tpu.pipeline_mode<synchronous>, transform_indices = @transform_8, window_bounds = array<i64: 1, 128>}, {pipeline_mode = #tpu.pipeline_mode<synchronous>, transform_indices = @transform_9, window_bounds = array<i64: 128, 128>}, {pipeline_mode = #tpu.pipeline_mode<synchronous>, transform_indices = @transform_10, window_bounds = array<i64: 1, 128>}, {pipeline_mode = #tpu.pipeline_mode<synchronous>, transform_indices = @transform_11, window_bounds = array<i64: 128, 128>}, {pipeline_mode = #tpu.pipeline_mode<synchronous>, transform_indices = @transform_12, window_bounds = array<i64: 1, 128>}, {pipeline_mode = #tpu.pipeline_mode<synchronous>, transform_indices = @transform_13, window_bounds = array<i64: 128, 128>}, {pipeline_mode = #tpu.pipeline_mode<synchronous>, transform_indices = @transform_14, window_bounds = array<i64: 1, 128>}, {transform_indices = @transform_15, window_bounds = array<i64: 256, 128>}, {transform_indices = @transform_16, window_bounds = array<i64: 1, 8, 128>}]} {
    %c0 = arith.constant 0 : index
    %c0_0 = arith.constant 0 : index
    %0 = vector.load %arg1[%c0, %c0_0] : memref<256x128xbf16, #tpu.memory_space<vmem>>, vector<256x128xbf16>
    %c0_1 = arith.constant 0 : index
    %c0_2 = arith.constant 0 : index
    %1 = vector.load %arg2[%c0_1, %c0_2] : memref<128x128xbf16, #tpu.memory_space<vmem>>, vector<128x128xbf16>
    %cst = arith.constant dense<0.000000e+00> : vector<256x128xf32>
    %2 = tpu.matmul %0, %1, %cst {dimension_numbers = #tpu.dot_dimension_numbers<[1], [0], [0], [1], [0, 0, 1, 1], [], []>} : vector<256x128xbf16>, vector<128x128xbf16>, vector<256x128xf32> -> vector<256x128xf32>
    %c0_3 = arith.constant 0 : index
    %c0_4 = arith.constant 0 : index
    %3 = vector.load %arg3[%c0_3, %c0_4] : memref<1x128xf32, #tpu.memory_space<vmem>>, vector<1x128xf32>
    %4 = vector.broadcast %3 : vector<1x128xf32> to vector<256x128xf32>
    %5 = arith.addf %2, %4 : vector<256x128xf32>
    %6 = arith.negf %5 : vector<256x128xf32>
    %7 = math.exp %6 : vector<256x128xf32>
    %cst_5 = arith.constant 1.000000e+00 : f32
    %8 = vector.broadcast %cst_5 : f32 to vector<256x128xf32>
    %9 = arith.addf %8, %7 : vector<256x128xf32>
    %10 = arith.divf %8, %9 : vector<256x128xf32>
    %11 = arith.mulf %5, %10 : vector<256x128xf32>
    %12 = arith.truncf %11 : vector<256x128xf32> to vector<256x128xbf16>
    %c0_6 = arith.constant 0 : index
    %c0_7 = arith.constant 0 : index
    %13 = vector.load %arg4[%c0_6, %c0_7] : memref<128x128xbf16, #tpu.memory_space<vmem>>, vector<128x128xbf16>
    %cst_8 = arith.constant dense<0.000000e+00> : vector<256x128xf32>
    %14 = tpu.matmul %12, %13, %cst_8 {dimension_numbers = #tpu.dot_dimension_numbers<[1], [0], [0], [1], [0, 0, 1, 1], [], []>} : vector<256x128xbf16>, vector<128x128xbf16>, vector<256x128xf32> -> vector<256x128xf32>
    %c0_9 = arith.constant 0 : index
    %c0_10 = arith.constant 0 : index
    %15 = vector.load %arg5[%c0_9, %c0_10] : memref<1x128xf32, #tpu.memory_space<vmem>>, vector<1x128xf32>
    %16 = vector.broadcast %15 : vector<1x128xf32> to vector<256x128xf32>
    %17 = arith.addf %14, %16 : vector<256x128xf32>
    %18 = arith.negf %17 : vector<256x128xf32>
    %19 = math.exp %18 : vector<256x128xf32>
    %cst_11 = arith.constant 1.000000e+00 : f32
    %20 = vector.broadcast %cst_11 : f32 to vector<256x128xf32>
    %21 = arith.addf %20, %19 : vector<256x128xf32>
    %22 = arith.divf %20, %21 : vector<256x128xf32>
    %23 = arith.mulf %17, %22 : vector<256x128xf32>
    %24 = arith.truncf %23 : vector<256x128xf32> to vector<256x128xbf16>
    %c0_12 = arith.constant 0 : index
    %c0_13 = arith.constant 0 : index
    %25 = vector.load %arg6[%c0_12, %c0_13] : memref<128x128xbf16, #tpu.memory_space<vmem>>, vector<128x128xbf16>
    %cst_14 = arith.constant dense<0.000000e+00> : vector<256x128xf32>
    %26 = tpu.matmul %24, %25, %cst_14 {dimension_numbers = #tpu.dot_dimension_numbers<[1], [0], [0], [1], [0, 0, 1, 1], [], []>} : vector<256x128xbf16>, vector<128x128xbf16>, vector<256x128xf32> -> vector<256x128xf32>
    %c0_15 = arith.constant 0 : index
    %c0_16 = arith.constant 0 : index
    %27 = vector.load %arg7[%c0_15, %c0_16] : memref<1x128xf32, #tpu.memory_space<vmem>>, vector<1x128xf32>
    %28 = vector.broadcast %27 : vector<1x128xf32> to vector<256x128xf32>
    %29 = arith.addf %26, %28 : vector<256x128xf32>
    %c0_17 = arith.constant 0 : index
    %c0_18 = arith.constant 0 : index
    %30 = vector.load %arg8[%c0_17, %c0_18] : memref<128x128xbf16, #tpu.memory_space<vmem>>, vector<128x128xbf16>
    %cst_19 = arith.constant dense<0.000000e+00> : vector<256x128xf32>
    %31 = tpu.matmul %24, %30, %cst_19 {dimension_numbers = #tpu.dot_dimension_numbers<[1], [0], [0], [1], [0, 0, 1, 1], [], []>} : vector<256x128xbf16>, vector<128x128xbf16>, vector<256x128xf32> -> vector<256x128xf32>
    %c0_20 = arith.constant 0 : index
    %c0_21 = arith.constant 0 : index
    %32 = vector.load %arg9[%c0_20, %c0_21] : memref<1x128xf32, #tpu.memory_space<vmem>>, vector<1x128xf32>
    %33 = vector.broadcast %32 : vector<1x128xf32> to vector<256x128xf32>
    %34 = arith.addf %31, %33 : vector<256x128xf32>
    %cst_22 = arith.constant -1.000000e+00 : f32
    %35 = vector.broadcast %cst_22 : f32 to vector<256x128xf32>
    %36 = arith.subf %35, %34 : vector<256x128xf32>
    %37 = math.exp %34 : vector<256x128xf32>
    %38 = arith.addf %36, %37 : vector<256x128xf32>
    %39 = arith.mulf %29, %29 : vector<256x128xf32>
    %40 = arith.addf %38, %39 : vector<256x128xf32>
    %cst_23 = arith.constant 5.000000e-01 : f32
    %41 = vector.broadcast %cst_23 : f32 to vector<256x128xf32>
    %42 = arith.mulf %41, %40 : vector<256x128xf32>
    %43 = tpu.iota {dimensions = array<i32: 0>} : vector<256x128xi32>
    %c256_i32 = arith.constant 256 : i32
    %44 = arith.muli %arg0, %c256_i32 : i32
    %45 = vector.broadcast %44 : i32 to vector<256x128xi32>
    %46 = arith.addi %43, %45 : vector<256x128xi32>
    %c300_i32 = arith.constant 300 : i32
    %47 = vector.broadcast %c300_i32 : i32 to vector<256x128xi32>
    %48 = arith.cmpi slt, %46, %47 : vector<256x128xi32>
    %cst_24 = arith.constant 0.000000e+00 : f32
    %49 = vector.broadcast %cst_24 : f32 to vector<256x128xf32>
    %50 = arith.select %48, %42, %49 : vector<256x128xi1>, vector<256x128xf32>
    %51 = vector.extract_strided_slice %50 {offsets = [0, 0], sizes = [128, 128], strides = [1, 1]} : vector<256x128xf32> to vector<128x128xf32>
    %52 = vector.extract_strided_slice %50 {offsets = [128, 0], sizes = [128, 128], strides = [1, 1]} : vector<256x128xf32> to vector<128x128xf32>
    %53 = arith.addf %51, %52 : vector<128x128xf32>
    %54 = vector.extract_strided_slice %53 {offsets = [0, 0], sizes = [64, 128], strides = [1, 1]} : vector<128x128xf32> to vector<64x128xf32>
    %55 = vector.extract_strided_slice %53 {offsets = [64, 0], sizes = [64, 128], strides = [1, 1]} : vector<128x128xf32> to vector<64x128xf32>
    %56 = arith.addf %54, %55 : vector<64x128xf32>
    %57 = vector.extract_strided_slice %56 {offsets = [0, 0], sizes = [32, 128], strides = [1, 1]} : vector<64x128xf32> to vector<32x128xf32>
    %58 = vector.extract_strided_slice %56 {offsets = [32, 0], sizes = [32, 128], strides = [1, 1]} : vector<64x128xf32> to vector<32x128xf32>
    %59 = arith.addf %57, %58 : vector<32x128xf32>
    %60 = vector.extract_strided_slice %59 {offsets = [0, 0], sizes = [16, 128], strides = [1, 1]} : vector<32x128xf32> to vector<16x128xf32>
    %61 = vector.extract_strided_slice %59 {offsets = [16, 0], sizes = [16, 128], strides = [1, 1]} : vector<32x128xf32> to vector<16x128xf32>
    %62 = arith.addf %60, %61 : vector<16x128xf32>
    %63 = vector.extract_strided_slice %62 {offsets = [0, 0], sizes = [8, 128], strides = [1, 1]} : vector<16x128xf32> to vector<8x128xf32>
    %64 = vector.extract_strided_slice %62 {offsets = [8, 0], sizes = [8, 128], strides = [1, 1]} : vector<16x128xf32> to vector<8x128xf32>
    %65 = arith.addf %63, %64 : vector<8x128xf32>
    %66 = vector.shape_cast %65 : vector<8x128xf32> to vector<1x8x128xf32>
    %c0_25 = arith.constant 0 : index
    %c0_26 = arith.constant 0 : index
    %c0_27 = arith.constant 0 : index
    %67 = vector.load %arg17[%c0_25, %c0_26, %c0_27] : memref<1x8x128xf32, #tpu.memory_space<vmem>>, vector<1x8x128xf32>
    tpu.vector_store %arg17[%c0_25, %c0_26, %c0_27], %66 {strides = array<i32>} : memref<1x8x128xf32, #tpu.memory_space<vmem>>, vector<1x8x128xf32>,
    %68 = arith.truncf %29 : vector<256x128xf32> to vector<256x128xbf16>
    %c0_28 = arith.constant 0 : index
    %c0_29 = arith.constant 0 : index
    %69 = vector.load %arg10[%c0_28, %c0_29] : memref<128x128xbf16, #tpu.memory_space<vmem>>, vector<128x128xbf16>
    %cst_30 = arith.constant dense<0.000000e+00> : vector<256x128xf32>
    %70 = tpu.matmul %68, %69, %cst_30 {dimension_numbers = #tpu.dot_dimension_numbers<[1], [0], [0], [1], [0, 0, 1, 1], [], []>} : vector<256x128xbf16>, vector<128x128xbf16>, vector<256x128xf32> -> vector<256x128xf32>
    %c0_31 = arith.constant 0 : index
    %c0_32 = arith.constant 0 : index
    %71 = vector.load %arg11[%c0_31, %c0_32] : memref<1x128xf32, #tpu.memory_space<vmem>>, vector<1x128xf32>
    %72 = vector.broadcast %71 : vector<1x128xf32> to vector<256x128xf32>
    %73 = arith.addf %70, %72 : vector<256x128xf32>
    %74 = arith.negf %73 : vector<256x128xf32>
    %75 = math.exp %74 : vector<256x128xf32>
    %cst_33 = arith.constant 1.000000e+00 : f32
    %76 = vector.broadcast %cst_33 : f32 to vector<256x128xf32>
    %77 = arith.addf %76, %75 : vector<256x128xf32>
    %78 = arith.divf %76, %77 : vector<256x128xf32>
    %79 = arith.mulf %73, %78 : vector<256x128xf32>
    %80 = arith.truncf %79 : vector<256x128xf32> to vector<256x128xbf16>
    %c0_34 = arith.constant 0 : index
    %c0_35 = arith.constant 0 : index
    %81 = vector.load %arg12[%c0_34, %c0_35] : memref<128x128xbf16, #tpu.memory_space<vmem>>, vector<128x128xbf16>
    %cst_36 = arith.constant dense<0.000000e+00> : vector<256x128xf32>
    %82 = tpu.matmul %80, %81, %cst_36 {dimension_numbers = #tpu.dot_dimension_numbers<[1], [0], [0], [1], [0, 0, 1, 1], [], []>} : vector<256x128xbf16>, vector<128x128xbf16>, vector<256x128xf32> -> vector<256x128xf32>
    %c0_37 = arith.constant 0 : index
    %c0_38 = arith.constant 0 : index
    %83 = vector.load %arg13[%c0_37, %c0_38] : memref<1x128xf32, #tpu.memory_space<vmem>>, vector<1x128xf32>
    %84 = vector.broadcast %83 : vector<1x128xf32> to vector<256x128xf32>
    %85 = arith.addf %82, %84 : vector<256x128xf32>
    %86 = arith.negf %85 : vector<256x128xf32>
    %87 = math.exp %86 : vector<256x128xf32>
    %cst_39 = arith.constant 1.000000e+00 : f32
    %88 = vector.broadcast %cst_39 : f32 to vector<256x128xf32>
    %89 = arith.addf %88, %87 : vector<256x128xf32>
    %90 = arith.divf %88, %89 : vector<256x128xf32>
    %91 = arith.mulf %85, %90 : vector<256x128xf32>
    %92 = arith.truncf %91 : vector<256x128xf32> to vector<256x128xbf16>
    %c0_40 = arith.constant 0 : index
    %c0_41 = arith.constant 0 : index
    %93 = vector.load %arg14[%c0_40, %c0_41] : memref<128x128xbf16, #tpu.memory_space<vmem>>, vector<128x128xbf16>
    %cst_42 = arith.constant dense<0.000000e+00> : vector<256x128xf32>
    %94 = tpu.matmul %92, %93, %cst_42 {dimension_numbers = #tpu.dot_dimension_numbers<[1], [0], [0], [1], [0, 0, 1, 1], [], []>} : vector<256x128xbf16>, vector<128x128xbf16>, vector<256x128xf32> -> vector<256x128xf32>
    %c0_43 = arith.constant 0 : index
    %c0_44 = arith.constant 0 : index
    %95 = vector.load %arg15[%c0_43, %c0_44] : memref<1x128xf32, #tpu.memory_space<vmem>>, vector<1x128xf32>
    %96 = vector.broadcast %95 : vector<1x128xf32> to vector<256x128xf32>
    %97 = arith.addf %94, %96 : vector<256x128xf32>
    %c0_45 = arith.constant 0 : index
    %c0_46 = arith.constant 0 : index
    %98 = vector.load %arg16[%c0_45, %c0_46] : memref<256x128xf32, #tpu.memory_space<vmem>>, vector<256x128xf32>
    tpu.vector_store %arg16[%c0_45, %c0_46], %97 {strides = array<i32>} : memref<256x128xf32, #tpu.memory_space<vmem>>, vector<256x128xf32>,
    return
  }
  func.func @transform_0(%arg0: i32) -> (i32, i32) {
    %c0_i32 = arith.constant 0 : i32
    %c0_i32_0 = arith.constant 0 : i32
    return %arg0, %c0_i32 : i32, i32
  }
  func.func @transform_1(%arg0: i32) -> (i32, i32) {
    %c0_i32 = arith.constant 0 : i32
    %c0_i32_0 = arith.constant 0 : i32
    %c0_i32_1 = arith.constant 0 : i32
    return %c0_i32, %c0_i32_0 : i32, i32
  }
  func.func @transform_2(%arg0: i32) -> (i32, i32) {
    %c0_i32 = arith.constant 0 : i32
    %c0_i32_0 = arith.constant 0 : i32
    %c0_i32_1 = arith.constant 0 : i32
    return %c0_i32, %c0_i32_0 : i32, i32
  }
  func.func @transform_3(%arg0: i32) -> (i32, i32) {
    %c0_i32 = arith.constant 0 : i32
    %c0_i32_0 = arith.constant 0 : i32
    %c0_i32_1 = arith.constant 0 : i32
    return %c0_i32, %c0_i32_0 : i32, i32
  }
  func.func @transform_4(%arg0: i32) -> (i32, i32) {
    %c0_i32 = arith.constant 0 : i32
    %c0_i32_0 = arith.constant 0 : i32
    %c0_i32_1 = arith.constant 0 : i32
    return %c0_i32, %c0_i32_0 : i32, i32
  }
  func.func @transform_5(%arg0: i32) -> (i32, i32) {
    %c0_i32 = arith.constant 0 : i32
    %c0_i32_0 = arith.constant 0 : i32
    %c0_i32_1 = arith.constant 0 : i32
    return %c0_i32, %c0_i32_0 : i32, i32
  }
  func.func @transform_6(%arg0: i32) -> (i32, i32) {
    %c0_i32 = arith.constant 0 : i32
    %c0_i32_0 = arith.constant 0 : i32
    %c0_i32_1 = arith.constant 0 : i32
    return %c0_i32, %c0_i32_0 : i32, i32
  }
  func.func @transform_7(%arg0: i32) -> (i32, i32) {
    %c0_i32 = arith.constant 0 : i32
    %c0_i32_0 = arith.constant 0 : i32
    %c0_i32_1 = arith.constant 0 : i32
    return %c0_i32, %c0_i32_0 : i32, i32
  }
  func.func @transform_8(%arg0: i32) -> (i32, i32) {
    %c0_i32 = arith.constant 0 : i32
    %c0_i32_0 = arith.constant 0 : i32
    %c0_i32_1 = arith.constant 0 : i32
    return %c0_i32, %c0_i32_0 : i32, i32
  }
  func.func @transform_9(%arg0: i32) -> (i32, i32) {
    %c0_i32 = arith.constant 0 : i32
    %c0_i32_0 = arith.constant 0 : i32
    %c0_i32_1 = arith.constant 0 : i32
    return %c0_i32, %c0_i32_0 : i32, i32
  }
  func.func @transform_10(%arg0: i32) -> (i32, i32) {
    %c0_i32 = arith.constant 0 : i32
    %c0_i32_0 = arith.constant 0 : i32
    %c0_i32_1 = arith.constant 0 : i32
    return %c0_i32, %c0_i32_0 : i32, i32
  }
  func.func @transform_11(%arg0: i32) -> (i32, i32) {
    %c0_i32 = arith.constant 0 : i32
    %c0_i32_0 = arith.constant 0 : i32
    %c0_i32_1 = arith.constant 0 : i32
    return %c0_i32, %c0_i32_0 : i32, i32
  }
  func.func @transform_12(%arg0: i32) -> (i32, i32) {
    %c0_i32 = arith.constant 0 : i32
    %c0_i32_0 = arith.constant 0 : i32
    %c0_i32_1 = arith.constant 0 : i32
    return %c0_i32, %c0_i32_0 : i32, i32
  }
  func.func @transform_13(%arg0: i32) -> (i32, i32) {
    %c0_i32 = arith.constant 0 : i32
    %c0_i32_0 = arith.constant 0 : i32
    %c0_i32_1 = arith.constant 0 : i32
    return %c0_i32, %c0_i32_0 : i32, i32
  }
  func.func @transform_14(%arg0: i32) -> (i32, i32) {
    %c0_i32 = arith.constant 0 : i32
    %c0_i32_0 = arith.constant 0 : i32
    %c0_i32_1 = arith.constant 0 : i32
    return %c0_i32, %c0_i32_0 : i32, i32
  }
  func.func @transform_15(%arg0: i32) -> (i32, i32) {
    %c0_i32 = arith.constant 0 : i32
    %c0_i32_0 = arith.constant 0 : i32
    return %arg0, %c0_i32 : i32, i32
  }
  func.func @transform_16(%arg0: i32) -> (i32, i32, i32) {
    %c0_i32 = arith.constant 0 : i32
    %c0_i32_0 = arith.constant 0 : i32
    %c0_i32_1 = arith.constant 0 : i32
    return %arg0, %c0_i32, %c0_i32_0 : i32, i32, i32
  }
}

</mosaic_0001>

<llo_original>
// kernel: tpu_custom_call.1
$region0: #{tpu_custom_call.1}
  #allocation0 [shape = 'u32[]', space=smem, size = 0x4, offset = 0x4, fixed_abs, tag = 'smem constant byte address 0x4 - core index']
  #allocation1 [shape = 'u32[144,128]{1,0:T(1,128)}', space=vmem, size = 0x12000, scoped, tag = 'internal scratch']
  %s0 = inlined_call_operand.hbm [shape: bf16[512,128], index: 0, kind: input, shape index: {}]
  %s1 = inlined_call_operand.hbm [shape: bf16[128,128], index: 1, kind: input, shape index: {}]
  %s2 = inlined_call_operand.vmem [shape: f32[1,128], index: 2, kind: input, shape index: {}]
  %s3 = inlined_call_operand.hbm [shape: bf16[128,128], index: 3, kind: input, shape index: {}]
  %s4 = inlined_call_operand.vmem [shape: f32[1,128], index: 4, kind: input, shape index: {}]
  %s5 = inlined_call_operand.hbm [shape: bf16[128,128], index: 5, kind: input, shape index: {}]
  %s6 = inlined_call_operand.vmem [shape: f32[1,128], index: 6, kind: input, shape index: {}]
  %s7 = inlined_call_operand.hbm [shape: bf16[128,128], index: 7, kind: input, shape index: {}]
  %s8 = inlined_call_operand.vmem [shape: f32[1,128], index: 8, kind: input, shape index: {}]
  %s9 = inlined_call_operand.hbm [shape: bf16[128,128], index: 9, kind: input, shape index: {}]
  %s10 = inlined_call_operand.vmem [shape: f32[1,128], index: 10, kind: input, shape index: {}]
  %s11 = inlined_call_operand.hbm [shape: bf16[128,128], index: 11, kind: input, shape index: {}]
  %s12 = inlined_call_operand.vmem [shape: f32[1,128], index: 12, kind: input, shape index: {}]
  %s13 = inlined_call_operand.hbm [shape: bf16[128,128], index: 13, kind: input, shape index: {}]
  %s14 = inlined_call_operand.vmem [shape: f32[1,128], index: 14, kind: input, shape index: {}]
  %s15 = inlined_call_operand.hbm [shape: f32[512,128], index: 15, kind: output, shape index: {0}]
  %s16 = inlined_call_operand.hbm [shape: f32[2,8,128], index: 16, kind: output, shape index: {1}]
  %17 = xla_tuple %s15, %s16
  %s18 = sld [smem:[#allocation0]]
  $region133: #{tpu_custom_call.1} parent=0
    _
  %s20 = ssub.s32 1, %s18
  %s21 = scalar_select 0, %s20, %s18
  $region1: #{tpu_custom_call.1} parent=0
    #allocation2 [shape = 'u8[131072]{0}', space=vmem, size = 0x20000, scoped, tag = 'input window, operand 0']
    #allocation3 [shape = 's32[2]{0}', space=sflag, size = 0x8, scoped, tag = 'scoped memory for tpu_custom_call.1']
    #allocation4 [shape = 's32[2]{0}', space=sflag, size = 0x8, scoped, tag = 'scoped memory for tpu_custom_call.1']
    #allocation5 [shape = 'u8[32768]{0}', space=vmem, size = 0x8000, scoped, tag = 'input window, operand 1, single buffered']
    #allocation6 [shape = 's32[1]{0}', space=sflag, size = 0x4, scoped, tag = 'scoped memory for tpu_custom_call.1']
    #allocation7 [shape = 'u8[32768]{0}', space=vmem, size = 0x8000, scoped, tag = 'input window, operand 3, single buffered']
    #allocation8 [shape = 'u8[32768]{0}', space=vmem, size = 0x8000, scoped, tag = 'input window, operand 5, single buffered']
    #allocation9 [shape = 's32[1]{0}', space=sflag, size = 0x4, scoped, tag = 'scoped memory for tpu_custom_call.1']
    #allocation10 [shape = 'u8[32768]{0}', space=vmem, size = 0x8000, scoped, tag = 'input window, operand 7, single buffered']
    #allocation11 [shape = 'u8[32768]{0}', space=vmem, size = 0x8000, scoped, tag = 'input window, operand 9, single buffered']
    #allocation12 [shape = 's32[1]{0}', space=sflag, size = 0x4, scoped, tag = 'scoped memory for tpu_custom_call.1']
    #allocation13 [shape = 'u8[32768]{0}', space=vmem, size = 0x8000, scoped, tag = 'input window, operand 11, single buffered']
    #allocation14 [shape = 'u8[32768]{0}', space=vmem, size = 0x8000, scoped, tag = 'input window, operand 13, single buffered']
    #allocation15 [shape = 's32[1]{0}', space=sflag, size = 0x4, scoped, tag = 'scoped memory for tpu_custom_call.1']
    #allocation16 [shape = 'u8[262144]{0}', space=vmem, size = 0x40000, scoped, tag = 'output window, operand 0']
    #allocation17 [shape = 'u8[8192]{0}', space=vmem, size = 0x2000, scoped, tag = 'output window, operand 1']
    #allocation18 [shape = 's32[2]{0}', space=sflag, size = 0x8, scoped, tag = 'scoped memory for tpu_custom_call.1']
    %22 = vsyncpa [#allocation3], 0
    %s23 = scalar_lea.sflag [#allocation3], 1
    %24 = vsyncpa %s23, 0
    %25 = vsyncpa [#allocation6], 0
    %26 = vsyncpa [#allocation9], 0
    %27 = vsyncpa [#allocation12], 0
    %28 = vsyncpa [#allocation15], 0
    %29 = vsyncpa [#allocation4], 0
    %s30 = scalar_lea.sflag [#allocation4], 1
    %31 = vsyncpa %s30, 0
    %32 = vsyncpa [#allocation18], 0
    %s33 = scalar_lea.sflag [#allocation18], 1
    %34 = vsyncpa %s33, 0
    loop: start=0, step=1, limit=4
    $region2: #{tpu_custom_call.1} parent=1 // loop_pre_header
      _
    $region3: #{tpu_custom_call.1} parent=1 // loop_header
      %s36 = sphi 0, %s40
      %p37 = scmp.ge.s32.totalorder %s36, 4
      %s46 = sphi 0, %s48
      %s49 = sphi 0, %s46
      %s50 = sphi 0, %s49
      %s66 = sphi 0, %s50
      %s70 = sphi 0, %s70
      %s72 = sphi 0, %s70
      %s73 = sphi 0, %s72
      %s87 = sphi 0, %s73
      %s91 = sphi 0, %s91
      %s93 = sphi 0, %s91
      %s94 = sphi 0, %s93
      %s108 = sphi 0, %s94
      %s112 = sphi 0, %s112
      %s114 = sphi 0, %s112
      %s115 = sphi 0, %s114
      %s129 = sphi 0, %s115
      %s133 = sphi 0, %s133
      %s135 = sphi 0, %s133
      %s136 = sphi 0, %s135
      %s150 = sphi 0, %s136
      %s154 = sphi 0, %s154
      %s156 = sphi 0, %s154
      %s157 = sphi 0, %s156
      %s171 = sphi 0, %s157
      %s175 = sphi 0, %s175
      %s177 = sphi 0, %s175
      %s178 = sphi 0, %s177
      %s192 = sphi 0, %s178
      %s196 = sphi 0, %s196
      %s198 = sphi 0, %s196
      %s199 = sphi 0, %s198
      %s213 = sphi 0, %s199
      %s217 = sphi 0, %s217
      %s219 = sphi 0, %s217
      %s220 = sphi 0, %s219
      %s234 = sphi 0, %s220
      %s238 = sphi 0, %s238
      %s240 = sphi 0, %s238
      %s241 = sphi 0, %s240
      %s255 = sphi 0, %s241
      %s259 = sphi 0, %s259
      %s261 = sphi 0, %s259
      %s262 = sphi 0, %s261
      %s276 = sphi 0, %s262
      %s280 = sphi 0, %s280
      %s282 = sphi 0, %s280
      %s283 = sphi 0, %s282
      %s297 = sphi 0, %s283
      %s301 = sphi 0, %s301
      %s303 = sphi 0, %s301
      %s304 = sphi 0, %s303
      %s318 = sphi 0, %s304
      %s322 = sphi 0, %s322
      %s324 = sphi 0, %s322
      %s325 = sphi 0, %s324
      %s339 = sphi 0, %s325
      %s343 = sphi 0, %s343
      %s345 = sphi 0, %s343
      %s346 = sphi 0, %s345
      %s360 = sphi 0, %s346
      %s366 = sphi 0, %s368
      %s369 = sphi 0, %s366
      %s370 = sphi 0, %s369
      %s386 = sphi 0, %s370
      %s392 = sphi 0, %s394
      %s395 = sphi 0, %s392
      %s396 = sphi 0, %s395
      %s412 = sphi 0, %s396
    $region4: #{tpu_custom_call.1} parent=1 // loop_header_branch
      %39 = sbr.rel (%p37) target = $region8
    $region5: #{tpu_custom_call.1} parent=1 // loop_body
      %s41 = ssub.s32 %s36, 1
      %s42 = ssub.s32 %s36, 2
      %s43 = sadd.s32 %s36, 1
      %s44 = ssub.s32 %s36, %s43
      %p45 = scmp.eq.s32.totalorder %s44, 0
      %s47 = sadd.s32 %s46, 1
      %s48 = scalar_select %p45, %s46, %s47
      %p51 = pneg %p45
      %p52 = scmp.eq.s32.totalorder %s36, 1
      %p53 = por %p51, %p52
      %p54 = scmp.ne.s32.totalorder %s46, %s49
      %p55 = scmp.eq.s32.totalorder %s36, 0
      %p56 = por %p54, %p55
      %p57 = scmp.ne.s32.totalorder %s46, %s49
      %p58 = scmp.eq.s32.totalorder %s41, 1
      %p59 = por %p57, %p58
      %p60 = scmp.ne.s32.totalorder %s49, %s50
      %p61 = scmp.eq.s32.totalorder %s41, 0
      %p62 = por %p60, %p61
      %p63 = scmp.ne.s32.totalorder %s49, %s50
      %p64 = scmp.eq.s32.totalorder %s42, 1
      %p65 = por %p63, %p64
      %p67 = scmp.ne.s32.totalorder %s50, %s66
      %p68 = scmp.eq.s32.totalorder %s42, 0
      %p69 = por %p67, %p68
      %s71 = sadd.s32 %s70, 1
      %p74 = scmp.eq.s32.totalorder %s36, 1
      %p75 = scmp.ne.s32.totalorder %s70, %s72
      %p76 = scmp.eq.s32.totalorder %s36, 0
      %p77 = por %p75, %p76
      %p78 = scmp.ne.s32.totalorder %s70, %s72
      %p79 = scmp.eq.s32.totalorder %s41, 1
      %p80 = por %p78, %p79
      %p81 = scmp.ne.s32.totalorder %s72, %s73
      %p82 = scmp.eq.s32.totalorder %s41, 0
      %p83 = por %p81, %p82
      %p84 = scmp.ne.s32.totalorder %s72, %s73
      %p85 = scmp.eq.s32.totalorder %s42, 1
      %p86 = por %p84, %p85
      %p88 = scmp.ne.s32.totalorder %s73, %s87
      %p89 = scmp.eq.s32.totalorder %s42, 0
      %p90 = por %p88, %p89
      %s92 = sadd.s32 %s91, 1
      %p95 = scmp.eq.s32.totalorder %s36, 1
      %p96 = scmp.ne.s32.totalorder %s91, %s93
      %p97 = scmp.eq.s32.totalorder %s36, 0
      %p98 = por %p96, %p97
      %p99 = scmp.ne.s32.totalorder %s91, %s93
      %p100 = scmp.eq.s32.totalorder %s41, 1
      %p101 = por %p99, %p100
      %p102 = scmp.ne.s32.totalorder %s93, %s94
      %p103 = scmp.eq.s32.totalorder %s41, 0
      %p104 = por %p102, %p103
      %p105 = scmp.ne.s32.totalorder %s93, %s94
      %p106 = scmp.eq.s32.totalorder %s42, 1
      %p107 = por %p105, %p106
      %p109 = scmp.ne.s32.totalorder %s94, %s108
      %p110 = scmp.eq.s32.totalorder %s42, 0
      %p111 = por %p109, %p110
      %s113 = sadd.s32 %s112, 1
      %p116 = scmp.eq.s32.totalorder %s36, 1
      %p117 = scmp.ne.s32.totalorder %s112, %s114
      %p118 = scmp.eq.s32.totalorder %s36, 0
      %p119 = por %p117, %p118
      %p120 = scmp.ne.s32.totalorder %s112, %s114
      %p121 = scmp.eq.s32.totalorder %s41, 1
      %p122 = por %p120, %p121
      %p123 = scmp.ne.s32.totalorder %s114, %s115
      %p124 = scmp.eq.s32.totalorder %s41, 0
      %p125 = por %p123, %p124
      %p126 = scmp.ne.s32.totalorder %s114, %s115
      %p127 = scmp.eq.s32.totalorder %s42, 1
      %p128 = por %p126, %p127
      %p130 = scmp.ne.s32.totalorder %s115, %s129
      %p131 = scmp.eq.s32.totalorder %s42, 0
      %p132 = por %p130, %p131
      %s134 = sadd.s32 %s133, 1
      %p137 = scmp.eq.s32.totalorder %s36, 1
      %p138 = scmp.ne.s32.totalorder %s133, %s135
      %p139 = scmp.eq.s32.totalorder %s36, 0
      %p140 = por %p138, %p139
      %p141 = scmp.ne.s32.totalorder %s133, %s135
      %p142 = scmp.eq.s32.totalorder %s41, 1
      %p143 = por %p141, %p142
      %p144 = scmp.ne.s32.totalorder %s135, %s136
      %p145 = scmp.eq.s32.totalorder %s41, 0
      %p146 = por %p144, %p145
      %p147 = scmp.ne.s32.totalorder %s135, %s136
      %p148 = scmp.eq.s32.totalorder %s42, 1
      %p149 = por %p147, %p148
      %p151 = scmp.ne.s32.totalorder %s136, %s150
      %p152 = scmp.eq.s32.totalorder %s42, 0
      %p153 = por %p151, %p152
      %s155 = sadd.s32 %s154, 1
      %p158 = scmp.eq.s32.totalorder %s36, 1
      %p159 = scmp.ne.s32.totalorder %s154, %s156
      %p160 = scmp.eq.s32.totalorder %s36, 0
      %p161 = por %p159, %p160
      %p162 = scmp.ne.s32.totalorder %s154, %s156
      %p163 = scmp.eq.s32.totalorder %s41, 1
      %p164 = por %p162, %p163
      %p165 = scmp.ne.s32.totalorder %s156, %s157
      %p166 = scmp.eq.s32.totalorder %s41, 0
      %p167 = por %p165, %p166
      %p168 = scmp.ne.s32.totalorder %s156, %s157
      %p169 = scmp.eq.s32.totalorder %s42, 1
      %p170 = por %p168, %p169
      %p172 = scmp.ne.s32.totalorder %s157, %s171
      %p173 = scmp.eq.s32.totalorder %s42, 0
      %p174 = por %p172, %p173
      %s176 = sadd.s32 %s175, 1
      %p179 = scmp.eq.s32.totalorder %s36, 1
      %p180 = scmp.ne.s32.totalorder %s175, %s177
      %p181 = scmp.eq.s32.totalorder %s36, 0
      %p182 = por %p180, %p181
      %p183 = scmp.ne.s32.totalorder %s175, %s177
      %p184 = scmp.eq.s32.totalorder %s41, 1
      %p185 = por %p183, %p184
      %p186 = scmp.ne.s32.totalorder %s177, %s178
      %p187 = scmp.eq.s32.totalorder %s41, 0
      %p188 = por %p186, %p187
      %p189 = scmp.ne.s32.totalorder %s177, %s178
      %p190 = scmp.eq.s32.totalorder %s42, 1
      %p191 = por %p189, %p190
      %p193 = scmp.ne.s32.totalorder %s178, %s192
      %p194 = scmp.eq.s32.totalorder %s42, 0
      %p195 = por %p193, %p194
      %s197 = sadd.s32 %s196, 1
      %p200 = scmp.eq.s32.totalorder %s36, 1
      %p201 = scmp.ne.s32.totalorder %s196, %s198
      %p202 = scmp.eq.s32.totalorder %s36, 0
      %p203 = por %p201, %p202
      %p204 = scmp.ne.s32.totalorder %s196, %s198
      %p205 = scmp.eq.s32.totalorder %s41, 1
      %p206 = por %p204, %p205
      %p207 = scmp.ne.s32.totalorder %s198, %s199
      %p208 = scmp.eq.s32.totalorder %s41, 0
      %p209 = por %p207, %p208
      %p210 = scmp.ne.s32.totalorder %s198, %s199
      %p211 = scmp.eq.s32.totalorder %s42, 1
      %p212 = por %p210, %p211
      %p214 = scmp.ne.s32.totalorder %s199, %s213
      %p215 = scmp.eq.s32.totalorder %s42, 0
      %p216 = por %p214, %p215
      %s218 = sadd.s32 %s217, 1
      %p221 = scmp.eq.s32.totalorder %s36, 1
      %p222 = scmp.ne.s32.totalorder %s217, %s219
      %p223 = scmp.eq.s32.totalorder %s36, 0
      %p224 = por %p222, %p223
      %p225 = scmp.ne.s32.totalorder %s217, %s219
      %p226 = scmp.eq.s32.totalorder %s41, 1
      %p227 = por %p225, %p226
      %p228 = scmp.ne.s32.totalorder %s219, %s220
      %p229 = scmp.eq.s32.totalorder %s41, 0
      %p230 = por %p228, %p229
      %p231 = scmp.ne.s32.totalorder %s219, %s220
      %p232 = scmp.eq.s32.totalorder %s42, 1
      %p233 = por %p231, %p232
      %p235 = scmp.ne.s32.totalorder %s220, %s234
      %p236 = scmp.eq.s32.totalorder %s42, 0
      %p237 = por %p235, %p236
      %s239 = sadd.s32 %s238, 1
      %p242 = scmp.eq.s32.totalorder %s36, 1
      %p243 = scmp.ne.s32.totalorder %s238, %s240
      %p244 = scmp.eq.s32.totalorder %s36, 0
      %p245 = por %p243, %p244
      %p246 = scmp.ne.s32.totalorder %s238, %s240
      %p247 = scmp.eq.s32.totalorder %s41, 1
      %p248 = por %p246, %p247
      %p249 = scmp.ne.s32.totalorder %s240, %s241
      %p250 = scmp.eq.s32.totalorder %s41, 0
      %p251 = por %p249, %p250
      %p252 = scmp.ne.s32.totalorder %s240, %s241
      %p253 = scmp.eq.s32.totalorder %s42, 1
      %p254 = por %p252, %p253
      %p256 = scmp.ne.s32.totalorder %s241, %s255
      %p257 = scmp.eq.s32.totalorder %s42, 0
      %p258 = por %p256, %p257
      %s260 = sadd.s32 %s259, 1
      %p263 = scmp.eq.s32.totalorder %s36, 1
      %p264 = scmp.ne.s32.totalorder %s259, %s261
      %p265 = scmp.eq.s32.totalorder %s36, 0
      %p266 = por %p264, %p265
      %p267 = scmp.ne.s32.totalorder %s259, %s261
      %p268 = scmp.eq.s32.totalorder %s41, 1
      %p269 = por %p267, %p268
      %p270 = scmp.ne.s32.totalorder %s261, %s262
      %p271 = scmp.eq.s32.totalorder %s41, 0
      %p272 = por %p270, %p271
      %p273 = scmp.ne.s32.totalorder %s261, %s262
      %p274 = scmp.eq.s32.totalorder %s42, 1
      %p275 = por %p273, %p274
      %p277 = scmp.ne.s32.totalorder %s262, %s276
      %p278 = scmp.eq.s32.totalorder %s42, 0
      %p279 = por %p277, %p278
      %s281 = sadd.s32 %s280, 1
      %p284 = scmp.eq.s32.totalorder %s36, 1
      %p285 = scmp.ne.s32.totalorder %s280, %s282
      %p286 = scmp.eq.s32.totalorder %s36, 0
      %p287 = por %p285, %p286
      %p288 = scmp.ne.s32.totalorder %s280, %s282
      %p289 = scmp.eq.s32.totalorder %s41, 1
      %p290 = por %p288, %p289
      %p291 = scmp.ne.s32.totalorder %s282, %s283
      %p292 = scmp.eq.s32.totalorder %s41, 0
      %p293 = por %p291, %p292
      %p294 = scmp.ne.s32.totalorder %s282, %s283
      %p295 = scmp.eq.s32.totalorder %s42, 1
      %p296 = por %p294, %p295
      %p298 = scmp.ne.s32.totalorder %s283, %s297
      %p299 = scmp.eq.s32.totalorder %s42, 0
      %p300 = por %p298, %p299
      %s302 = sadd.s32 %s301, 1
      %p305 = scmp.eq.s32.totalorder %s36, 1
      %p306 = scmp.ne.s32.totalorder %s301, %s303
      %p307 = scmp.eq.s32.totalorder %s36, 0
      %p308 = por %p306, %p307
      %p309 = scmp.ne.s32.totalorder %s301, %s303
      %p310 = scmp.eq.s32.totalorder %s41, 1
      %p311 = por %p309, %p310
      %p312 = scmp.ne.s32.totalorder %s303, %s304
      %p313 = scmp.eq.s32.totalorder %s41, 0
      %p314 = por %p312, %p313
      %p315 = scmp.ne.s32.totalorder %s303, %s304
      %p316 = scmp.eq.s32.totalorder %s42, 1
      %p317 = por %p315, %p316
      %p319 = scmp.ne.s32.totalorder %s304, %s318
      %p320 = scmp.eq.s32.totalorder %s42, 0
      %p321 = por %p319, %p320
      %s323 = sadd.s32 %s322, 1
      %p326 = scmp.eq.s32.totalorder %s36, 1
      %p327 = scmp.ne.s32.totalorder %s322, %s324
      %p328 = scmp.eq.s32.totalorder %s36, 0
      %p329 = por %p327, %p328
      %p330 = scmp.ne.s32.totalorder %s322, %s324
      %p331 = scmp.eq.s32.totalorder %s41, 1
      %p332 = por %p330, %p331
      %p333 = scmp.ne.s32.totalorder %s324, %s325
      %p334 = scmp.eq.s32.totalorder %s41, 0
      %p335 = por %p333, %p334
      %p336 = scmp.ne.s32.totalorder %s324, %s325
      %p337 = scmp.eq.s32.totalorder %s42, 1
      %p338 = por %p336, %p337
      %p340 = scmp.ne.s32.totalorder %s325, %s339
      %p341 = scmp.eq.s32.totalorder %s42, 0
      %p342 = por %p340, %p341
      %s344 = sadd.s32 %s343, 1
      %p347 = scmp.eq.s32.totalorder %s36, 1
      %p348 = scmp.ne.s32.totalorder %s343, %s345
      %p349 = scmp.eq.s32.totalorder %s36, 0
      %p350 = por %p348, %p349
      %p351 = scmp.ne.s32.totalorder %s343, %s345
      %p352 = scmp.eq.s32.totalorder %s41, 1
      %p353 = por %p351, %p352
      %p354 = scmp.ne.s32.totalorder %s345, %s346
      %p355 = scmp.eq.s32.totalorder %s41, 0
      %p356 = por %p354, %p355
      %p357 = scmp.ne.s32.totalorder %s345, %s346
      %p358 = scmp.eq.s32.totalorder %s42, 1
      %p359 = por %p357, %p358
      %p361 = scmp.ne.s32.totalorder %s346, %s360
      %p362 = scmp.eq.s32.totalorder %s42, 0
      %p363 = por %p361, %p362
      %s364 = ssub.s32 %s36, %s43
      %p365 = scmp.eq.s32.totalorder %s364, 0
      %s367 = sadd.s32 %s366, 1
      %s368 = scalar_select %p365, %s366, %s367
      %p371 = pneg %p365
      %p372 = scmp.eq.s32.totalorder %s36, 1
      %p373 = por %p371, %p372
      %p374 = scmp.ne.s32.totalorder %s366, %s369
      %p375 = scmp.eq.s32.totalorder %s36, 0
      %p376 = por %p374, %p375
      %p377 = scmp.ne.s32.totalorder %s366, %s369
      %p378 = scmp.eq.s32.totalorder %s41, 1
      %p379 = por %p377, %p378
      %p380 = scmp.ne.s32.totalorder %s369, %s370
      %p381 = scmp.eq.s32.totalorder %s41, 0
      %p382 = por %p380, %p381
      %p383 = scmp.ne.s32.totalorder %s369, %s370
      %p384 = scmp.eq.s32.totalorder %s42, 1
      %p385 = por %p383, %p384
      %p387 = scmp.ne.s32.totalorder %s370, %s386
      %p388 = scmp.eq.s32.totalorder %s42, 0
      %p389 = por %p387, %p388
      %s390 = ssub.s32 %s36, %s43
      %p391 = scmp.eq.s32.totalorder %s390, 0
      %s393 = sadd.s32 %s392, 1
      %s394 = scalar_select %p391, %s392, %s393
      %p397 = pneg %p391
      %p398 = scmp.eq.s32.totalorder %s36, 1
      %p399 = por %p397, %p398
      %p400 = scmp.ne.s32.totalorder %s392, %s395
      %p401 = scmp.eq.s32.totalorder %s36, 0
      %p402 = por %p400, %p401
      %p403 = scmp.ne.s32.totalorder %s392, %s395
      %p404 = scmp.eq.s32.totalorder %s41, 1
      %p405 = por %p403, %p404
      %p406 = scmp.ne.s32.totalorder %s395, %s396
      %p407 = scmp.eq.s32.totalorder %s41, 0
      %p408 = por %p406, %p407
      %p409 = scmp.ne.s32.totalorder %s395, %s396
      %p410 = scmp.eq.s32.totalorder %s42, 1
      %p411 = por %p409, %p410
      %p413 = scmp.ne.s32.totalorder %s396, %s412
      %p414 = scmp.eq.s32.totalorder %s42, 0
      %p415 = por %p413, %p414
      %p416 = scmp.le.s32.totalorder 1, %s36
      %p417 = scmp.lt.s32.totalorder %s36, 3
      %p418 = pnand %p416, %p417
      %p419 = pneg %p418
      // Predicated region
      $region9: #{tpu_custom_call.1} parent=5 // pred_check
        _
      $region10: #{tpu_custom_call.1} parent=5 // pred_check_branch
        %421 = sbr.rel (%p418) target = $region12
      $region11: #{tpu_custom_call.1} parent=5 // pred_region
        %s422 = ssub.s32 %s36, 1
        // Predicated region
        $region13: #{tpu_custom_call.1} parent=11 // pred_check
          %p423 = pneg %p83
        $region14: #{tpu_custom_call.1} parent=11 // pred_check_branch
          %425 = sbr.rel (%p423) target = $region16
        $region15: #{tpu_custom_call.1} parent=11 // pred_region
          %s427 = ssub.s32 1024, 1024
          %428 = vsyncadd [#allocation6], %s427
          %s429 = sshll.u32 [#allocation5], 4
          %s430 = int_to_ptr.vmem [resolvable:$true] %s429
          %435 = dma.hbm_to_vmem [thread:$0]  %s1, 1024, %s430, [#allocation6], 64, 64, 4
        $region16: #{tpu_custom_call.1} parent=11 // pred_fallthru
          _
        // Predicated region
        $region17: #{tpu_custom_call.1} parent=11 // pred_check
          %p436 = pneg %p104
        $region18: #{tpu_custom_call.1} parent=11 // pred_check_branch
          %438 = sbr.rel (%p436) target = $region20
        $region19: #{tpu_custom_call.1} parent=11 // pred_region
          _
        $region20: #{tpu_custom_call.1} parent=11 // pred_fallthru
          _
        // Predicated region
        $region21: #{tpu_custom_call.1} parent=11 // pred_check
          %p439 = pneg %p125
        $region22: #{tpu_custom_call.1} parent=11 // pred_check_branch
          %441 = sbr.rel (%p439) target = $region24
        $region23: #{tpu_custom_call.1} parent=11 // pred_region
          %s443 = ssub.s32 1024, 1024
          %444 = vsyncadd [#allocation6], %s443
          %s445 = sshll.u32 [#allocation7], 4
          %s446 = int_to_ptr.vmem [resolvable:$true] %s445
          %451 = dma.hbm_to_vmem [thread:$0]  %s3, 1024, %s446, [#allocation6], 64, 64, 4
        $region24: #{tpu_custom_call.1} parent=11 // pred_fallthru
          _
        // Predicated region
        $region25: #{tpu_custom_call.1} parent=11 // pred_check
          %p452 = pneg %p146
        $region26: #{tpu_custom_call.1} parent=11 // pred_check_branch
          %454 = sbr.rel (%p452) target = $region28
        $region27: #{tpu_custom_call.1} parent=11 // pred_region
          _
        $region28: #{tpu_custom_call.1} parent=11 // pred_fallthru
          _
        // Predicated region
        $region29: #{tpu_custom_call.1} parent=11 // pred_check
          %p455 = pneg %p167
        $region30: #{tpu_custom_call.1} parent=11 // pred_check_branch
          %457 = sbr.rel (%p455) target = $region32
        $region31: #{tpu_custom_call.1} parent=11 // pred_region
          %s459 = ssub.s32 1024, 1024
          %460 = vsyncadd [#allocation9], %s459
          %s461 = sshll.u32 [#allocation8], 4
          %s462 = int_to_ptr.vmem [resolvable:$true] %s461
          %467 = dma.hbm_to_vmem [thread:$0]  %s5, 1024, %s462, [#allocation9], 64, 64, 4
        $region32: #{tpu_custom_call.1} parent=11 // pred_fallthru
          _
        // Predicated region
        $region33: #{tpu_custom_call.1} parent=11 // pred_check
          %p468 = pneg %p188
        $region34: #{tpu_custom_call.1} parent=11 // pred_check_branch
          %470 = sbr.rel (%p468) target = $region36
        $region35: #{tpu_custom_call.1} parent=11 // pred_region
          _
        $region36: #{tpu_custom_call.1} parent=11 // pred_fallthru
          _
        // Predicated region
        $region37: #{tpu_custom_call.1} parent=11 // pred_check
          %p471 = pneg %p209
        $region38: #{tpu_custom_call.1} parent=11 // pred_check_branch
          %473 = sbr.rel (%p471) target = $region40
        $region39: #{tpu_custom_call.1} parent=11 // pred_region
          %s475 = ssub.s32 1024, 1024
          %476 = vsyncadd [#allocation9], %s475
          %s477 = sshll.u32 [#allocation10], 4
          %s478 = int_to_ptr.vmem [resolvable:$true] %s477
          %483 = dma.hbm_to_vmem [thread:$0]  %s7, 1024, %s478, [#allocation9], 64, 64, 4
        $region40: #{tpu_custom_call.1} parent=11 // pred_fallthru
          _
        // Predicated region
        $region41: #{tpu_custom_call.1} parent=11 // pred_check
          %p484 = pneg %p230
        $region42: #{tpu_custom_call.1} parent=11 // pred_check_branch
          %486 = sbr.rel (%p484) target = $region44
        $region43: #{tpu_custom_call.1} parent=11 // pred_region
          _
        $region44: #{tpu_custom_call.1} parent=11 // pred_fallthru
          _
        // Predicated region
        $region45: #{tpu_custom_call.1} parent=11 // pred_check
          %p487 = pneg %p251
        $region46: #{tpu_custom_call.1} parent=11 // pred_check_branch
          %489 = sbr.rel (%p487) target = $region48
        $region47: #{tpu_custom_call.1} parent=11 // pred_region
          %s491 = ssub.s32 1024, 1024
          %492 = vsyncadd [#allocation12], %s491
          %s493 = sshll.u32 [#allocation11], 4
          %s494 = int_to_ptr.vmem [resolvable:$true] %s493
          %499 = dma.hbm_to_vmem [thread:$0]  %s9, 1024, %s494, [#allocation12], 64, 64, 4
        $region48: #{tpu_custom_call.1} parent=11 // pred_fallthru
          _
        // Predicated region
        $region49: #{tpu_custom_call.1} parent=11 // pred_check
          %p500 = pneg %p272
        $region50: #{tpu_custom_call.1} parent=11 // pred_check_branch
          %502 = sbr.rel (%p500) target = $region52
        $region51: #{tpu_custom_call.1} parent=11 // pred_region
          _
        $region52: #{tpu_custom_call.1} parent=11 // pred_fallthru
          _
        // Predicated region
        $region53: #{tpu_custom_call.1} parent=11 // pred_check
          %p503 = pneg %p293
        $region54: #{tpu_custom_call.1} parent=11 // pred_check_branch
          %505 = sbr.rel (%p503) target = $region56
        $region55: #{tpu_custom_call.1} parent=11 // pred_region
          %s507 = ssub.s32 1024, 1024
          %508 = vsyncadd [#allocation12], %s507
          %s509 = sshll.u32 [#allocation13], 4
          %s510 = int_to_ptr.vmem [resolvable:$true] %s509
          %515 = dma.hbm_to_vmem [thread:$0]  %s11, 1024, %s510, [#allocation12], 64, 64, 4
        $region56: #{tpu_custom_call.1} parent=11 // pred_fallthru
          _
        // Predicated region
        $region57: #{tpu_custom_call.1} parent=11 // pred_check
          %p516 = pneg %p314
        $region58: #{tpu_custom_call.1} parent=11 // pred_check_branch
          %518 = sbr.rel (%p516) target = $region60
        $region59: #{tpu_custom_call.1} parent=11 // pred_region
          _
        $region60: #{tpu_custom_call.1} parent=11 // pred_fallthru
          _
        // Predicated region
        $region61: #{tpu_custom_call.1} parent=11 // pred_check
          %p519 = pneg %p335
        $region62: #{tpu_custom_call.1} parent=11 // pred_check_branch
          %521 = sbr.rel (%p519) target = $region64
        $region63: #{tpu_custom_call.1} parent=11 // pred_region
          %s523 = ssub.s32 1024, 1024
          %524 = vsyncadd [#allocation15], %s523
          %s525 = sshll.u32 [#allocation14], 4
          %s526 = int_to_ptr.vmem [resolvable:$true] %s525
          %531 = dma.hbm_to_vmem [thread:$0]  %s13, 1024, %s526, [#allocation15], 64, 64, 4
        $region64: #{tpu_custom_call.1} parent=11 // pred_fallthru
          _
        // Predicated region
        $region65: #{tpu_custom_call.1} parent=11 // pred_check
          %p532 = pneg %p356
        $region66: #{tpu_custom_call.1} parent=11 // pred_check_branch
          %534 = sbr.rel (%p532) target = $region68
        $region67: #{tpu_custom_call.1} parent=11 // pred_region
          _
        $region68: #{tpu_custom_call.1} parent=11 // pred_fallthru
          _
      $region12: #{tpu_custom_call.1} parent=5 // pred_fallthru
        _
      %p535 = scmp.lt.s32.totalorder %s36, 2
      // Predicated region
      $region69: #{tpu_custom_call.1} parent=5 // pred_check
        %p536 = pneg %p535
      $region70: #{tpu_custom_call.1} parent=5 // pred_check_branch
        %538 = sbr.rel (%p536) target = $region72
      $region71: #{tpu_custom_call.1} parent=5 // pred_region
        // Predicated region
        $region73: #{tpu_custom_call.1} parent=71 // pred_check
          %p539 = pneg %p56
        $region74: #{tpu_custom_call.1} parent=71 // pred_check_branch
          %541 = sbr.rel (%p539) target = $region76
        $region75: #{tpu_custom_call.1} parent=71 // pred_region
          %s542 = sand.u32 %s46, 1
          %s543 = scalar_lea.sflag [#allocation3], %s542
          %s544 = sand.u32 %s46, 1
          %s545 = smul.addr %s544, 128
          %s546 = scalar_lea.vmem [#allocation2], %s545
          %s547 = smul.u32 32, %s36
          %s549 = ssub.s32 2048, 2048
          %550 = vsyncadd %s543, %s549
          %s551 = smul.addr %s547, 64
          %s552 = scalar_lea.hbm %s0, %s551
          %s553 = sshll.u32 %s546, 4
          %s554 = int_to_ptr.vmem [resolvable:$true] %s553
          %559 = dma.hbm_to_vmem [thread:$0]  %s552, 2048, %s554, %s543, 64, 64, 4
        $region76: #{tpu_custom_call.1} parent=71 // pred_fallthru
          _
      $region72: #{tpu_custom_call.1} parent=5 // pred_fallthru
        _
      %p560 = scmp.le.s32.totalorder 1, %s36
      %p561 = scmp.lt.s32.totalorder %s36, 3
      %p562 = pnand %p560, %p561
      %p563 = pneg %p562
      // Predicated region
      $region77: #{tpu_custom_call.1} parent=5 // pred_check
        _
      $region78: #{tpu_custom_call.1} parent=5 // pred_check_branch
        %565 = sbr.rel (%p562) target = $region80
      $region79: #{tpu_custom_call.1} parent=5 // pred_region
        %s566 = ssub.s32 %s36, 1
        %s567 = sand.u32 %s49, 1
        %s568 = scalar_lea.sflag [#allocation3], %s567
        %s569 = sand.u32 %s49, 1
        %s570 = smul.addr %s569, 128
        %s571 = scalar_lea.vmem [#allocation2], %s570
        // Predicated region
        $region81: #{tpu_custom_call.1} parent=79 // pred_check
          %p572 = pneg %p62
        $region82: #{tpu_custom_call.1} parent=79 // pred_check_branch
          %574 = sbr.rel (%p572) target = $region84
        $region83: #{tpu_custom_call.1} parent=79 // pred_region
          %575 = dma.done %s568, 2048
        $region84: #{tpu_custom_call.1} parent=79 // pred_fallthru
          _
        // Predicated region
        $region85: #{tpu_custom_call.1} parent=79 // pred_check
          %p576 = pneg %p83
        $region86: #{tpu_custom_call.1} parent=79 // pred_check_branch
          %578 = sbr.rel (%p576) target = $region88
        $region87: #{tpu_custom_call.1} parent=79 // pred_region
          %579 = dma.done [#allocation6], 1024
        $region88: #{tpu_custom_call.1} parent=79 // pred_fallthru
          _
        // Predicated region
        $region89: #{tpu_custom_call.1} parent=79 // pred_check
          %p580 = pneg %p125
        $region90: #{tpu_custom_call.1} parent=79 // pred_check_branch
          %582 = sbr.rel (%p580) target = $region92
        $region91: #{tpu_custom_call.1} parent=79 // pred_region
          %583 = dma.done [#allocation6], 1024
        $region92: #{tpu_custom_call.1} parent=79 // pred_fallthru
          _
        // Predicated region
        $region93: #{tpu_custom_call.1} parent=79 // pred_check
          %p584 = pneg %p167
        $region94: #{tpu_custom_call.1} parent=79 // pred_check_branch
          %586 = sbr.rel (%p584) target = $region96
        $region95: #{tpu_custom_call.1} parent=79 // pred_region
          %587 = dma.done [#allocation9], 1024
        $region96: #{tpu_custom_call.1} parent=79 // pred_fallthru
          _
        // Predicated region
        $region97: #{tpu_custom_call.1} parent=79 // pred_check
          %p588 = pneg %p209
        $region98: #{tpu_custom_call.1} parent=79 // pred_check_branch
          %590 = sbr.rel (%p588) target = $region100
        $region99: #{tpu_custom_call.1} parent=79 // pred_region
          %591 = dma.done [#allocation9], 1024
        $region100: #{tpu_custom_call.1} parent=79 // pred_fallthru
          _
        // Predicated region
        $region101: #{tpu_custom_call.1} parent=79 // pred_check
          %p592 = pneg %p251
        $region102: #{tpu_custom_call.1} parent=79 // pred_check_branch
          %594 = sbr.rel (%p592) target = $region104
        $region103: #{tpu_custom_call.1} parent=79 // pred_region
          %595 = dma.done [#allocation12], 1024
        $region104: #{tpu_custom_call.1} parent=79 // pred_fallthru
          _
        // Predicated region
        $region105: #{tpu_custom_call.1} parent=79 // pred_check
          %p596 = pneg %p293
        $region106: #{tpu_custom_call.1} parent=79 // pred_check_branch
          %598 = sbr.rel (%p596) target = $region108
        $region107: #{tpu_custom_call.1} parent=79 // pred_region
          %599 = dma.done [#allocation12], 1024
        $region108: #{tpu_custom_call.1} parent=79 // pred_fallthru
          _
        // Predicated region
        $region109: #{tpu_custom_call.1} parent=79 // pred_check
          %p600 = pneg %p335
        $region110: #{tpu_custom_call.1} parent=79 // pred_check_branch
          %602 = sbr.rel (%p600) target = $region112
        $region111: #{tpu_custom_call.1} parent=79 // pred_region
          %603 = dma.done [#allocation15], 1024
        $region112: #{tpu_custom_call.1} parent=79 // pred_fallthru
          _
        %s604 = sand.u32 %s49, 1
        %s605 = scalar_lea.sflag [#allocation3], %s604
        %s606 = sand.u32 %s49, 1
        %s607 = smul.addr %s606, 128
        %s608 = scalar_lea.vmem [#allocation2], %s607
        %p609 = pneg %p62
        %p610 = pneg %p59
        %p611 = pneg %p83
        %p612 = pneg %p80
        %p613 = pneg %p104
        %p614 = pneg %p101
        %p615 = pneg %p125
        %p616 = pneg %p122
        %p617 = pneg %p146
        %p618 = pneg %p143
        %p619 = pneg %p167
        %p620 = pneg %p164
        %p621 = pneg %p188
        %p622 = pneg %p185
        %p623 = pneg %p209
        %p624 = pneg %p206
        %p625 = pneg %p230
        %p626 = pneg %p227
        %p627 = pneg %p251
        %p628 = pneg %p248
        %p629 = pneg %p272
        %p630 = pneg %p269
        %p631 = pneg %p293
        %p632 = pneg %p290
        %p633 = pneg %p314
        %p634 = pneg %p311
        %p635 = pneg %p335
        %p636 = pneg %p332
        %p637 = pneg %p356
        %p638 = pneg %p353
        %p639 = pneg %p382
        %p640 = pneg %p379
        %s641 = sand.u32 %s369, 1
        %s642 = scalar_lea.sflag [#allocation4], %s641
        %s643 = sand.u32 %s369, 1
        %s644 = smul.addr %s643, 256
        %s645 = scalar_lea.vmem [#allocation16], %s644
        %p646 = pneg %p408
        %p647 = pneg %p405
        %s648 = sand.u32 %s395, 1
        %s649 = scalar_lea.sflag [#allocation18], %s648
        %s650 = sand.u32 %s395, 1
        %s651 = smul.addr %s650, 8
        %s652 = scalar_lea.vmem [#allocation17], %s651
        %s653 = smul.u32 32, %s41
        %s654 = smul.u32 32, %s41
        %v656 = vld [vmem:[%s571] sm:$0xf]
        %v657 = vld [vmem:[%s571 + $0x4] sm:$0xf]
        %v658 = vld [vmem:[%s571 + $0x8] sm:$0xf]
        %v659 = vld [vmem:[%s571 + $0xc] sm:$0xf]
        %v660 = vld [vmem:[%s571 + $0x10] sm:$0xf]
        %v661 = vld [vmem:[%s571 + $0x14] sm:$0xf]
        %v662 = vld [vmem:[%s571 + $0x18] sm:$0xf]
        %v663 = vld [vmem:[%s571 + $0x1c] sm:$0xf]
        %v664 = vld [vmem:[%s571 + $0x20] sm:$0xf]
        %v665 = vld [vmem:[%s571 + $0x24] sm:$0xf]
        %v666 = vld [vmem:[%s571 + $0x28] sm:$0xf]
        %v667 = vld [vmem:[%s571 + $0x2c] sm:$0xf]
        %v668 = vld [vmem:[%s571 + $0x30] sm:$0xf]
        %v669 = vld [vmem:[%s571 + $0x34] sm:$0xf]
        %v670 = vld [vmem:[%s571 + $0x38] sm:$0xf]
        %v671 = vld [vmem:[%s571 + $0x3c] sm:$0xf]
        %v672 = vld [vmem:[%s571 + $0x40] sm:$0xf]
        %v673 = vld [vmem:[%s571 + $0x44] sm:$0xf]
        %v674 = vld [vmem:[%s571 + $0x48] sm:$0xf]
        %v675 = vld [vmem:[%s571 + $0x4c] sm:$0xf]
        %v676 = vld [vmem:[%s571 + $0x50] sm:$0xf]
        %v677 = vld [vmem:[%s571 + $0x54] sm:$0xf]
        %v678 = vld [vmem:[%s571 + $0x58] sm:$0xf]
        %v679 = vld [vmem:[%s571 + $0x5c] sm:$0xf]
        %v680 = vld [vmem:[%s571 + $0x60] sm:$0xf]
        %v681 = vld [vmem:[%s571 + $0x64] sm:$0xf]
        %v682 = vld [vmem:[%s571 + $0x68] sm:$0xf]
        %v683 = vld [vmem:[%s571 + $0x6c] sm:$0xf]
        %v684 = vld [vmem:[%s571 + $0x70] sm:$0xf]
        %v685 = vld [vmem:[%s571 + $0x74] sm:$0xf]
        %v686 = vld [vmem:[%s571 + $0x78] sm:$0xf]
        %v687 = vld [vmem:[%s571 + $0x7c] sm:$0xf]
        %v688 = vld [vmem:[#allocation5] sm:$0xf]
        %v689 = vld [vmem:[#allocation5 + $0x4] sm:$0xf]
        %v690 = vld [vmem:[#allocation5 + $0x8] sm:$0xf]
        %v691 = vld [vmem:[#allocation5 + $0xc] sm:$0xf]
        %v692 = vld [vmem:[#allocation5 + $0x10] sm:$0xf]
        %v693 = vld [vmem:[#allocation5 + $0x14] sm:$0xf]
        %v694 = vld [vmem:[#allocation5 + $0x18] sm:$0xf]
        %v695 = vld [vmem:[#allocation5 + $0x1c] sm:$0xf]
        %v696 = vld [vmem:[#allocation5 + $0x20] sm:$0xf]
        %v697 = vld [vmem:[#allocation5 + $0x24] sm:$0xf]
        %v698 = vld [vmem:[#allocation5 + $0x28] sm:$0xf]
        %v699 = vld [vmem:[#allocation5 + $0x2c] sm:$0xf]
        %v700 = vld [vmem:[#allocation5 + $0x30] sm:$0xf]
        %v701 = vld [vmem:[#allocation5 + $0x34] sm:$0xf]
        %v702 = vld [vmem:[#allocation5 + $0x38] sm:$0xf]
        %v703 = vld [vmem:[#allocation5 + $0x3c] sm:$0xf]
        %v704 = vld [vmem:[%s2] sm:$0x1]
        %v706 = vlaneseq
        %v707 = vshrl.u32 %v706, 7
        %v708 = vsub.s32 0, %v707
        %v709 = vrot.slane %v704, %v708
        %v743 = vunpack.c.l.b16 %v656
        %v744 = vunpack.c.l.b16 %v657
        %v745 = vunpack.c.l.b16 %v658
        %v746 = vunpack.c.l.b16 %v659
        %v747 = vunpack.c.l.b16 %v660
        %v748 = vunpack.c.l.b16 %v661
        %v749 = vunpack.c.l.b16 %v662
        %v750 = vunpack.c.l.b16 %v663
        %v751 = vunpack.c.l.b16 %v664
        %v752 = vunpack.c.l.b16 %v665
        %v753 = vunpack.c.l.b16 %v666
        %v754 = vunpack.c.l.b16 %v667
        %v755 = vunpack.c.l.b16 %v668
        %v756 = vunpack.c.l.b16 %v669
        %v757 = vunpack.c.l.b16 %v670
        %v758 = vunpack.c.l.b16 %v671
        %v759 = vunpack.c.l.b16 %v672
        %v760 = vunpack.c.l.b16 %v673
        %v761 = vunpack.c.l.b16 %v674
        %v762 = vunpack.c.l.b16 %v675
        %v763 = vunpack.c.l.b16 %v676
        %v764 = vunpack.c.l.b16 %v677
        %v765 = vunpack.c.l.b16 %v678
        %v766 = vunpack.c.l.b16 %v679
        %v767 = vunpack.c.l.b16 %v680
        %v768 = vunpack.c.l.b16 %v681
        %v769 = vunpack.c.l.b16 %v682
        %v770 = vunpack.c.l.b16 %v683
        %v771 = vunpack.c.l.b16 %v684
        %v772 = vunpack.c.l.b16 %v685
        %v773 = vunpack.c.l.b16 %v686
        %v774 = vunpack.c.l.b16 %v687
        %v775 = vpack.c.b16 %v744, %v743
        %v776 = vpack.c.b16 %v746, %v745
        %v777 = vpack.c.b16 %v748, %v747
        %v778 = vpack.c.b16 %v750, %v749
        %v779 = vpack.c.b16 %v752, %v751
        %v780 = vpack.c.b16 %v754, %v753
        %v781 = vpack.c.b16 %v756, %v755
        %v782 = vpack.c.b16 %v758, %v757
        %v783 = vpack.c.b16 %v760, %v759
        %v784 = vpack.c.b16 %v762, %v761
        %v785 = vpack.c.b16 %v764, %v763
        %v786 = vpack.c.b16 %v766, %v765
        %v787 = vpack.c.b16 %v768, %v767
        %v788 = vpack.c.b16 %v770, %v769
        %v789 = vpack.c.b16 %v772, %v771
        %v790 = vpack.c.b16 %v774, %v773
        %v823 = vunpack.c.l.b16 %v688
        %v824 = vunpack.c.l.b16 %v689
        %v825 = vunpack.c.l.b16 %v690
        %v826 = vunpack.c.l.b16 %v691
        %v827 = vunpack.c.l.b16 %v692
        %v828 = vunpack.c.l.b16 %v693
        %v829 = vunpack.c.l.b16 %v694
        %v830 = vunpack.c.l.b16 %v695
        %v831 = vunpack.c.l.b16 %v696
        %v832 = vunpack.c.l.b16 %v697
        %v833 = vunpack.c.l.b16 %v698
        %v834 = vunpack.c.l.b16 %v699
        %v835 = vunpack.c.l.b16 %v700
        %v836 = vunpack.c.l.b16 %v701
        %v837 = vunpack.c.l.b16 %v702
        %v838 = vunpack.c.l.b16 %v703
        %v839 = vpack.c.b16 %v824, %v823
        %v840 = vpack.c.b16 %v826, %v825
        %v841 = vpack.c.b16 %v828, %v827
        %v842 = vpack.c.b16 %v830, %v829
        %v843 = vpack.c.b16 %v832, %v831
        %v844 = vpack.c.b16 %v834, %v833
        %v845 = vpack.c.b16 %v836, %v835
        %v846 = vpack.c.b16 %v838, %v837
        %855 = vmatprep.subr.bf16.mxu0 0
        %856 = vmatpush1.bf16.msra.mxu0 %v839
        %857 = vmatprep.subr.bf16.mxu0 0
        %858 = vmatpush1.bf16.msra.mxu0 %v840
        %859 = vmatprep.subr.bf16.mxu0 0
        %860 = vmatpush1.bf16.msra.mxu0 %v841
        %861 = vmatprep.subr.bf16.mxu0 0
        %862 = vmatpush1.bf16.msra.mxu0 %v842
        %863 = vmatprep.subr.bf16.mxu0 0
        %864 = vmatpush1.bf16.msra.mxu0 %v843
        %865 = vmatprep.subr.bf16.mxu0 0
        %866 = vmatpush1.bf16.msra.mxu0 %v844
        %867 = vmatprep.subr.bf16.mxu0 0
        %868 = vmatpush1.bf16.msra.mxu0 %v845
        %869 = vmatprep.subr.bf16.mxu0 0
        %870 = vmatpush1.bf16.msra.mxu0 %v846
        %871 = vmatprep.subr.bf16.mxu0 0
        %872 = vmatpush1.bf16.msra.mxu0 0
        %873 = vmatprep.subr.bf16.mxu0 0
        %874 = vmatpush1.bf16.msra.mxu0 0
        %875 = vmatprep.subr.bf16.mxu0 0
        %876 = vmatpush1.bf16.msra.mxu0 0
        %877 = vmatprep.subr.bf16.mxu0 0
        %878 = vmatpush1.bf16.msra.mxu0 0
        %879 = vmatprep.subr.bf16.mxu0 0
        %880 = vmatpush1.bf16.msra.mxu0 0
        %881 = vmatprep.subr.bf16.mxu0 0
        %882 = vmatpush1.bf16.msra.mxu0 0
        %883 = vmatprep.subr.bf16.mxu0 0
        %884 = vmatpush1.bf16.msra.mxu0 0
        %885 = vmatprep.subr.bf16.mxu0 0
        %886 = vmatpush1.bf16.msra.mxu0 0
        %887 = vmatprep.mubr.bf16.mxu0 0
        %888 = vmatmul.mubr.bf16.gmra.mrb[0].mxu0 %v775
        %v889 = vpop.f32.mrb[0].mxu0
        %v890 = vadd.f32 %v709, %v889
        %v891 = vpop.f32.mrb[0].mxu0
        %v892 = vpop.f32.mrb[0].mxu0
        %v893 = vadd.f32 %v709, %v892
        %v894 = vpop.f32.mrb[0].mxu0
        %895 = vmatprep.mubr.bf16.mxu0 0
        %896 = vmatmul.mubr.bf16.gmra.mrb[0].mxu0 %v776
        %v897 = vpop.f32.mrb[0].mxu0
        %v898 = vadd.f32 %v709, %v897
        %v899 = vpop.f32.mrb[0].mxu0
        %v900 = vpop.f32.mrb[0].mxu0
        %v901 = vadd.f32 %v709, %v900
        %v902 = vpop.f32.mrb[0].mxu0
        %903 = vmatprep.mubr.bf16.mxu0 0
        %904 = vmatmul.mubr.bf16.gmra.mrb[0].mxu0 %v777
        %v905 = vpop.f32.mrb[0].mxu0
        %v906 = vadd.f32 %v709, %v905
        %v907 = vpop.f32.mrb[0].mxu0
        %v908 = vpop.f32.mrb[0].mxu0
        %v909 = vadd.f32 %v709, %v908
        %v910 = vpop.f32.mrb[0].mxu0
        %911 = vmatprep.mubr.bf16.mxu0 0
        %912 = vmatmul.mubr.bf16.gmra.mrb[0].mxu0 %v778
        %v913 = vpop.f32.mrb[0].mxu0
        %v914 = vadd.f32 %v709, %v913
        %v915 = vpop.f32.mrb[0].mxu0
        %v916 = vpop.f32.mrb[0].mxu0
        %v917 = vadd.f32 %v709, %v916
        %v918 = vpop.f32.mrb[0].mxu0
        %919 = vmatprep.mubr.bf16.mxu0 0
        %920 = vmatmul.mubr.bf16.gmra.mrb[0].mxu0 %v779
        %v921 = vpop.f32.mrb[0].mxu0
        %v922 = vadd.f32 %v709, %v921
        %v923 = vpop.f32.mrb[0].mxu0
        %v924 = vpop.f32.mrb[0].mxu0
        %v925 = vadd.f32 %v709, %v924
        %v926 = vpop.f32.mrb[0].mxu0
        %927 = vmatprep.mubr.bf16.mxu0 0
        %928 = vmatmul.mubr.bf16.gmra.mrb[0].mxu0 %v780
        %v929 = vpop.f32.mrb[0].mxu0
        %v930 = vadd.f32 %v709, %v929
        %v931 = vpop.f32.mrb[0].mxu0
        %v932 = vpop.f32.mrb[0].mxu0
        %v933 = vadd.f32 %v709, %v932
        %v934 = vpop.f32.mrb[0].mxu0
        %935 = vmatprep.mubr.bf16.mxu0 0
        %936 = vmatmul.mubr.bf16.gmra.mrb[0].mxu0 %v781
        %v937 = vpop.f32.mrb[0].mxu0
        %v938 = vadd.f32 %v709, %v937
        %v939 = vpop.f32.mrb[0].mxu0
        %v940 = vpop.f32.mrb[0].mxu0
        %v941 = vadd.f32 %v709, %v940
        %v942 = vpop.f32.mrb[0].mxu0
        %943 = vmatprep.mubr.bf16.mxu0 0
        %944 = vmatmul.mubr.bf16.gmra.mrb[0].mxu0 %v782
        %v945 = vpop.f32.mrb[0].mxu0
        %v946 = vadd.f32 %v709, %v945
        %v947 = vpop.f32.mrb[0].mxu0
        %v948 = vpop.f32.mrb[0].mxu0
        %v949 = vadd.f32 %v709, %v948
        %v950 = vpop.f32.mrb[0].mxu0
        %951 = vmatprep.mubr.bf16.mxu0 0
        %952 = vmatmul.mubr.bf16.gmra.mrb[0].mxu0 %v783
        %v953 = vpop.f32.mrb[0].mxu0
        %v954 = vadd.f32 %v709, %v953
        %v955 = vpop.f32.mrb[0].mxu0
        %v956 = vpop.f32.mrb[0].mxu0
        %v957 = vadd.f32 %v709, %v956
        %v958 = vpop.f32.mrb[0].mxu0
        %959 = vmatprep.mubr.bf16.mxu0 0
        %960 = vmatmul.mubr.bf16.gmra.mrb[0].mxu0 %v784
        %v961 = vpop.f32.mrb[0].mxu0
        %v962 = vadd.f32 %v709, %v961
        %v963 = vpop.f32.mrb[0].mxu0
        %v964 = vpop.f32.mrb[0].mxu0
        %v965 = vadd.f32 %v709, %v964
        %v966 = vpop.f32.mrb[0].mxu0
        %967 = vmatprep.mubr.bf16.mxu0 0
        %968 = vmatmul.mubr.bf16.gmra.mrb[0].mxu0 %v785
        %v969 = vpop.f32.mrb[0].mxu0
        %v970 = vadd.f32 %v709, %v969
        %v971 = vpop.f32.mrb[0].mxu0
        %v972 = vpop.f32.mrb[0].mxu0
        %v973 = vadd.f32 %v709, %v972
        %v974 = vpop.f32.mrb[0].mxu0
        %975 = vmatprep.mubr.bf16.mxu0 0
        %976 = vmatmul.mubr.bf16.gmra.mrb[0].mxu0 %v786
        %v977 = vpop.f32.mrb[0].mxu0
        %v978 = vadd.f32 %v709, %v977
        %v979 = vpop.f32.mrb[0].mxu0
        %v980 = vpop.f32.mrb[0].mxu0
        %v981 = vadd.f32 %v709, %v980
        %v982 = vpop.f32.mrb[0].mxu0
        %983 = vmatprep.mubr.bf16.mxu0 0
        %984 = vmatmul.mubr.bf16.gmra.mrb[0].mxu0 %v787
        %v985 = vpop.f32.mrb[0].mxu0
        %v986 = vadd.f32 %v709, %v985
        %v987 = vpop.f32.mrb[0].mxu0
        %v988 = vpop.f32.mrb[0].mxu0
        %v989 = vadd.f32 %v709, %v988
        %v990 = vpop.f32.mrb[0].mxu0
        %991 = vmatprep.mubr.bf16.mxu0 0
        %992 = vmatmul.mubr.bf16.gmra.mrb[0].mxu0 %v788
        %v993 = vpop.f32.mrb[0].mxu0
        %v994 = vadd.f32 %v709, %v993
        %v995 = vpop.f32.mrb[0].mxu0
        %v996 = vpop.f32.mrb[0].mxu0
        %v997 = vadd.f32 %v709, %v996
        %v998 = vpop.f32.mrb[0].mxu0
        %999 = vmatprep.mubr.bf16.mxu0 0
        %1000 = vmatmul.mubr.bf16.gmra.mrb[0].mxu0 %v789
        %v1001 = vpop.f32.mrb[0].mxu0
        %v1002 = vadd.f32 %v709, %v1001
        %v1003 = vpop.f32.mrb[0].mxu0
        %v1004 = vpop.f32.mrb[0].mxu0
        %v1005 = vadd.f32 %v709, %v1004
        %v1006 = vpop.f32.mrb[0].mxu0
        %1007 = vmatprep.mubr.bf16.mxu0 0
        %1008 = vmatmul.mubr.bf16.gmra.mrb[0].mxu0 %v790
        %v1009 = vpop.f32.mrb[0].mxu0
        %v1010 = vadd.f32 %v709, %v1009
        %v1011 = vpop.f32.mrb[0].mxu0
        %v1012 = vpop.f32.mrb[0].mxu0
        %v1013 = vadd.f32 %v709, %v1012
        %v1014 = vpop.f32.mrb[0].mxu0
        %1015 = vdwg.mxu0
        %v1016 = vxor.u32 %v890, 2147483648
        %v1017 = vxor.u32 %v893, 2147483648
        %v1018 = vxor.u32 %v898, 2147483648
        %v1019 = vxor.u32 %v901, 2147483648
        %v1020 = vxor.u32 %v906, 2147483648
        %v1021 = vxor.u32 %v909, 2147483648
        %v1022 = vxor.u32 %v914, 2147483648
        %v1023 = vxor.u32 %v917, 2147483648
        %v1024 = vxor.u32 %v922, 2147483648
        %v1025 = vxor.u32 %v925, 2147483648
        %v1026 = vxor.u32 %v930, 2147483648
        %v1027 = vxor.u32 %v933, 2147483648
        %v1028 = vxor.u32 %v938, 2147483648
        %v1029 = vxor.u32 %v941, 2147483648
        %v1030 = vxor.u32 %v946, 2147483648
        %v1031 = vxor.u32 %v949, 2147483648
        %v1032 = vxor.u32 %v954, 2147483648
        %v1033 = vxor.u32 %v957, 2147483648
        %v1034 = vxor.u32 %v962, 2147483648
        %v1035 = vxor.u32 %v965, 2147483648
        %v1036 = vxor.u32 %v970, 2147483648
        %v1037 = vxor.u32 %v973, 2147483648
        %v1038 = vxor.u32 %v978, 2147483648
        %v1039 = vxor.u32 %v981, 2147483648
        %v1040 = vxor.u32 %v986, 2147483648
        %v1041 = vxor.u32 %v989, 2147483648
        %v1042 = vxor.u32 %v994, 2147483648
        %v1043 = vxor.u32 %v997, 2147483648
        %v1044 = vxor.u32 %v1002, 2147483648
        %v1045 = vxor.u32 %v1005, 2147483648
        %v1046 = vxor.u32 %v1010, 2147483648
        %v1047 = vxor.u32 %v1013, 2147483648
        %v1048 = vmul.f32 %v1016, 1.442695
        %v1049 = vpow.pop %v1048
        %v1050 = vmul.f32 %v1017, 1.442695
        %v1051 = vpow.pop %v1050
        %v1052 = vmul.f32 %v1018, 1.442695
        %v1053 = vpow.pop %v1052
        %v1054 = vmul.f32 %v1019, 1.442695
        %v1055 = vpow.pop %v1054
        %v1056 = vmul.f32 %v1020, 1.442695
        %v1057 = vpow.pop %v1056
        %v1058 = vmul.f32 %v1021, 1.442695
        %v1059 = vpow.pop %v1058
        %v1060 = vmul.f32 %v1022, 1.442695
        %v1061 = vpow.pop %v1060
        %v1062 = vmul.f32 %v1023, 1.442695
        %v1063 = vpow.pop %v1062
        %v1064 = vmul.f32 %v1024, 1.442695
        %v1065 = vpow.pop %v1064
        %v1066 = vmul.f32 %v1025, 1.442695
        %v1067 = vpow.pop %v1066
        %v1068 = vmul.f32 %v1026, 1.442695
        %v1069 = vpow.pop %v1068
        %v1070 = vmul.f32 %v1027, 1.442695
        %v1071 = vpow.pop %v1070
        %v1072 = vmul.f32 %v1028, 1.442695
        %v1073 = vpow.pop %v1072
        %v1074 = vmul.f32 %v1029, 1.442695
        %v1075 = vpow.pop %v1074
        %v1076 = vmul.f32 %v1030, 1.442695
        %v1077 = vpow.pop %v1076
        %v1078 = vmul.f32 %v1031, 1.442695
        %v1079 = vpow.pop %v1078
        %v1080 = vmul.f32 %v1032, 1.442695
        %v1081 = vpow.pop %v1080
        %v1082 = vmul.f32 %v1033, 1.442695
        %v1083 = vpow.pop %v1082
        %v1084 = vmul.f32 %v1034, 1.442695
        %v1085 = vpow.pop %v1084
        %v1086 = vmul.f32 %v1035, 1.442695
        %v1087 = vpow.pop %v1086
        %v1088 = vmul.f32 %v1036, 1.442695
        %v1089 = vpow.pop %v1088
        %v1090 = vmul.f32 %v1037, 1.442695
        %v1091 = vpow.pop %v1090
        %v1092 = vmul.f32 %v1038, 1.442695
        %v1093 = vpow.pop %v1092
        %v1094 = vmul.f32 %v1039, 1.442695
        %v1095 = vpow.pop %v1094
        %v1096 = vmul.f32 %v1040, 1.442695
        %v1097 = vpow.pop %v1096
        %v1098 = vmul.f32 %v1041, 1.442695
        %v1099 = vpow.pop %v1098
        %v1100 = vmul.f32 %v1042, 1.442695
        %v1101 = vpow.pop %v1100
        %v1102 = vmul.f32 %v1043, 1.442695
        %v1103 = vpow.pop %v1102
        %v1104 = vmul.f32 %v1044, 1.442695
        %v1105 = vpow.pop %v1104
        %v1106 = vmul.f32 %v1045, 1.442695
        %v1107 = vpow.pop %v1106
        %v1108 = vmul.f32 %v1046, 1.442695
        %v1109 = vpow.pop %v1108
        %v1110 = vmul.f32 %v1047, 1.442695
        %v1111 = vpow.pop %v1110
        %v1112 = vadd.f32 %v1049, 1.0
        %v1113 = vadd.f32 %v1051, 1.0
        %v1114 = vadd.f32 %v1053, 1.0
        %v1115 = vadd.f32 %v1055, 1.0
        %v1116 = vadd.f32 %v1057, 1.0
        %v1117 = vadd.f32 %v1059, 1.0
        %v1118 = vadd.f32 %v1061, 1.0
        %v1119 = vadd.f32 %v1063, 1.0
        %v1120 = vadd.f32 %v1065, 1.0
        %v1121 = vadd.f32 %v1067, 1.0
        %v1122 = vadd.f32 %v1069, 1.0
        %v1123 = vadd.f32 %v1071, 1.0
        %v1124 = vadd.f32 %v1073, 1.0
        %v1125 = vadd.f32 %v1075, 1.0
        %v1126 = vadd.f32 %v1077, 1.0
        %v1127 = vadd.f32 %v1079, 1.0
        %v1128 = vadd.f32 %v1081, 1.0
        %v1129 = vadd.f32 %v1083, 1.0
        %v1130 = vadd.f32 %v1085, 1.0
        %v1131 = vadd.f32 %v1087, 1.0
        %v1132 = vadd.f32 %v1089, 1.0
        %v1133 = vadd.f32 %v1091, 1.0
        %v1134 = vadd.f32 %v1093, 1.0
        %v1135 = vadd.f32 %v1095, 1.0
        %v1136 = vadd.f32 %v1097, 1.0
        %v1137 = vadd.f32 %v1099, 1.0
        %v1138 = vadd.f32 %v1101, 1.0
        %v1139 = vadd.f32 %v1103, 1.0
        %v1140 = vadd.f32 %v1105, 1.0
        %v1141 = vadd.f32 %v1107, 1.0
        %v1142 = vadd.f32 %v1109, 1.0
        %v1143 = vadd.f32 %v1111, 1.0
        %v1144 = vrcp.pop %v1112
        %v1145 = vmul.f32 1.0, %v1144
        %v1146 = vrcp.pop %v1113
        %v1147 = vmul.f32 1.0, %v1146
        %v1148 = vrcp.pop %v1114
        %v1149 = vmul.f32 1.0, %v1148
        %v1150 = vrcp.pop %v1115
        %v1151 = vmul.f32 1.0, %v1150
        %v1152 = vrcp.pop %v1116
        %v1153 = vmul.f32 1.0, %v1152
        %v1154 = vrcp.pop %v1117
        %v1155 = vmul.f32 1.0, %v1154
        %v1156 = vrcp.pop %v1118
        %v1157 = vmul.f32 1.0, %v1156
        %v1158 = vrcp.pop %v1119
        %v1159 = vmul.f32 1.0, %v1158
        %v1160 = vrcp.pop %v1120
        %v1161 = vmul.f32 1.0, %v1160
        %v1162 = vrcp.pop %v1121
        %v1163 = vmul.f32 1.0, %v1162
        %v1164 = vrcp.pop %v1122
        %v1165 = vmul.f32 1.0, %v1164
        %v1166 = vrcp.pop %v1123
        %v1167 = vmul.f32 1.0, %v1166
        %v1168 = vrcp.pop %v1124
        %v1169 = vmul.f32 1.0, %v1168
        %v1170 = vrcp.pop %v1125
        %v1171 = vmul.f32 1.0, %v1170
        %v1172 = vrcp.pop %v1126
        %v1173 = vmul.f32 1.0, %v1172
        %v1174 = vrcp.pop %v1127
        %v1175 = vmul.f32 1.0, %v1174
        %v1176 = vrcp.pop %v1128
        %v1177 = vmul.f32 1.0, %v1176
        %v1178 = vrcp.pop %v1129
        %v1179 = vmul.f32 1.0, %v1178
        %v1180 = vrcp.pop %v1130
        %v1181 = vmul.f32 1.0, %v1180
        %v1182 = vrcp.pop %v1131
        %v1183 = vmul.f32 1.0, %v1182
        %v1184 = vrcp.pop %v1132
        %v1185 = vmul.f32 1.0, %v1184
        %v1186 = vrcp.pop %v1133
        %v1187 = vmul.f32 1.0, %v1186
        %v1188 = vrcp.pop %v1134
        %v1189 = vmul.f32 1.0, %v1188
        %v1190 = vrcp.pop %v1135
        %v1191 = vmul.f32 1.0, %v1190
        %v1192 = vrcp.pop %v1136
        %v1193 = vmul.f32 1.0, %v1192
        %v1194 = vrcp.pop %v1137
        %v1195 = vmul.f32 1.0, %v1194
        %v1196 = vrcp.pop %v1138
        %v1197 = vmul.f32 1.0, %v1196
        %v1198 = vrcp.pop %v1139
        %v1199 = vmul.f32 1.0, %v1198
        %v1200 = vrcp.pop %v1140
        %v1201 = vmul.f32 1.0, %v1200
        %v1202 = vrcp.pop %v1141
        %v1203 = vmul.f32 1.0, %v1202
        %v1204 = vrcp.pop %v1142
        %v1205 = vmul.f32 1.0, %v1204
        %v1206 = vrcp.pop %v1143
        %v1207 = vmul.f32 1.0, %v1206
        %v1208 = vmul.f32 %v890, %v1145
        %v1209 = vmul.f32 %v893, %v1147
        %v1210 = vmul.f32 %v898, %v1149
        %v1211 = vmul.f32 %v901, %v1151
        %v1212 = vmul.f32 %v906, %v1153
        %v1213 = vmul.f32 %v909, %v1155
        %v1214 = vmul.f32 %v914, %v1157
        %v1215 = vmul.f32 %v917, %v1159
        %v1216 = vmul.f32 %v922, %v1161
        %v1217 = vmul.f32 %v925, %v1163
        %v1218 = vmul.f32 %v930, %v1165
        %v1219 = vmul.f32 %v933, %v1167
        %v1220 = vmul.f32 %v938, %v1169
        %v1221 = vmul.f32 %v941, %v1171
        %v1222 = vmul.f32 %v946, %v1173
        %v1223 = vmul.f32 %v949, %v1175
        %v1224 = vmul.f32 %v954, %v1177
        %v1225 = vmul.f32 %v957, %v1179
        %v1226 = vmul.f32 %v962, %v1181
        %v1227 = vmul.f32 %v965, %v1183
        %v1228 = vmul.f32 %v970, %v1185
        %v1229 = vmul.f32 %v973, %v1187
        %v1230 = vmul.f32 %v978, %v1189
        %v1231 = vmul.f32 %v981, %v1191
        %v1232 = vmul.f32 %v986, %v1193
        %v1233 = vmul.f32 %v989, %v1195
        %v1234 = vmul.f32 %v994, %v1197
        %v1235 = vmul.f32 %v997, %v1199
        %v1236 = vmul.f32 %v1002, %v1201
        %v1237 = vmul.f32 %v1005, %v1203
        %v1238 = vmul.f32 %v1010, %v1205
        %v1239 = vmul.f32 %v1013, %v1207
        %v1240 = vpack.c.bf16 %v1209, %v1208
        %v1241 = vpack.c.bf16 %v1211, %v1210
        %v1242 = vpack.c.bf16 %v1213, %v1212
        %v1243 = vpack.c.bf16 %v1215, %v1214
        %v1244 = vpack.c.bf16 %v1217, %v1216
        %v1245 = vpack.c.bf16 %v1219, %v1218
        %v1246 = vpack.c.bf16 %v1221, %v1220
        %v1247 = vpack.c.bf16 %v1223, %v1222
        %v1248 = vpack.c.bf16 %v1225, %v1224
        %v1249 = vpack.c.bf16 %v1227, %v1226
        %v1250 = vpack.c.bf16 %v1229, %v1228
        %v1251 = vpack.c.bf16 %v1231, %v1230
        %v1252 = vpack.c.bf16 %v1233, %v1232
        %v1253 = vpack.c.bf16 %v1235, %v1234
        %v1254 = vpack.c.bf16 %v1237, %v1236
        %v1255 = vpack.c.bf16 %v1239, %v1238
        %v1256 = vld [vmem:[#allocation7] sm:$0xf]
        %v1257 = vld [vmem:[#allocation7 + $0x4] sm:$0xf]
        %v1258 = vld [vmem:[#allocation7 + $0x8] sm:$0xf]
        %v1259 = vld [vmem:[#allocation7 + $0xc] sm:$0xf]
        %v1260 = vld [vmem:[#allocation7 + $0x10] sm:$0xf]
        %v1261 = vld [vmem:[#allocation7 + $0x14] sm:$0xf]
        %v1262 = vld [vmem:[#allocation7 + $0x18] sm:$0xf]
        %v1263 = vld [vmem:[#allocation7 + $0x1c] sm:$0xf]
        %v1264 = vld [vmem:[#allocation7 + $0x20] sm:$0xf]
        %v1265 = vld [vmem:[#allocation7 + $0x24] sm:$0xf]
        %v1266 = vld [vmem:[#allocation7 + $0x28] sm:$0xf]
        %v1267 = vld [vmem:[#allocation7 + $0x2c] sm:$0xf]
        %v1268 = vld [vmem:[#allocation7 + $0x30] sm:$0xf]
        %v1269 = vld [vmem:[#allocation7 + $0x34] sm:$0xf]
        %v1270 = vld [vmem:[#allocation7 + $0x38] sm:$0xf]
        %v1271 = vld [vmem:[#allocation7 + $0x3c] sm:$0xf]
        %v1272 = vld [vmem:[%s4] sm:$0x1]
        %v1274 = vlaneseq
        %v1275 = vshrl.u32 %v1274, 7
        %v1276 = vsub.s32 0, %v1275
        %v1277 = vrot.slane %v1272, %v1276
        %v1295 = vunpack.c.l.b16 %v1256
        %v1296 = vunpack.c.l.b16 %v1257
        %v1297 = vunpack.c.l.b16 %v1258
        %v1298 = vunpack.c.l.b16 %v1259
        %v1299 = vunpack.c.l.b16 %v1260
        %v1300 = vunpack.c.l.b16 %v1261
        %v1301 = vunpack.c.l.b16 %v1262
        %v1302 = vunpack.c.l.b16 %v1263
        %v1303 = vunpack.c.l.b16 %v1264
        %v1304 = vunpack.c.l.b16 %v1265
        %v1305 = vunpack.c.l.b16 %v1266
        %v1306 = vunpack.c.l.b16 %v1267
        %v1307 = vunpack.c.l.b16 %v1268
        %v1308 = vunpack.c.l.b16 %v1269
        %v1309 = vunpack.c.l.b16 %v1270
        %v1310 = vunpack.c.l.b16 %v1271
        %v1311 = vpack.c.b16 %v1296, %v1295
        %v1312 = vpack.c.b16 %v1298, %v1297
        %v1313 = vpack.c.b16 %v1300, %v1299
        %v1314 = vpack.c.b16 %v1302, %v1301
        %v1315 = vpack.c.b16 %v1304, %v1303
        %v1316 = vpack.c.b16 %v1306, %v1305
        %v1317 = vpack.c.b16 %v1308, %v1307
        %v1318 = vpack.c.b16 %v1310, %v1309
        %1327 = vmatprep.subr.bf16.mxu0 0
        %1328 = vmatpush1.bf16.msra.mxu0 %v1311
        %1329 = vmatprep.subr.bf16.mxu0 0
        %1330 = vmatpush1.bf16.msra.mxu0 %v1312
        %1331 = vmatprep.subr.bf16.mxu0 0
        %1332 = vmatpush1.bf16.msra.mxu0 %v1313
        %1333 = vmatprep.subr.bf16.mxu0 0
        %1334 = vmatpush1.bf16.msra.mxu0 %v1314
        %1335 = vmatprep.subr.bf16.mxu0 0
        %1336 = vmatpush1.bf16.msra.mxu0 %v1315
        %1337 = vmatprep.subr.bf16.mxu0 0
        %1338 = vmatpush1.bf16.msra.mxu0 %v1316
        %1339 = vmatprep.subr.bf16.mxu0 0
        %1340 = vmatpush1.bf16.msra.mxu0 %v1317
        %1341 = vmatprep.subr.bf16.mxu0 0
        %1342 = vmatpush1.bf16.msra.mxu0 %v1318
        %1343 = vmatprep.subr.bf16.mxu0 0
        %1344 = vmatpush1.bf16.msra.mxu0 0
        %1345 = vmatprep.subr.bf16.mxu0 0
        %1346 = vmatpush1.bf16.msra.mxu0 0
        %1347 = vmatprep.subr.bf16.mxu0 0
        %1348 = vmatpush1.bf16.msra.mxu0 0
        %1349 = vmatprep.subr.bf16.mxu0 0
        %1350 = vmatpush1.bf16.msra.mxu0 0
        %1351 = vmatprep.subr.bf16.mxu0 0
        %1352 = vmatpush1.bf16.msra.mxu0 0
        %1353 = vmatprep.subr.bf16.mxu0 0
        %1354 = vmatpush1.bf16.msra.mxu0 0
        %1355 = vmatprep.subr.bf16.mxu0 0
        %1356 = vmatpush1.bf16.msra.mxu0 0
        %1357 = vmatprep.subr.bf16.mxu0 0
        %1358 = vmatpush1.bf16.msra.mxu0 0
        %1359 = vmatprep.mubr.bf16.mxu0 0
        %1360 = vmatmul.mubr.bf16.gmra.mrb[0].mxu0 %v1240
        %v1361 = vpop.f32.mrb[0].mxu0
        %v1362 = vadd.f32 %v1277, %v1361
        %v1363 = vpop.f32.mrb[0].mxu0
        %v1364 = vpop.f32.mrb[0].mxu0
        %v1365 = vadd.f32 %v1277, %v1364
        %v1366 = vpop.f32.mrb[0].mxu0
        %1367 = vmatprep.mubr.bf16.mxu0 0
        %1368 = vmatmul.mubr.bf16.gmra.mrb[0].mxu0 %v1241
        %v1369 = vpop.f32.mrb[0].mxu0
        %v1370 = vadd.f32 %v1277, %v1369
        %v1371 = vpop.f32.mrb[0].mxu0
        %v1372 = vpop.f32.mrb[0].mxu0
        %v1373 = vadd.f32 %v1277, %v1372
        %v1374 = vpop.f32.mrb[0].mxu0
        %1375 = vmatprep.mubr.bf16.mxu0 0
        %1376 = vmatmul.mubr.bf16.gmra.mrb[0].mxu0 %v1242
        %v1377 = vpop.f32.mrb[0].mxu0
        %v1378 = vadd.f32 %v1277, %v1377
        %v1379 = vpop.f32.mrb[0].mxu0
        %v1380 = vpop.f32.mrb[0].mxu0
        %v1381 = vadd.f32 %v1277, %v1380
        %v1382 = vpop.f32.mrb[0].mxu0
        %1383 = vmatprep.mubr.bf16.mxu0 0
        %1384 = vmatmul.mubr.bf16.gmra.mrb[0].mxu0 %v1243
        %v1385 = vpop.f32.mrb[0].mxu0
        %v1386 = vadd.f32 %v1277, %v1385
        %v1387 = vpop.f32.mrb[0].mxu0
        %v1388 = vpop.f32.mrb[0].mxu0
        %v1389 = vadd.f32 %v1277, %v1388
        %v1390 = vpop.f32.mrb[0].mxu0
        %1391 = vmatprep.mubr.bf16.mxu0 0
        %1392 = vmatmul.mubr.bf16.gmra.mrb[0].mxu0 %v1244
        %v1393 = vpop.f32.mrb[0].mxu0
        %v1394 = vadd.f32 %v1277, %v1393
        %v1395 = vpop.f32.mrb[0].mxu0
        %v1396 = vpop.f32.mrb[0].mxu0
        %v1397 = vadd.f32 %v1277, %v1396
        %v1398 = vpop.f32.mrb[0].mxu0
        %1399 = vmatprep.mubr.bf16.mxu0 0
        %1400 = vmatmul.mubr.bf16.gmra.mrb[0].mxu0 %v1245
        %v1401 = vpop.f32.mrb[0].mxu0
        %v1402 = vadd.f32 %v1277, %v1401
        %v1403 = vpop.f32.mrb[0].mxu0
        %v1404 = vpop.f32.mrb[0].mxu0
        %v1405 = vadd.f32 %v1277, %v1404
        %v1406 = vpop.f32.mrb[0].mxu0
        %1407 = vmatprep.mubr.bf16.mxu0 0
        %1408 = vmatmul.mubr.bf16.gmra.mrb[0].mxu0 %v1246
        %v1409 = vpop.f32.mrb[0].mxu0
        %v1410 = vadd.f32 %v1277, %v1409
        %v1411 = vpop.f32.mrb[0].mxu0
        %v1412 = vpop.f32.mrb[0].mxu0
        %v1413 = vadd.f32 %v1277, %v1412
        %v1414 = vpop.f32.mrb[0].mxu0
        %1415 = vmatprep.mubr.bf16.mxu0 0
        %1416 = vmatmul.mubr.bf16.gmra.mrb[0].mxu0 %v1247
        %v1417 = vpop.f32.mrb[0].mxu0
        %v1418 = vadd.f32 %v1277, %v1417
        %v1419 = vpop.f32.mrb[0].mxu0
        %v1420 = vpop.f32.mrb[0].mxu0
        %v1421 = vadd.f32 %v1277, %v1420
        %v1422 = vpop.f32.mrb[0].mxu0
        %1423 = vmatprep.mubr.bf16.mxu0 0
        %1424 = vmatmul.mubr.bf16.gmra.mrb[0].mxu0 %v1248
        %v1425 = vpop.f32.mrb[0].mxu0
        %v1426 = vadd.f32 %v1277, %v1425
        %v1427 = vpop.f32.mrb[0].mxu0
        %v1428 = vpop.f32.mrb[0].mxu0
        %v1429 = vadd.f32 %v1277, %v1428
        %v1430 = vpop.f32.mrb[0].mxu0
        %1431 = vmatprep.mubr.bf16.mxu0 0
        %1432 = vmatmul.mubr.bf16.gmra.mrb[0].mxu0 %v1249
        %v1433 = vpop.f32.mrb[0].mxu0
        %v1434 = vadd.f32 %v1277, %v1433
        %v1435 = vpop.f32.mrb[0].mxu0
        %v1436 = vpop.f32.mrb[0].mxu0
        %v1437 = vadd.f32 %v1277, %v1436
        %v1438 = vpop.f32.mrb[0].mxu0
        %1439 = vmatprep.mubr.bf16.mxu0 0
        %1440 = vmatmul.mubr.bf16.gmra.mrb[0].mxu0 %v1250
        %v1441 = vpop.f32.mrb[0].mxu0
        %v1442 = vadd.f32 %v1277, %v1441
        %v1443 = vpop.f32.mrb[0].mxu0
        %v1444 = vpop.f32.mrb[0].mxu0
        %v1445 = vadd.f32 %v1277, %v1444
        %v1446 = vpop.f32.mrb[0].mxu0
        %1447 = vmatprep.mubr.bf16.mxu0 0
        %1448 = vmatmul.mubr.bf16.gmra.mrb[0].mxu0 %v1251
        %v1449 = vpop.f32.mrb[0].mxu0
        %v1450 = vadd.f32 %v1277, %v1449
        %v1451 = vpop.f32.mrb[0].mxu0
        %v1452 = vpop.f32.mrb[0].mxu0
        %v1453 = vadd.f32 %v1277, %v1452
        %v1454 = vpop.f32.mrb[0].mxu0
        %1455 = vmatprep.mubr.bf16.mxu0 0
        %1456 = vmatmul.mubr.bf16.gmra.mrb[0].mxu0 %v1252
        %v1457 = vpop.f32.mrb[0].mxu0
        %v1458 = vadd.f32 %v1277, %v1457
        %v1459 = vpop.f32.mrb[0].mxu0
        %v1460 = vpop.f32.mrb[0].mxu0
        %v1461 = vadd.f32 %v1277, %v1460
        %v1462 = vpop.f32.mrb[0].mxu0
        %1463 = vmatprep.mubr.bf16.mxu0 0
        %1464 = vmatmul.mubr.bf16.gmra.mrb[0].mxu0 %v1253
        %v1465 = vpop.f32.mrb[0].mxu0
        %v1466 = vadd.f32 %v1277, %v1465
        %v1467 = vpop.f32.mrb[0].mxu0
        %v1468 = vpop.f32.mrb[0].mxu0
        %v1469 = vadd.f32 %v1277, %v1468
        %v1470 = vpop.f32.mrb[0].mxu0
        %1471 = vmatprep.mubr.bf16.mxu0 0
        %1472 = vmatmul.mubr.bf16.gmra.mrb[0].mxu0 %v1254
        %v1473 = vpop.f32.mrb[0].mxu0
        %v1474 = vadd.f32 %v1277, %v1473
        %v1475 = vpop.f32.mrb[0].mxu0
        %v1476 = vpop.f32.mrb[0].mxu0
        %v1477 = vadd.f32 %v1277, %v1476
        %v1478 = vpop.f32.mrb[0].mxu0
        %1479 = vmatprep.mubr.bf16.mxu0 0
        %1480 = vmatmul.mubr.bf16.gmra.mrb[0].mxu0 %v1255
        %v1481 = vpop.f32.mrb[0].mxu0
        %v1482 = vadd.f32 %v1277, %v1481
        %v1483 = vpop.f32.mrb[0].mxu0
        %v1484 = vpop.f32.mrb[0].mxu0
        %v1485 = vadd.f32 %v1277, %v1484
        %v1486 = vpop.f32.mrb[0].mxu0
        %1487 = vdwg.mxu0
        %v1488 = vxor.u32 %v1362, 2147483648
        %v1489 = vxor.u32 %v1365, 2147483648
        %v1490 = vxor.u32 %v1370, 2147483648
        %v1491 = vxor.u32 %v1373, 2147483648
        %v1492 = vxor.u32 %v1378, 2147483648
        %v1493 = vxor.u32 %v1381, 2147483648
        %v1494 = vxor.u32 %v1386, 2147483648
        %v1495 = vxor.u32 %v1389, 2147483648
        %v1496 = vxor.u32 %v1394, 2147483648
        %v1497 = vxor.u32 %v1397, 2147483648
        %v1498 = vxor.u32 %v1402, 2147483648
        %v1499 = vxor.u32 %v1405, 2147483648
        %v1500 = vxor.u32 %v1410, 2147483648
        %v1501 = vxor.u32 %v1413, 2147483648
        %v1502 = vxor.u32 %v1418, 2147483648
        %v1503 = vxor.u32 %v1421, 2147483648
        %v1504 = vxor.u32 %v1426, 2147483648
        %v1505 = vxor.u32 %v1429, 2147483648
        %v1506 = vxor.u32 %v1434, 2147483648
        %v1507 = vxor.u32 %v1437, 2147483648
        %v1508 = vxor.u32 %v1442, 2147483648
        %v1509 = vxor.u32 %v1445, 2147483648
        %v1510 = vxor.u32 %v1450, 2147483648
        %v1511 = vxor.u32 %v1453, 2147483648
        %v1512 = vxor.u32 %v1458, 2147483648
        %v1513 = vxor.u32 %v1461, 2147483648
        %v1514 = vxor.u32 %v1466, 2147483648
        %v1515 = vxor.u32 %v1469, 2147483648
        %v1516 = vxor.u32 %v1474, 2147483648
        %v1517 = vxor.u32 %v1477, 2147483648
        %v1518 = vxor.u32 %v1482, 2147483648
        %v1519 = vxor.u32 %v1485, 2147483648
        %v1520 = vmul.f32 %v1488, 1.442695
        %v1521 = vpow.pop %v1520
        %v1522 = vmul.f32 %v1489, 1.442695
        %v1523 = vpow.pop %v1522
        %v1524 = vmul.f32 %v1490, 1.442695
        %v1525 = vpow.pop %v1524
        %v1526 = vmul.f32 %v1491, 1.442695
        %v1527 = vpow.pop %v1526
        %v1528 = vmul.f32 %v1492, 1.442695
        %v1529 = vpow.pop %v1528
        %v1530 = vmul.f32 %v1493, 1.442695
        %v1531 = vpow.pop %v1530
        %v1532 = vmul.f32 %v1494, 1.442695
        %v1533 = vpow.pop %v1532
        %v1534 = vmul.f32 %v1495, 1.442695
        %v1535 = vpow.pop %v1534
        %v1536 = vmul.f32 %v1496, 1.442695
        %v1537 = vpow.pop %v1536
        %v1538 = vmul.f32 %v1497, 1.442695
        %v1539 = vpow.pop %v1538
        %v1540 = vmul.f32 %v1498, 1.442695
        %v1541 = vpow.pop %v1540
        %v1542 = vmul.f32 %v1499, 1.442695
        %v1543 = vpow.pop %v1542
        %v1544 = vmul.f32 %v1500, 1.442695
        %v1545 = vpow.pop %v1544
        %v1546 = vmul.f32 %v1501, 1.442695
        %v1547 = vpow.pop %v1546
        %v1548 = vmul.f32 %v1502, 1.442695
        %v1549 = vpow.pop %v1548
        %v1550 = vmul.f32 %v1503, 1.442695
        %v1551 = vpow.pop %v1550
        %v1552 = vmul.f32 %v1504, 1.442695
        %v1553 = vpow.pop %v1552
        %v1554 = vmul.f32 %v1505, 1.442695
        %v1555 = vpow.pop %v1554
        %v1556 = vmul.f32 %v1506, 1.442695
        %v1557 = vpow.pop %v1556
        %v1558 = vmul.f32 %v1507, 1.442695
        %v1559 = vpow.pop %v1558
        %v1560 = vmul.f32 %v1508, 1.442695
        %v1561 = vpow.pop %v1560
        %v1562 = vmul.f32 %v1509, 1.442695
        %v1563 = vpow.pop %v1562
        %v1564 = vmul.f32 %v1510, 1.442695
        %v1565 = vpow.pop %v1564
        %v1566 = vmul.f32 %v1511, 1.442695
        %v1567 = vpow.pop %v1566
        %v1568 = vmul.f32 %v1512, 1.442695
        %v1569 = vpow.pop %v1568
        %v1570 = vmul.f32 %v1513, 1.442695
        %v1571 = vpow.pop %v1570
        %v1572 = vmul.f32 %v1514, 1.442695
        %v1573 = vpow.pop %v1572
        %v1574 = vmul.f32 %v1515, 1.442695
        %v1575 = vpow.pop %v1574
        %v1576 = vmul.f32 %v1516, 1.442695
        %v1577 = vpow.pop %v1576
        %v1578 = vmul.f32 %v1517, 1.442695
        %v1579 = vpow.pop %v1578
        %v1580 = vmul.f32 %v1518, 1.442695
        %v1581 = vpow.pop %v1580
        %v1582 = vmul.f32 %v1519, 1.442695
        %v1583 = vpow.pop %v1582
        %v1584 = vadd.f32 %v1521, 1.0
        %v1585 = vadd.f32 %v1523, 1.0
        %v1586 = vadd.f32 %v1525, 1.0
        %v1587 = vadd.f32 %v1527, 1.0
        %v1588 = vadd.f32 %v1529, 1.0
        %v1589 = vadd.f32 %v1531, 1.0
        %v1590 = vadd.f32 %v1533, 1.0
        %v1591 = vadd.f32 %v1535, 1.0
        %v1592 = vadd.f32 %v1537, 1.0
        %v1593 = vadd.f32 %v1539, 1.0
        %v1594 = vadd.f32 %v1541, 1.0
        %v1595 = vadd.f32 %v1543, 1.0
        %v1596 = vadd.f32 %v1545, 1.0
        %v1597 = vadd.f32 %v1547, 1.0
        %v1598 = vadd.f32 %v1549, 1.0
        %v1599 = vadd.f32 %v1551, 1.0
        %v1600 = vadd.f32 %v1553, 1.0
        %v1601 = vadd.f32 %v1555, 1.0
        %v1602 = vadd.f32 %v1557, 1.0
        %v1603 = vadd.f32 %v1559, 1.0
        %v1604 = vadd.f32 %v1561, 1.0
        %v1605 = vadd.f32 %v1563, 1.0
        %v1606 = vadd.f32 %v1565, 1.0
        %v1607 = vadd.f32 %v1567, 1.0
        %v1608 = vadd.f32 %v1569, 1.0
        %v1609 = vadd.f32 %v1571, 1.0
        %v1610 = vadd.f32 %v1573, 1.0
        %v1611 = vadd.f32 %v1575, 1.0
        %v1612 = vadd.f32 %v1577, 1.0
        %v1613 = vadd.f32 %v1579, 1.0
        %v1614 = vadd.f32 %v1581, 1.0
        %v1615 = vadd.f32 %v1583, 1.0
        %v1616 = vrcp.pop %v1584
        %v1617 = vmul.f32 1.0, %v1616
        %v1618 = vrcp.pop %v1585
        %v1619 = vmul.f32 1.0, %v1618
        %v1620 = vrcp.pop %v1586
        %v1621 = vmul.f32 1.0, %v1620
        %v1622 = vrcp.pop %v1587
        %v1623 = vmul.f32 1.0, %v1622
        %v1624 = vrcp.pop %v1588
        %v1625 = vmul.f32 1.0, %v1624
        %v1626 = vrcp.pop %v1589
        %v1627 = vmul.f32 1.0, %v1626
        %v1628 = vrcp.pop %v1590
        %v1629 = vmul.f32 1.0, %v1628
        %v1630 = vrcp.pop %v1591
        %v1631 = vmul.f32 1.0, %v1630
        %v1632 = vrcp.pop %v1592
        %v1633 = vmul.f32 1.0, %v1632
        %v1634 = vrcp.pop %v1593
        %v1635 = vmul.f32 1.0, %v1634
        %v1636 = vrcp.pop %v1594
        %v1637 = vmul.f32 1.0, %v1636
        %v1638 = vrcp.pop %v1595
        %v1639 = vmul.f32 1.0, %v1638
        %v1640 = vrcp.pop %v1596
        %v1641 = vmul.f32 1.0, %v1640
        %v1642 = vrcp.pop %v1597
        %v1643 = vmul.f32 1.0, %v1642
        %v1644 = vrcp.pop %v1598
        %v1645 = vmul.f32 1.0, %v1644
        %v1646 = vrcp.pop %v1599
        %v1647 = vmul.f32 1.0, %v1646
        %v1648 = vrcp.pop %v1600
        %v1649 = vmul.f32 1.0, %v1648
        %v1650 = vrcp.pop %v1601
        %v1651 = vmul.f32 1.0, %v1650
        %v1652 = vrcp.pop %v1602
        %v1653 = vmul.f32 1.0, %v1652
        %v1654 = vrcp.pop %v1603
        %v1655 = vmul.f32 1.0, %v1654
        %v1656 = vrcp.pop %v1604
        %v1657 = vmul.f32 1.0, %v1656
        %v1658 = vrcp.pop %v1605
        %v1659 = vmul.f32 1.0, %v1658
        %v1660 = vrcp.pop %v1606
        %v1661 = vmul.f32 1.0, %v1660
        %v1662 = vrcp.pop %v1607
        %v1663 = vmul.f32 1.0, %v1662
        %v1664 = vrcp.pop %v1608
        %v1665 = vmul.f32 1.0, %v1664
        %v1666 = vrcp.pop %v1609
        %v1667 = vmul.f32 1.0, %v1666
        %v1668 = vrcp.pop %v1610
        %v1669 = vmul.f32 1.0, %v1668
        %v1670 = vrcp.pop %v1611
        %v1671 = vmul.f32 1.0, %v1670
        %v1672 = vrcp.pop %v1612
        %v1673 = vmul.f32 1.0, %v1672
        %v1674 = vrcp.pop %v1613
        %v1675 = vmul.f32 1.0, %v1674
        %v1676 = vrcp.pop %v1614
        %v1677 = vmul.f32 1.0, %v1676
        %v1678 = vrcp.pop %v1615
        %v1679 = vmul.f32 1.0, %v1678
        %v1680 = vmul.f32 %v1362, %v1617
        %v1681 = vmul.f32 %v1365, %v1619
        %v1682 = vmul.f32 %v1370, %v1621
        %v1683 = vmul.f32 %v1373, %v1623
        %v1684 = vmul.f32 %v1378, %v1625
        %v1685 = vmul.f32 %v1381, %v1627
        %v1686 = vmul.f32 %v1386, %v1629
        %v1687 = vmul.f32 %v1389, %v1631
        %v1688 = vmul.f32 %v1394, %v1633
        %v1689 = vmul.f32 %v1397, %v1635
        %v1690 = vmul.f32 %v1402, %v1637
        %v1691 = vmul.f32 %v1405, %v1639
        %v1692 = vmul.f32 %v1410, %v1641
        %v1693 = vmul.f32 %v1413, %v1643
        %v1694 = vmul.f32 %v1418, %v1645
        %v1695 = vmul.f32 %v1421, %v1647
        %v1696 = vmul.f32 %v1426, %v1649
        %v1697 = vmul.f32 %v1429, %v1651
        %v1698 = vmul.f32 %v1434, %v1653
        %v1699 = vmul.f32 %v1437, %v1655
        %v1700 = vmul.f32 %v1442, %v1657
        %v1701 = vmul.f32 %v1445, %v1659
        %v1702 = vmul.f32 %v1450, %v1661
        %v1703 = vmul.f32 %v1453, %v1663
        %v1704 = vmul.f32 %v1458, %v1665
        %v1705 = vmul.f32 %v1461, %v1667
        %v1706 = vmul.f32 %v1466, %v1669
        %v1707 = vmul.f32 %v1469, %v1671
        %v1708 = vmul.f32 %v1474, %v1673
        %v1709 = vmul.f32 %v1477, %v1675
        %v1710 = vmul.f32 %v1482, %v1677
        %v1711 = vmul.f32 %v1485, %v1679
        %v1712 = vpack.c.bf16 %v1681, %v1680
        %v1713 = vpack.c.bf16 %v1683, %v1682
        %v1714 = vpack.c.bf16 %v1685, %v1684
        %v1715 = vpack.c.bf16 %v1687, %v1686
        %v1716 = vpack.c.bf16 %v1689, %v1688
        %v1717 = vpack.c.bf16 %v1691, %v1690
        %v1718 = vpack.c.bf16 %v1693, %v1692
        %v1719 = vpack.c.bf16 %v1695, %v1694
        %v1720 = vpack.c.bf16 %v1697, %v1696
        %v1721 = vpack.c.bf16 %v1699, %v1698
        %v1722 = vpack.c.bf16 %v1701, %v1700
        %v1723 = vpack.c.bf16 %v1703, %v1702
        %v1724 = vpack.c.bf16 %v1705, %v1704
        %v1725 = vpack.c.bf16 %v1707, %v1706
        %v1726 = vpack.c.bf16 %v1709, %v1708
        %v1727 = vpack.c.bf16 %v1711, %v1710
        %v1728 = vld [vmem:[#allocation8] sm:$0xf]
        %v1729 = vld [vmem:[#allocation8 + $0x4] sm:$0xf]
        %v1730 = vld [vmem:[#allocation8 + $0x8] sm:$0xf]
        %v1731 = vld [vmem:[#allocation8 + $0xc] sm:$0xf]
        %v1732 = vld [vmem:[#allocation8 + $0x10] sm:$0xf]
        %v1733 = vld [vmem:[#allocation8 + $0x14] sm:$0xf]
        %v1734 = vld [vmem:[#allocation8 + $0x18] sm:$0xf]
        %v1735 = vld [vmem:[#allocation8 + $0x1c] sm:$0xf]
        %v1736 = vld [vmem:[#allocation8 + $0x20] sm:$0xf]
        %v1737 = vld [vmem:[#allocation8 + $0x24] sm:$0xf]
        %v1738 = vld [vmem:[#allocation8 + $0x28] sm:$0xf]
        %v1739 = vld [vmem:[#allocation8 + $0x2c] sm:$0xf]
        %v1740 = vld [vmem:[#allocation8 + $0x30] sm:$0xf]
        %v1741 = vld [vmem:[#allocation8 + $0x34] sm:$0xf]
        %v1742 = vld [vmem:[#allocation8 + $0x38] sm:$0xf]
        %v1743 = vld [vmem:[#allocation8 + $0x3c] sm:$0xf]
        %v1744 = vld [vmem:[%s6] sm:$0x1]
        %v1746 = vlaneseq
        %v1747 = vshrl.u32 %v1746, 7
        %v1748 = vsub.s32 0, %v1747
        %v1749 = vrot.slane %v1744, %v1748
        %v1767 = vunpack.c.l.b16 %v1728
        %v1768 = vunpack.c.l.b16 %v1729
        %v1769 = vunpack.c.l.b16 %v1730
        %v1770 = vunpack.c.l.b16 %v1731
        %v1771 = vunpack.c.l.b16 %v1732
        %v1772 = vunpack.c.l.b16 %v1733
        %v1773 = vunpack.c.l.b16 %v1734
        %v1774 = vunpack.c.l.b16 %v1735
        %v1775 = vunpack.c.l.b16 %v1736
        %v1776 = vunpack.c.l.b16 %v1737
        %v1777 = vunpack.c.l.b16 %v1738
        %v1778 = vunpack.c.l.b16 %v1739
        %v1779 = vunpack.c.l.b16 %v1740
        %v1780 = vunpack.c.l.b16 %v1741
        %v1781 = vunpack.c.l.b16 %v1742
        %v1782 = vunpack.c.l.b16 %v1743
        %v1783 = vpack.c.b16 %v1768, %v1767
        %v1784 = vpack.c.b16 %v1770, %v1769
        %v1785 = vpack.c.b16 %v1772, %v1771
        %v1786 = vpack.c.b16 %v1774, %v1773
        %v1787 = vpack.c.b16 %v1776, %v1775
        %v1788 = vpack.c.b16 %v1778, %v1777
        %v1789 = vpack.c.b16 %v1780, %v1779
        %v1790 = vpack.c.b16 %v1782, %v1781
        %1799 = vmatprep.subr.bf16.mxu0 0
        %1800 = vmatpush1.bf16.msra.mxu0 %v1783
        %1801 = vmatprep.subr.bf16.mxu0 0
        %1802 = vmatpush1.bf16.msra.mxu0 %v1784
        %1803 = vmatprep.subr.bf16.mxu0 0
        %1804 = vmatpush1.bf16.msra.mxu0 %v1785
        %1805 = vmatprep.subr.bf16.mxu0 0
        %1806 = vmatpush1.bf16.msra.mxu0 %v1786
        %1807 = vmatprep.subr.bf16.mxu0 0
        %1808 = vmatpush1.bf16.msra.mxu0 %v1787
        %1809 = vmatprep.subr.bf16.mxu0 0
        %1810 = vmatpush1.bf16.msra.mxu0 %v1788
        %1811 = vmatprep.subr.bf16.mxu0 0
        %1812 = vmatpush1.bf16.msra.mxu0 %v1789
        %1813 = vmatprep.subr.bf16.mxu0 0
        %1814 = vmatpush1.bf16.msra.mxu0 %v1790
        %1815 = vmatprep.subr.bf16.mxu0 0
        %1816 = vmatpush1.bf16.msra.mxu0 0
        %1817 = vmatprep.subr.bf16.mxu0 0
        %1818 = vmatpush1.bf16.msra.mxu0 0
        %1819 = vmatprep.subr.bf16.mxu0 0
        %1820 = vmatpush1.bf16.msra.mxu0 0
        %1821 = vmatprep.subr.bf16.mxu0 0
        %1822 = vmatpush1.bf16.msra.mxu0 0
        %1823 = vmatprep.subr.bf16.mxu0 0
        %1824 = vmatpush1.bf16.msra.mxu0 0
        %1825 = vmatprep.subr.bf16.mxu0 0
        %1826 = vmatpush1.bf16.msra.mxu0 0
        %1827 = vmatprep.subr.bf16.mxu0 0
        %1828 = vmatpush1.bf16.msra.mxu0 0
        %1829 = vmatprep.subr.bf16.mxu0 0
        %1830 = vmatpush1.bf16.msra.mxu0 0
        %1831 = vmatprep.mubr.bf16.mxu0 0
        %1832 = vmatmul.mubr.bf16.gmra.mrb[0].mxu0 %v1712
        %v1833 = vpop.f32.mrb[0].mxu0
        %v1834 = vadd.f32 %v1749, %v1833
        %v1835 = vpop.f32.mrb[0].mxu0
        %v1836 = vpop.f32.mrb[0].mxu0
        %v1837 = vadd.f32 %v1749, %v1836
        %v1838 = vpop.f32.mrb[0].mxu0
        %1839 = vmatprep.mubr.bf16.mxu0 0
        %1840 = vmatmul.mubr.bf16.gmra.mrb[0].mxu0 %v1713
        %v1841 = vpop.f32.mrb[0].mxu0
        %v1842 = vadd.f32 %v1749, %v1841
        %v1843 = vpop.f32.mrb[0].mxu0
        %v1844 = vpop.f32.mrb[0].mxu0
        %v1845 = vadd.f32 %v1749, %v1844
        %v1846 = vpop.f32.mrb[0].mxu0
        %1847 = vmatprep.mubr.bf16.mxu0 0
        %1848 = vmatmul.mubr.bf16.gmra.mrb[0].mxu0 %v1714
        %v1849 = vpop.f32.mrb[0].mxu0
        %v1850 = vadd.f32 %v1749, %v1849
        %v1851 = vpop.f32.mrb[0].mxu0
        %v1852 = vpop.f32.mrb[0].mxu0
        %v1853 = vadd.f32 %v1749, %v1852
        %v1854 = vpop.f32.mrb[0].mxu0
        %1855 = vmatprep.mubr.bf16.mxu0 0
        %1856 = vmatmul.mubr.bf16.gmra.mrb[0].mxu0 %v1715
        %v1857 = vpop.f32.mrb[0].mxu0
        %v1858 = vadd.f32 %v1749, %v1857
        %v1859 = vpop.f32.mrb[0].mxu0
        %v1860 = vpop.f32.mrb[0].mxu0
        %v1861 = vadd.f32 %v1749, %v1860
        %v1862 = vpop.f32.mrb[0].mxu0
        %1863 = vmatprep.mubr.bf16.mxu0 0
        %1864 = vmatmul.mubr.bf16.gmra.mrb[0].mxu0 %v1716
        %v1865 = vpop.f32.mrb[0].mxu0
        %v1866 = vadd.f32 %v1749, %v1865
        %v1867 = vpop.f32.mrb[0].mxu0
        %v1868 = vpop.f32.mrb[0].mxu0
        %v1869 = vadd.f32 %v1749, %v1868
        %v1870 = vpop.f32.mrb[0].mxu0
        %1871 = vmatprep.mubr.bf16.mxu0 0
        %1872 = vmatmul.mubr.bf16.gmra.mrb[0].mxu0 %v1717
        %v1873 = vpop.f32.mrb[0].mxu0
        %v1874 = vadd.f32 %v1749, %v1873
        %v1875 = vpop.f32.mrb[0].mxu0
        %v1876 = vpop.f32.mrb[0].mxu0
        %v1877 = vadd.f32 %v1749, %v1876
        %v1878 = vpop.f32.mrb[0].mxu0
        %1879 = vmatprep.mubr.bf16.mxu0 0
        %1880 = vmatmul.mubr.bf16.gmra.mrb[0].mxu0 %v1718
        %v1881 = vpop.f32.mrb[0].mxu0
        %v1882 = vadd.f32 %v1749, %v1881
        %v1883 = vpop.f32.mrb[0].mxu0
        %v1884 = vpop.f32.mrb[0].mxu0
        %v1885 = vadd.f32 %v1749, %v1884
        %v1886 = vpop.f32.mrb[0].mxu0
        %1887 = vmatprep.mubr.bf16.mxu0 0
        %1888 = vmatmul.mubr.bf16.gmra.mrb[0].mxu0 %v1719
        %v1889 = vpop.f32.mrb[0].mxu0
        %v1890 = vadd.f32 %v1749, %v1889
        %v1891 = vpop.f32.mrb[0].mxu0
        %v1892 = vpop.f32.mrb[0].mxu0
        %v1893 = vadd.f32 %v1749, %v1892
        %v1894 = vpop.f32.mrb[0].mxu0
        %1895 = vmatprep.mubr.bf16.mxu0 0
        %1896 = vmatmul.mubr.bf16.gmra.mrb[0].mxu0 %v1720
        %v1897 = vpop.f32.mrb[0].mxu0
        %v1898 = vadd.f32 %v1749, %v1897
        %v1899 = vpop.f32.mrb[0].mxu0
        %v1900 = vpop.f32.mrb[0].mxu0
        %v1901 = vadd.f32 %v1749, %v1900
        %v1902 = vpop.f32.mrb[0].mxu0
        %1903 = vmatprep.mubr.bf16.mxu0 0
        %1904 = vmatmul.mubr.bf16.gmra.mrb[0].mxu0 %v1721
        %v1905 = vpop.f32.mrb[0].mxu0
        %v1906 = vadd.f32 %v1749, %v1905
        %v1907 = vpop.f32.mrb[0].mxu0
        %v1908 = vpop.f32.mrb[0].mxu0
        %v1909 = vadd.f32 %v1749, %v1908
        %v1910 = vpop.f32.mrb[0].mxu0
        %1911 = vmatprep.mubr.bf16.mxu0 0
        %1912 = vmatmul.mubr.bf16.gmra.mrb[0].mxu0 %v1722
        %v1913 = vpop.f32.mrb[0].mxu0
        %v1914 = vadd.f32 %v1749, %v1913
        %v1915 = vpop.f32.mrb[0].mxu0
        %v1916 = vpop.f32.mrb[0].mxu0
        %v1917 = vadd.f32 %v1749, %v1916
        %v1918 = vpop.f32.mrb[0].mxu0
        %1919 = vmatprep.mubr.bf16.mxu0 0
        %1920 = vmatmul.mubr.bf16.gmra.mrb[0].mxu0 %v1723
        %v1921 = vpop.f32.mrb[0].mxu0
        %v1922 = vadd.f32 %v1749, %v1921
        %v1923 = vpop.f32.mrb[0].mxu0
        %v1924 = vpop.f32.mrb[0].mxu0
        %v1925 = vadd.f32 %v1749, %v1924
        %v1926 = vpop.f32.mrb[0].mxu0
        %1927 = vmatprep.mubr.bf16.mxu0 0
        %1928 = vmatmul.mubr.bf16.gmra.mrb[0].mxu0 %v1724
        %v1929 = vpop.f32.mrb[0].mxu0
        %v1930 = vadd.f32 %v1749, %v1929
        %v1931 = vpop.f32.mrb[0].mxu0
        %v1932 = vpop.f32.mrb[0].mxu0
        %v1933 = vadd.f32 %v1749, %v1932
        %v1934 = vpop.f32.mrb[0].mxu0
        %1935 = vmatprep.mubr.bf16.mxu0 0
        %1936 = vmatmul.mubr.bf16.gmra.mrb[0].mxu0 %v1725
        %v1937 = vpop.f32.mrb[0].mxu0
        %v1938 = vadd.f32 %v1749, %v1937
        %v1939 = vpop.f32.mrb[0].mxu0
        %v1940 = vpop.f32.mrb[0].mxu0
        %v1941 = vadd.f32 %v1749, %v1940
        %v1942 = vpop.f32.mrb[0].mxu0
        %1943 = vmatprep.mubr.bf16.mxu0 0
        %1944 = vmatmul.mubr.bf16.gmra.mrb[0].mxu0 %v1726
        %v1945 = vpop.f32.mrb[0].mxu0
        %v1946 = vadd.f32 %v1749, %v1945
        %v1947 = vpop.f32.mrb[0].mxu0
        %v1948 = vpop.f32.mrb[0].mxu0
        %v1949 = vadd.f32 %v1749, %v1948
        %v1950 = vpop.f32.mrb[0].mxu0
        %1951 = vmatprep.mubr.bf16.mxu0 0
        %1952 = vmatmul.mubr.bf16.gmra.mrb[0].mxu0 %v1727
        %v1953 = vpop.f32.mrb[0].mxu0
        %v1954 = vadd.f32 %v1749, %v1953
        %v1955 = vpop.f32.mrb[0].mxu0
        %v1956 = vpop.f32.mrb[0].mxu0
        %v1957 = vadd.f32 %v1749, %v1956
        %v1958 = vpop.f32.mrb[0].mxu0
        %1959 = vdwg.mxu0
        %v1960 = vld [vmem:[#allocation10] sm:$0xf]
        %v1961 = vld [vmem:[#allocation10 + $0x4] sm:$0xf]
        %v1962 = vld [vmem:[#allocation10 + $0x8] sm:$0xf]
        %v1963 = vld [vmem:[#allocation10 + $0xc] sm:$0xf]
        %v1964 = vld [vmem:[#allocation10 + $0x10] sm:$0xf]
        %v1965 = vld [vmem:[#allocation10 + $0x14] sm:$0xf]
        %v1966 = vld [vmem:[#allocation10 + $0x18] sm:$0xf]
        %v1967 = vld [vmem:[#allocation10 + $0x1c] sm:$0xf]
        %v1968 = vld [vmem:[#allocation10 + $0x20] sm:$0xf]
        %v1969 = vld [vmem:[#allocation10 + $0x24] sm:$0xf]
        %v1970 = vld [vmem:[#allocation10 + $0x28] sm:$0xf]
        %v1971 = vld [vmem:[#allocation10 + $0x2c] sm:$0xf]
        %v1972 = vld [vmem:[#allocation10 + $0x30] sm:$0xf]
        %v1973 = vld [vmem:[#allocation10 + $0x34] sm:$0xf]
        %v1974 = vld [vmem:[#allocation10 + $0x38] sm:$0xf]
        %v1975 = vld [vmem:[#allocation10 + $0x3c] sm:$0xf]
        %v1976 = vld [vmem:[%s8] sm:$0x1]
        %v1978 = vlaneseq
        %v1979 = vshrl.u32 %v1978, 7
        %v1980 = vsub.s32 0, %v1979
        %v1981 = vrot.slane %v1976, %v1980
        %v1999 = vunpack.c.l.b16 %v1960
        %v2000 = vunpack.c.l.b16 %v1961
        %v2001 = vunpack.c.l.b16 %v1962
        %v2002 = vunpack.c.l.b16 %v1963
        %v2003 = vunpack.c.l.b16 %v1964
        %v2004 = vunpack.c.l.b16 %v1965
        %v2005 = vunpack.c.l.b16 %v1966
        %v2006 = vunpack.c.l.b16 %v1967
        %v2007 = vunpack.c.l.b16 %v1968
        %v2008 = vunpack.c.l.b16 %v1969
        %v2009 = vunpack.c.l.b16 %v1970
        %v2010 = vunpack.c.l.b16 %v1971
        %v2011 = vunpack.c.l.b16 %v1972
        %v2012 = vunpack.c.l.b16 %v1973
        %v2013 = vunpack.c.l.b16 %v1974
        %v2014 = vunpack.c.l.b16 %v1975
        %v2015 = vpack.c.b16 %v2000, %v1999
        %v2016 = vpack.c.b16 %v2002, %v2001
        %v2017 = vpack.c.b16 %v2004, %v2003
        %v2018 = vpack.c.b16 %v2006, %v2005
        %v2019 = vpack.c.b16 %v2008, %v2007
        %v2020 = vpack.c.b16 %v2010, %v2009
        %v2021 = vpack.c.b16 %v2012, %v2011
        %v2022 = vpack.c.b16 %v2014, %v2013
        %2031 = vmatprep.subr.bf16.mxu0 0
        %2032 = vmatpush1.bf16.msra.mxu0 %v2015
        %2033 = vmatprep.subr.bf16.mxu0 0
        %2034 = vmatpush1.bf16.msra.mxu0 %v2016
        %2035 = vmatprep.subr.bf16.mxu0 0
        %2036 = vmatpush1.bf16.msra.mxu0 %v2017
        %2037 = vmatprep.subr.bf16.mxu0 0
        %2038 = vmatpush1.bf16.msra.mxu0 %v2018
        %2039 = vmatprep.subr.bf16.mxu0 0
        %2040 = vmatpush1.bf16.msra.mxu0 %v2019
        %2041 = vmatprep.subr.bf16.mxu0 0
        %2042 = vmatpush1.bf16.msra.mxu0 %v2020
        %2043 = vmatprep.subr.bf16.mxu0 0
        %2044 = vmatpush1.bf16.msra.mxu0 %v2021
        %2045 = vmatprep.subr.bf16.mxu0 0
        %2046 = vmatpush1.bf16.msra.mxu0 %v2022
        %2047 = vmatprep.subr.bf16.mxu0 0
        %2048 = vmatpush1.bf16.msra.mxu0 0
        %2049 = vmatprep.subr.bf16.mxu0 0
        %2050 = vmatpush1.bf16.msra.mxu0 0
        %2051 = vmatprep.subr.bf16.mxu0 0
        %2052 = vmatpush1.bf16.msra.mxu0 0
        %2053 = vmatprep.subr.bf16.mxu0 0
        %2054 = vmatpush1.bf16.msra.mxu0 0
        %2055 = vmatprep.subr.bf16.mxu0 0
        %2056 = vmatpush1.bf16.msra.mxu0 0
        %2057 = vmatprep.subr.bf16.mxu0 0
        %2058 = vmatpush1.bf16.msra.mxu0 0
        %2059 = vmatprep.subr.bf16.mxu0 0
        %2060 = vmatpush1.bf16.msra.mxu0 0
        %2061 = vmatprep.subr.bf16.mxu0 0
        %2062 = vmatpush1.bf16.msra.mxu0 0
        %2063 = vmatprep.mubr.bf16.mxu0 0
        %2064 = vmatmul.mubr.bf16.gmra.mrb[0].mxu0 %v1712
        %v2065 = vpop.f32.mrb[0].mxu0
        %v2066 = vadd.f32 %v1981, %v2065
        %v2067 = vpop.f32.mrb[0].mxu0
        %v2068 = vpop.f32.mrb[0].mxu0
        %v2069 = vadd.f32 %v1981, %v2068
        %v2070 = vpop.f32.mrb[0].mxu0
        %2071 = vmatprep.mubr.bf16.mxu0 0
        %2072 = vmatmul.mubr.bf16.gmra.mrb[0].mxu0 %v1713
        %v2073 = vpop.f32.mrb[0].mxu0
        %v2074 = vadd.f32 %v1981, %v2073
        %v2075 = vpop.f32.mrb[0].mxu0
        %v2076 = vpop.f32.mrb[0].mxu0
        %v2077 = vadd.f32 %v1981, %v2076
        %v2078 = vpop.f32.mrb[0].mxu0
        %2079 = vmatprep.mubr.bf16.mxu0 0
        %2080 = vmatmul.mubr.bf16.gmra.mrb[0].mxu0 %v1714
        %v2081 = vpop.f32.mrb[0].mxu0
        %v2082 = vadd.f32 %v1981, %v2081
        %v2083 = vpop.f32.mrb[0].mxu0
        %v2084 = vpop.f32.mrb[0].mxu0
        %v2085 = vadd.f32 %v1981, %v2084
        %v2086 = vpop.f32.mrb[0].mxu0
        %2087 = vmatprep.mubr.bf16.mxu0 0
        %2088 = vmatmul.mubr.bf16.gmra.mrb[0].mxu0 %v1715
        %v2089 = vpop.f32.mrb[0].mxu0
        %v2090 = vadd.f32 %v1981, %v2089
        %v2091 = vpop.f32.mrb[0].mxu0
        %v2092 = vpop.f32.mrb[0].mxu0
        %v2093 = vadd.f32 %v1981, %v2092
        %v2094 = vpop.f32.mrb[0].mxu0
        %2095 = vmatprep.mubr.bf16.mxu0 0
        %2096 = vmatmul.mubr.bf16.gmra.mrb[0].mxu0 %v1716
        %v2097 = vpop.f32.mrb[0].mxu0
        %v2098 = vadd.f32 %v1981, %v2097
        %v2099 = vpop.f32.mrb[0].mxu0
        %v2100 = vpop.f32.mrb[0].mxu0
        %v2101 = vadd.f32 %v1981, %v2100
        %v2102 = vpop.f32.mrb[0].mxu0
        %2103 = vmatprep.mubr.bf16.mxu0 0
        %2104 = vmatmul.mubr.bf16.gmra.mrb[0].mxu0 %v1717
        %v2105 = vpop.f32.mrb[0].mxu0
        %v2106 = vadd.f32 %v1981, %v2105
        %v2107 = vpop.f32.mrb[0].mxu0
        %v2108 = vpop.f32.mrb[0].mxu0
        %v2109 = vadd.f32 %v1981, %v2108
        %v2110 = vpop.f32.mrb[0].mxu0
        %2111 = vmatprep.mubr.bf16.mxu0 0
        %2112 = vmatmul.mubr.bf16.gmra.mrb[0].mxu0 %v1718
        %v2113 = vpop.f32.mrb[0].mxu0
        %v2114 = vadd.f32 %v1981, %v2113
        %v2115 = vpop.f32.mrb[0].mxu0
        %v2116 = vpop.f32.mrb[0].mxu0
        %v2117 = vadd.f32 %v1981, %v2116
        %v2118 = vpop.f32.mrb[0].mxu0
        %2119 = vmatprep.mubr.bf16.mxu0 0
        %2120 = vmatmul.mubr.bf16.gmra.mrb[0].mxu0 %v1719
        %v2121 = vpop.f32.mrb[0].mxu0
        %v2122 = vadd.f32 %v1981, %v2121
        %v2123 = vpop.f32.mrb[0].mxu0
        %v2124 = vpop.f32.mrb[0].mxu0
        %v2125 = vadd.f32 %v1981, %v2124
        %v2126 = vpop.f32.mrb[0].mxu0
        %2127 = vmatprep.mubr.bf16.mxu0 0
        %2128 = vmatmul.mubr.bf16.gmra.mrb[0].mxu0 %v1720
        %v2129 = vpop.f32.mrb[0].mxu0
        %v2130 = vadd.f32 %v1981, %v2129
        %v2131 = vpop.f32.mrb[0].mxu0
        %v2132 = vpop.f32.mrb[0].mxu0
        %v2133 = vadd.f32 %v1981, %v2132
        %v2134 = vpop.f32.mrb[0].mxu0
        %2135 = vmatprep.mubr.bf16.mxu0 0
        %2136 = vmatmul.mubr.bf16.gmra.mrb[0].mxu0 %v1721
        %v2137 = vpop.f32.mrb[0].mxu0
        %v2138 = vadd.f32 %v1981, %v2137
        %v2139 = vpop.f32.mrb[0].mxu0
        %v2140 = vpop.f32.mrb[0].mxu0
        %v2141 = vadd.f32 %v1981, %v2140
        %v2142 = vpop.f32.mrb[0].mxu0
        %2143 = vmatprep.mubr.bf16.mxu0 0
        %2144 = vmatmul.mubr.bf16.gmra.mrb[0].mxu0 %v1722
        %v2145 = vpop.f32.mrb[0].mxu0
        %v2146 = vadd.f32 %v1981, %v2145
        %v2147 = vpop.f32.mrb[0].mxu0
        %v2148 = vpop.f32.mrb[0].mxu0
        %v2149 = vadd.f32 %v1981, %v2148
        %v2150 = vpop.f32.mrb[0].mxu0
        %2151 = vmatprep.mubr.bf16.mxu0 0
        %2152 = vmatmul.mubr.bf16.gmra.mrb[0].mxu0 %v1723
        %v2153 = vpop.f32.mrb[0].mxu0
        %v2154 = vadd.f32 %v1981, %v2153
        %v2155 = vpop.f32.mrb[0].mxu0
        %v2156 = vpop.f32.mrb[0].mxu0
        %v2157 = vadd.f32 %v1981, %v2156
        %v2158 = vpop.f32.mrb[0].mxu0
        %2159 = vmatprep.mubr.bf16.mxu0 0
        %2160 = vmatmul.mubr.bf16.gmra.mrb[0].mxu0 %v1724
        %v2161 = vpop.f32.mrb[0].mxu0
        %v2162 = vadd.f32 %v1981, %v2161
        %v2163 = vpop.f32.mrb[0].mxu0
        %v2164 = vpop.f32.mrb[0].mxu0
        %v2165 = vadd.f32 %v1981, %v2164
        %v2166 = vpop.f32.mrb[0].mxu0
        %2167 = vmatprep.mubr.bf16.mxu0 0
        %2168 = vmatmul.mubr.bf16.gmra.mrb[0].mxu0 %v1725
        %v2169 = vpop.f32.mrb[0].mxu0
        %v2170 = vadd.f32 %v1981, %v2169
        %v2171 = vpop.f32.mrb[0].mxu0
        %v2172 = vpop.f32.mrb[0].mxu0
        %v2173 = vadd.f32 %v1981, %v2172
        %v2174 = vpop.f32.mrb[0].mxu0
        %2175 = vmatprep.mubr.bf16.mxu0 0
        %2176 = vmatmul.mubr.bf16.gmra.mrb[0].mxu0 %v1726
        %v2177 = vpop.f32.mrb[0].mxu0
        %v2178 = vadd.f32 %v1981, %v2177
        %v2179 = vpop.f32.mrb[0].mxu0
        %v2180 = vpop.f32.mrb[0].mxu0
        %v2181 = vadd.f32 %v1981, %v2180
        %v2182 = vpop.f32.mrb[0].mxu0
        %2183 = vmatprep.mubr.bf16.mxu0 0
        %2184 = vmatmul.mubr.bf16.gmra.mrb[0].mxu0 %v1727
        %v2185 = vpop.f32.mrb[0].mxu0
        %v2186 = vadd.f32 %v1981, %v2185
        %v2187 = vpop.f32.mrb[0].mxu0
        %v2188 = vpop.f32.mrb[0].mxu0
        %v2189 = vadd.f32 %v1981, %v2188
        %v2190 = vpop.f32.mrb[0].mxu0
        %2191 = vdwg.mxu0
        %v2192 = vsub.f32 -1.0, %v2066
        %v2193 = vsub.f32 -1.0, %v2069
        %v2194 = vsub.f32 -1.0, %v2074
        %v2195 = vsub.f32 -1.0, %v2077
        %v2196 = vsub.f32 -1.0, %v2082
        %v2197 = vsub.f32 -1.0, %v2085
        %v2198 = vsub.f32 -1.0, %v2090
        %v2199 = vsub.f32 -1.0, %v2093
        %v2200 = vsub.f32 -1.0, %v2098
        %v2201 = vsub.f32 -1.0, %v2101
        %v2202 = vsub.f32 -1.0, %v2106
        %v2203 = vsub.f32 -1.0, %v2109
        %v2204 = vsub.f32 -1.0, %v2114
        %v2205 = vsub.f32 -1.0, %v2117
        %v2206 = vsub.f32 -1.0, %v2122
        %v2207 = vsub.f32 -1.0, %v2125
        %v2208 = vsub.f32 -1.0, %v2130
        %v2209 = vsub.f32 -1.0, %v2133
        %v2210 = vsub.f32 -1.0, %v2138
        %v2211 = vsub.f32 -1.0, %v2141
        %v2212 = vsub.f32 -1.0, %v2146
        %v2213 = vsub.f32 -1.0, %v2149
        %v2214 = vsub.f32 -1.0, %v2154
        %v2215 = vsub.f32 -1.0, %v2157
        %v2216 = vsub.f32 -1.0, %v2162
        %v2217 = vsub.f32 -1.0, %v2165
        %v2218 = vsub.f32 -1.0, %v2170
        %v2219 = vsub.f32 -1.0, %v2173
        %v2220 = vsub.f32 -1.0, %v2178
        %v2221 = vsub.f32 -1.0, %v2181
        %v2222 = vsub.f32 -1.0, %v2186
        %v2223 = vsub.f32 -1.0, %v2189
        %v2224 = vmul.f32 %v2066, 1.442695
        %v2225 = vpow.pop %v2224
        %v2226 = vmul.f32 %v2069, 1.442695
        %v2227 = vpow.pop %v2226
        %v2228 = vmul.f32 %v2074, 1.442695
        %v2229 = vpow.pop %v2228
        %v2230 = vmul.f32 %v2077, 1.442695
        %v2231 = vpow.pop %v2230
        %v2232 = vmul.f32 %v2082, 1.442695
        %v2233 = vpow.pop %v2232
        %v2234 = vmul.f32 %v2085, 1.442695
        %v2235 = vpow.pop %v2234
        %v2236 = vmul.f32 %v2090, 1.442695
        %v2237 = vpow.pop %v2236
        %v2238 = vmul.f32 %v2093, 1.442695
        %v2239 = vpow.pop %v2238
        %v2240 = vmul.f32 %v2098, 1.442695
        %v2241 = vpow.pop %v2240
        %v2242 = vmul.f32 %v2101, 1.442695
        %v2243 = vpow.pop %v2242
        %v2244 = vmul.f32 %v2106, 1.442695
        %v2245 = vpow.pop %v2244
        %v2246 = vmul.f32 %v2109, 1.442695
        %v2247 = vpow.pop %v2246
        %v2248 = vmul.f32 %v2114, 1.442695
        %v2249 = vpow.pop %v2248
        %v2250 = vmul.f32 %v2117, 1.442695
        %v2251 = vpow.pop %v2250
        %v2252 = vmul.f32 %v2122, 1.442695
        %v2253 = vpow.pop %v2252
        %v2254 = vmul.f32 %v2125, 1.442695
        %v2255 = vpow.pop %v2254
        %v2256 = vmul.f32 %v2130, 1.442695
        %v2257 = vpow.pop %v2256
        %v2258 = vmul.f32 %v2133, 1.442695
        %v2259 = vpow.pop %v2258
        %v2260 = vmul.f32 %v2138, 1.442695
        %v2261 = vpow.pop %v2260
        %v2262 = vmul.f32 %v2141, 1.442695
        %v2263 = vpow.pop %v2262
        %v2264 = vmul.f32 %v2146, 1.442695
        %v2265 = vpow.pop %v2264
        %v2266 = vmul.f32 %v2149, 1.442695
        %v2267 = vpow.pop %v2266
        %v2268 = vmul.f32 %v2154, 1.442695
        %v2269 = vpow.pop %v2268
        %v2270 = vmul.f32 %v2157, 1.442695
        %v2271 = vpow.pop %v2270
        %v2272 = vmul.f32 %v2162, 1.442695
        %v2273 = vpow.pop %v2272
        %v2274 = vmul.f32 %v2165, 1.442695
        %v2275 = vpow.pop %v2274
        %v2276 = vmul.f32 %v2170, 1.442695
        %v2277 = vpow.pop %v2276
        %v2278 = vmul.f32 %v2173, 1.442695
        %v2279 = vpow.pop %v2278
        %v2280 = vmul.f32 %v2178, 1.442695
        %v2281 = vpow.pop %v2280
        %v2282 = vmul.f32 %v2181, 1.442695
        %v2283 = vpow.pop %v2282
        %v2284 = vmul.f32 %v2186, 1.442695
        %v2285 = vpow.pop %v2284
        %v2286 = vmul.f32 %v2189, 1.442695
        %v2287 = vpow.pop %v2286
        %v2288 = vadd.f32 %v2192, %v2225
        %v2289 = vadd.f32 %v2193, %v2227
        %v2290 = vadd.f32 %v2194, %v2229
        %v2291 = vadd.f32 %v2195, %v2231
        %v2292 = vadd.f32 %v2196, %v2233
        %v2293 = vadd.f32 %v2197, %v2235
        %v2294 = vadd.f32 %v2198, %v2237
        %v2295 = vadd.f32 %v2199, %v2239
        %v2296 = vadd.f32 %v2200, %v2241
        %v2297 = vadd.f32 %v2201, %v2243
        %v2298 = vadd.f32 %v2202, %v2245
        %v2299 = vadd.f32 %v2203, %v2247
        %v2300 = vadd.f32 %v2204, %v2249
        %v2301 = vadd.f32 %v2205, %v2251
        %v2302 = vadd.f32 %v2206, %v2253
        %v2303 = vadd.f32 %v2207, %v2255
        %v2304 = vadd.f32 %v2208, %v2257
        %v2305 = vadd.f32 %v2209, %v2259
        %v2306 = vadd.f32 %v2210, %v2261
        %v2307 = vadd.f32 %v2211, %v2263
        %v2308 = vadd.f32 %v2212, %v2265
        %v2309 = vadd.f32 %v2213, %v2267
        %v2310 = vadd.f32 %v2214, %v2269
        %v2311 = vadd.f32 %v2215, %v2271
        %v2312 = vadd.f32 %v2216, %v2273
        %v2313 = vadd.f32 %v2217, %v2275
        %v2314 = vadd.f32 %v2218, %v2277
        %v2315 = vadd.f32 %v2219, %v2279
        %v2316 = vadd.f32 %v2220, %v2281
        %v2317 = vadd.f32 %v2221, %v2283
        %v2318 = vadd.f32 %v2222, %v2285
        %v2319 = vadd.f32 %v2223, %v2287
        %v2320 = vmul.f32 %v1834, %v1834
        %v2321 = vmul.f32 %v1837, %v1837
        %v2322 = vmul.f32 %v1842, %v1842
        %v2323 = vmul.f32 %v1845, %v1845
        %v2324 = vmul.f32 %v1850, %v1850
        %v2325 = vmul.f32 %v1853, %v1853
        %v2326 = vmul.f32 %v1858, %v1858
        %v2327 = vmul.f32 %v1861, %v1861
        %v2328 = vmul.f32 %v1866, %v1866
        %v2329 = vmul.f32 %v1869, %v1869
        %v2330 = vmul.f32 %v1874, %v1874
        %v2331 = vmul.f32 %v1877, %v1877
        %v2332 = vmul.f32 %v1882, %v1882
        %v2333 = vmul.f32 %v1885, %v1885
        %v2334 = vmul.f32 %v1890, %v1890
        %v2335 = vmul.f32 %v1893, %v1893
        %v2336 = vmul.f32 %v1898, %v1898
        %v2337 = vmul.f32 %v1901, %v1901
        %v2338 = vmul.f32 %v1906, %v1906
        %v2339 = vmul.f32 %v1909, %v1909
        %v2340 = vmul.f32 %v1914, %v1914
        %v2341 = vmul.f32 %v1917, %v1917
        %v2342 = vmul.f32 %v1922, %v1922
        %v2343 = vmul.f32 %v1925, %v1925
        %v2344 = vmul.f32 %v1930, %v1930
        %v2345 = vmul.f32 %v1933, %v1933
        %v2346 = vmul.f32 %v1938, %v1938
        %v2347 = vmul.f32 %v1941, %v1941
        %v2348 = vmul.f32 %v1946, %v1946
        %v2349 = vmul.f32 %v1949, %v1949
        %v2350 = vmul.f32 %v1954, %v1954
        %v2351 = vmul.f32 %v1957, %v1957
        %v2352 = vadd.f32 %v2288, %v2320
        %v2353 = vadd.f32 %v2289, %v2321
        %v2354 = vadd.f32 %v2290, %v2322
        %v2355 = vadd.f32 %v2291, %v2323
        %v2356 = vadd.f32 %v2292, %v2324
        %v2357 = vadd.f32 %v2293, %v2325
        %v2358 = vadd.f32 %v2294, %v2326
        %v2359 = vadd.f32 %v2295, %v2327
        %v2360 = vadd.f32 %v2296, %v2328
        %v2361 = vadd.f32 %v2297, %v2329
        %v2362 = vadd.f32 %v2298, %v2330
        %v2363 = vadd.f32 %v2299, %v2331
        %v2364 = vadd.f32 %v2300, %v2332
        %v2365 = vadd.f32 %v2301, %v2333
        %v2366 = vadd.f32 %v2302, %v2334
        %v2367 = vadd.f32 %v2303, %v2335
        %v2368 = vadd.f32 %v2304, %v2336
        %v2369 = vadd.f32 %v2305, %v2337
        %v2370 = vadd.f32 %v2306, %v2338
        %v2371 = vadd.f32 %v2307, %v2339
        %v2372 = vadd.f32 %v2308, %v2340
        %v2373 = vadd.f32 %v2309, %v2341
        %v2374 = vadd.f32 %v2310, %v2342
        %v2375 = vadd.f32 %v2311, %v2343
        %v2376 = vadd.f32 %v2312, %v2344
        %v2377 = vadd.f32 %v2313, %v2345
        %v2378 = vadd.f32 %v2314, %v2346
        %v2379 = vadd.f32 %v2315, %v2347
        %v2380 = vadd.f32 %v2316, %v2348
        %v2381 = vadd.f32 %v2317, %v2349
        %v2382 = vadd.f32 %v2318, %v2350
        %v2383 = vadd.f32 %v2319, %v2351
        %v2384 = vmul.f32 %v2352, 0.5
        %v2385 = vmul.f32 %v2353, 0.5
        %v2386 = vmul.f32 %v2354, 0.5
        %v2387 = vmul.f32 %v2355, 0.5
        %v2388 = vmul.f32 %v2356, 0.5
        %v2389 = vmul.f32 %v2357, 0.5
        %v2390 = vmul.f32 %v2358, 0.5
        %v2391 = vmul.f32 %v2359, 0.5
        %v2392 = vmul.f32 %v2360, 0.5
        %v2393 = vmul.f32 %v2361, 0.5
        %v2394 = vmul.f32 %v2362, 0.5
        %v2395 = vmul.f32 %v2363, 0.5
        %v2396 = vmul.f32 %v2364, 0.5
        %v2397 = vmul.f32 %v2365, 0.5
        %v2398 = vmul.f32 %v2366, 0.5
        %v2399 = vmul.f32 %v2367, 0.5
        %v2400 = vmul.f32 %v2368, 0.5
        %v2401 = vmul.f32 %v2369, 0.5
        %v2402 = vmul.f32 %v2370, 0.5
        %v2403 = vmul.f32 %v2371, 0.5
        %v2404 = vmul.f32 %v2372, 0.5
        %v2405 = vmul.f32 %v2373, 0.5
        %v2406 = vmul.f32 %v2374, 0.5
        %v2407 = vmul.f32 %v2375, 0.5
        %v2408 = vmul.f32 %v2376, 0.5
        %v2409 = vmul.f32 %v2377, 0.5
        %v2410 = vmul.f32 %v2378, 0.5
        %v2411 = vmul.f32 %v2379, 0.5
        %v2412 = vmul.f32 %v2380, 0.5
        %v2413 = vmul.f32 %v2381, 0.5
        %v2414 = vmul.f32 %v2382, 0.5
        %v2415 = vmul.f32 %v2383, 0.5
        %v2416 = vlaneseq
        %v2417 = vshrl.u32 %v2416, 7
        %v2418 = vadd.s32 %v2417, 8
        %v2419 = vadd.s32 %v2417, 16
        %v2420 = vadd.s32 %v2417, 24
        %v2421 = vadd.s32 %v2417, 32
        %v2422 = vadd.s32 %v2417, 40
        %v2423 = vadd.s32 %v2417, 48
        %v2424 = vadd.s32 %v2417, 56
        %v2425 = vadd.s32 %v2417, 64
        %v2426 = vadd.s32 %v2417, 72
        %v2427 = vadd.s32 %v2417, 80
        %v2428 = vadd.s32 %v2417, 88
        %v2429 = vadd.s32 %v2417, 96
        %v2430 = vadd.s32 %v2417, 104
        %v2431 = vadd.s32 %v2417, 112
        %v2432 = vadd.s32 %v2417, 120
        %v2433 = vadd.s32 %v2417, 128
        %v2434 = vadd.s32 %v2417, 136
        %v2435 = vadd.s32 %v2417, 144
        %v2436 = vadd.s32 %v2417, 152
        %v2437 = vadd.s32 %v2417, 160
        %v2438 = vadd.s32 %v2417, 168
        %v2439 = vadd.s32 %v2417, 176
        %v2440 = vadd.s32 %v2417, 184
        %v2441 = vadd.s32 %v2417, 192
        %v2442 = vadd.s32 %v2417, 200
        %v2443 = vadd.s32 %v2417, 208
        %v2444 = vadd.s32 %v2417, 216
        %v2445 = vadd.s32 %v2417, 224
        %v2446 = vadd.s32 %v2417, 232
        %v2447 = vadd.s32 %v2417, 240
        %v2448 = vadd.s32 %v2417, 248
        %s2449 = smul.u32 %s41, 256
        %v2450 = vstv %s2449
        %v2451 = vadd.s32 %v2417, %v2450
        %v2452 = vadd.s32 %v2418, %v2450
        %v2453 = vadd.s32 %v2419, %v2450
        %v2454 = vadd.s32 %v2420, %v2450
        %v2455 = vadd.s32 %v2421, %v2450
        %v2456 = vadd.s32 %v2422, %v2450
        %v2457 = vadd.s32 %v2423, %v2450
        %v2458 = vadd.s32 %v2424, %v2450
        %v2459 = vadd.s32 %v2425, %v2450
        %v2460 = vadd.s32 %v2426, %v2450
        %v2461 = vadd.s32 %v2427, %v2450
        %v2462 = vadd.s32 %v2428, %v2450
        %v2463 = vadd.s32 %v2429, %v2450
        %v2464 = vadd.s32 %v2430, %v2450
        %v2465 = vadd.s32 %v2431, %v2450
        %v2466 = vadd.s32 %v2432, %v2450
        %v2467 = vadd.s32 %v2433, %v2450
        %v2468 = vadd.s32 %v2434, %v2450
        %v2469 = vadd.s32 %v2435, %v2450
        %v2470 = vadd.s32 %v2436, %v2450
        %v2471 = vadd.s32 %v2437, %v2450
        %v2472 = vadd.s32 %v2438, %v2450
        %v2473 = vadd.s32 %v2439, %v2450
        %v2474 = vadd.s32 %v2440, %v2450
        %v2475 = vadd.s32 %v2441, %v2450
        %v2476 = vadd.s32 %v2442, %v2450
        %v2477 = vadd.s32 %v2443, %v2450
        %v2478 = vadd.s32 %v2444, %v2450
        %v2479 = vadd.s32 %v2445, %v2450
        %v2480 = vadd.s32 %v2446, %v2450
        %v2481 = vadd.s32 %v2447, %v2450
        %v2482 = vadd.s32 %v2448, %v2450
        %vm2483 = vcmp.lt.s32.totalorder %v2451, 300
        %vm2484 = vcmp.lt.s32.totalorder %v2452, 300
        %vm2485 = vcmp.lt.s32.totalorder %v2453, 300
        %vm2486 = vcmp.lt.s32.totalorder %v2454, 300
        %vm2487 = vcmp.lt.s32.totalorder %v2455, 300
        %vm2488 = vcmp.lt.s32.totalorder %v2456, 300
        %vm2489 = vcmp.lt.s32.totalorder %v2457, 300
        %vm2490 = vcmp.lt.s32.totalorder %v2458, 300
        %vm2491 = vcmp.lt.s32.totalorder %v2459, 300
        %vm2492 = vcmp.lt.s32.totalorder %v2460, 300
        %vm2493 = vcmp.lt.s32.totalorder %v2461, 300
        %vm2494 = vcmp.lt.s32.totalorder %v2462, 300
        %vm2495 = vcmp.lt.s32.totalorder %v2463, 300
        %vm2496 = vcmp.lt.s32.totalorder %v2464, 300
        %vm2497 = vcmp.lt.s32.totalorder %v2465, 300
        %vm2498 = vcmp.lt.s32.totalorder %v2466, 300
        %vm2499 = vcmp.lt.s32.totalorder %v2467, 300
        %vm2500 = vcmp.lt.s32.totalorder %v2468, 300
        %vm2501 = vcmp.lt.s32.totalorder %v2469, 300
        %vm2502 = vcmp.lt.s32.totalorder %v2470, 300
        %vm2503 = vcmp.lt.s32.totalorder %v2471, 300
        %vm2504 = vcmp.lt.s32.totalorder %v2472, 300
        %vm2505 = vcmp.lt.s32.totalorder %v2473, 300
        %vm2506 = vcmp.lt.s32.totalorder %v2474, 300
        %vm2507 = vcmp.lt.s32.totalorder %v2475, 300
        %vm2508 = vcmp.lt.s32.totalorder %v2476, 300
        %vm2509 = vcmp.lt.s32.totalorder %v2477, 300
        %vm2510 = vcmp.lt.s32.totalorder %v2478, 300
        %vm2511 = vcmp.lt.s32.totalorder %v2479, 300
        %vm2512 = vcmp.lt.s32.totalorder %v2480, 300
        %vm2513 = vcmp.lt.s32.totalorder %v2481, 300
        %vm2514 = vcmp.lt.s32.totalorder %v2482, 300
        %v2515 = vsel %vm2483, %v2384, 0.0
        %v2516 = vsel %vm2484, %v2385, 0.0
        %v2517 = vsel %vm2485, %v2386, 0.0
        %v2518 = vsel %vm2486, %v2387, 0.0
        %v2519 = vsel %vm2487, %v2388, 0.0
        %v2520 = vsel %vm2488, %v2389, 0.0
        %v2521 = vsel %vm2489, %v2390, 0.0
        %v2522 = vsel %vm2490, %v2391, 0.0
        %v2523 = vsel %vm2491, %v2392, 0.0
        %v2524 = vsel %vm2492, %v2393, 0.0
        %v2525 = vsel %vm2493, %v2394, 0.0
        %v2526 = vsel %vm2494, %v2395, 0.0
        %v2527 = vsel %vm2495, %v2396, 0.0
        %v2528 = vsel %vm2496, %v2397, 0.0
        %v2529 = vsel %vm2497, %v2398, 0.0
        %v2530 = vsel %vm2498, %v2399, 0.0
        %v2531 = vsel %vm2499, %v2400, 0.0
        %v2532 = vsel %vm2500, %v2401, 0.0
        %v2533 = vsel %vm2501, %v2402, 0.0
        %v2534 = vsel %vm2502, %v2403, 0.0
        %v2535 = vsel %vm2503, %v2404, 0.0
        %v2536 = vsel %vm2504, %v2405, 0.0
        %v2537 = vsel %vm2505, %v2406, 0.0
        %v2538 = vsel %vm2506, %v2407, 0.0
        %v2539 = vsel %vm2507, %v2408, 0.0
        %v2540 = vsel %vm2508, %v2409, 0.0
        %v2541 = vsel %vm2509, %v2410, 0.0
        %v2542 = vsel %vm2510, %v2411, 0.0
        %v2543 = vsel %vm2511, %v2412, 0.0
        %v2544 = vsel %vm2512, %v2413, 0.0
        %v2545 = vsel %vm2513, %v2414, 0.0
        %v2546 = vsel %vm2514, %v2415, 0.0
        %v2547 = vadd.f32 %v2515, %v2531
        %v2548 = vadd.f32 %v2516, %v2532
        %v2549 = vadd.f32 %v2517, %v2533
        %v2550 = vadd.f32 %v2518, %v2534
        %v2551 = vadd.f32 %v2519, %v2535
        %v2552 = vadd.f32 %v2520, %v2536
        %v2553 = vadd.f32 %v2521, %v2537
        %v2554 = vadd.f32 %v2522, %v2538
        %v2555 = vadd.f32 %v2523, %v2539
        %v2556 = vadd.f32 %v2524, %v2540
        %v2557 = vadd.f32 %v2525, %v2541
        %v2558 = vadd.f32 %v2526, %v2542
        %v2559 = vadd.f32 %v2527, %v2543
        %v2560 = vadd.f32 %v2528, %v2544
        %v2561 = vadd.f32 %v2529, %v2545
        %v2562 = vadd.f32 %v2530, %v2546
        %v2563 = vadd.f32 %v2547, %v2555
        %v2564 = vadd.f32 %v2548, %v2556
        %v2565 = vadd.f32 %v2549, %v2557
        %v2566 = vadd.f32 %v2550, %v2558
        %v2567 = vadd.f32 %v2551, %v2559
        %v2568 = vadd.f32 %v2552, %v2560
        %v2569 = vadd.f32 %v2553, %v2561
        %v2570 = vadd.f32 %v2554, %v2562
        %v2571 = vadd.f32 %v2563, %v2567
        %v2572 = vadd.f32 %v2564, %v2568
        %v2573 = vadd.f32 %v2565, %v2569
        %v2574 = vadd.f32 %v2566, %v2570
        %v2575 = vadd.f32 %v2571, %v2573
        %v2576 = vadd.f32 %v2572, %v2574
        %v2577 = vadd.f32 %v2575, %v2576
        %2578 = vst [vmem:[%s652] sm:$0xff] %v2577
        %v2579 = vpack.c.bf16 %v1837, %v1834
        %v2580 = vpack.c.bf16 %v1845, %v1842
        %v2581 = vpack.c.bf16 %v1853, %v1850
        %v2582 = vpack.c.bf16 %v1861, %v1858
        %v2583 = vpack.c.bf16 %v1869, %v1866
        %v2584 = vpack.c.bf16 %v1877, %v1874
        %v2585 = vpack.c.bf16 %v1885, %v1882
        %v2586 = vpack.c.bf16 %v1893, %v1890
        %v2587 = vpack.c.bf16 %v1901, %v1898
        %v2588 = vpack.c.bf16 %v1909, %v1906
        %v2589 = vpack.c.bf16 %v1917, %v1914
        %v2590 = vpack.c.bf16 %v1925, %v1922
        %v2591 = vpack.c.bf16 %v1933, %v1930
        %v2592 = vpack.c.bf16 %v1941, %v1938
        %v2593 = vpack.c.bf16 %v1949, %v1946
        %v2594 = vpack.c.bf16 %v1957, %v1954
        %v2595 = vld [vmem:[#allocation11] sm:$0xf]
        %v2596 = vld [vmem:[#allocation11 + $0x4] sm:$0xf]
        %v2597 = vld [vmem:[#allocation11 + $0x8] sm:$0xf]
        %v2598 = vld [vmem:[#allocation11 + $0xc] sm:$0xf]
        %v2599 = vld [vmem:[#allocation11 + $0x10] sm:$0xf]
        %v2600 = vld [vmem:[#allocation11 + $0x14] sm:$0xf]
        %v2601 = vld [vmem:[#allocation11 + $0x18] sm:$0xf]
        %v2602 = vld [vmem:[#allocation11 + $0x1c] sm:$0xf]
        %v2603 = vld [vmem:[#allocation11 + $0x20] sm:$0xf]
        %v2604 = vld [vmem:[#allocation11 + $0x24] sm:$0xf]
        %v2605 = vld [vmem:[#allocation11 + $0x28] sm:$0xf]
        %v2606 = vld [vmem:[#allocation11 + $0x2c] sm:$0xf]
        %v2607 = vld [vmem:[#allocation11 + $0x30] sm:$0xf]
        %v2608 = vld [vmem:[#allocation11 + $0x34] sm:$0xf]
        %v2609 = vld [vmem:[#allocation11 + $0x38] sm:$0xf]
        %v2610 = vld [vmem:[#allocation11 + $0x3c] sm:$0xf]
        %v2611 = vld [vmem:[%s10] sm:$0x1]
        %v2613 = vlaneseq
        %v2614 = vshrl.u32 %v2613, 7
        %v2615 = vsub.s32 0, %v2614
        %v2616 = vrot.slane %v2611, %v2615
        %v2634 = vunpack.c.l.b16 %v2595
        %v2635 = vunpack.c.l.b16 %v2596
        %v2636 = vunpack.c.l.b16 %v2597
        %v2637 = vunpack.c.l.b16 %v2598
        %v2638 = vunpack.c.l.b16 %v2599
        %v2639 = vunpack.c.l.b16 %v2600
        %v2640 = vunpack.c.l.b16 %v2601
        %v2641 = vunpack.c.l.b16 %v2602
        %v2642 = vunpack.c.l.b16 %v2603
        %v2643 = vunpack.c.l.b16 %v2604
        %v2644 = vunpack.c.l.b16 %v2605
        %v2645 = vunpack.c.l.b16 %v2606
        %v2646 = vunpack.c.l.b16 %v2607
        %v2647 = vunpack.c.l.b16 %v2608
        %v2648 = vunpack.c.l.b16 %v2609
        %v2649 = vunpack.c.l.b16 %v2610
        %v2650 = vpack.c.b16 %v2635, %v2634
        %v2651 = vpack.c.b16 %v2637, %v2636
        %v2652 = vpack.c.b16 %v2639, %v2638
        %v2653 = vpack.c.b16 %v2641, %v2640
        %v2654 = vpack.c.b16 %v2643, %v2642
        %v2655 = vpack.c.b16 %v2645, %v2644
        %v2656 = vpack.c.b16 %v2647, %v2646
        %v2657 = vpack.c.b16 %v2649, %v2648
        %2666 = vmatprep.subr.bf16.mxu0 0
        %2667 = vmatpush1.bf16.msra.mxu0 %v2650
        %2668 = vmatprep.subr.bf16.mxu0 0
        %2669 = vmatpush1.bf16.msra.mxu0 %v2651
        %2670 = vmatprep.subr.bf16.mxu0 0
        %2671 = vmatpush1.bf16.msra.mxu0 %v2652
        %2672 = vmatprep.subr.bf16.mxu0 0
        %2673 = vmatpush1.bf16.msra.mxu0 %v2653
        %2674 = vmatprep.subr.bf16.mxu0 0
        %2675 = vmatpush1.bf16.msra.mxu0 %v2654
        %2676 = vmatprep.subr.bf16.mxu0 0
        %2677 = vmatpush1.bf16.msra.mxu0 %v2655
        %2678 = vmatprep.subr.bf16.mxu0 0
        %2679 = vmatpush1.bf16.msra.mxu0 %v2656
        %2680 = vmatprep.subr.bf16.mxu0 0
        %2681 = vmatpush1.bf16.msra.mxu0 %v2657
        %2682 = vmatprep.subr.bf16.mxu0 0
        %2683 = vmatpush1.bf16.msra.mxu0 0
        %2684 = vmatprep.subr.bf16.mxu0 0
        %2685 = vmatpush1.bf16.msra.mxu0 0
        %2686 = vmatprep.subr.bf16.mxu0 0
        %2687 = vmatpush1.bf16.msra.mxu0 0
        %2688 = vmatprep.subr.bf16.mxu0 0
        %2689 = vmatpush1.bf16.msra.mxu0 0
        %2690 = vmatprep.subr.bf16.mxu0 0
        %2691 = vmatpush1.bf16.msra.mxu0 0
        %2692 = vmatprep.subr.bf16.mxu0 0
        %2693 = vmatpush1.bf16.msra.mxu0 0
        %2694 = vmatprep.subr.bf16.mxu0 0
        %2695 = vmatpush1.bf16.msra.mxu0 0
        %2696 = vmatprep.subr.bf16.mxu0 0
        %2697 = vmatpush1.bf16.msra.mxu0 0
        %2698 = vmatprep.mubr.bf16.mxu0 0
        %2699 = vmatmul.mubr.bf16.gmra.mrb[0].mxu0 %v2579
        %v2700 = vpop.f32.mrb[0].mxu0
        %v2701 = vadd.f32 %v2616, %v2700
        %v2702 = vpop.f32.mrb[0].mxu0
        %v2703 = vpop.f32.mrb[0].mxu0
        %v2704 = vadd.f32 %v2616, %v2703
        %v2705 = vpop.f32.mrb[0].mxu0
        %2706 = vmatprep.mubr.bf16.mxu0 0
        %2707 = vmatmul.mubr.bf16.gmra.mrb[0].mxu0 %v2580
        %v2708 = vpop.f32.mrb[0].mxu0
        %v2709 = vadd.f32 %v2616, %v2708
        %v2710 = vpop.f32.mrb[0].mxu0
        %v2711 = vpop.f32.mrb[0].mxu0
        %v2712 = vadd.f32 %v2616, %v2711
        %v2713 = vpop.f32.mrb[0].mxu0
        %2714 = vmatprep.mubr.bf16.mxu0 0
        %2715 = vmatmul.mubr.bf16.gmra.mrb[0].mxu0 %v2581
        %v2716 = vpop.f32.mrb[0].mxu0
        %v2717 = vadd.f32 %v2616, %v2716
        %v2718 = vpop.f32.mrb[0].mxu0
        %v2719 = vpop.f32.mrb[0].mxu0
        %v2720 = vadd.f32 %v2616, %v2719
        %v2721 = vpop.f32.mrb[0].mxu0
        %2722 = vmatprep.mubr.bf16.mxu0 0
        %2723 = vmatmul.mubr.bf16.gmra.mrb[0].mxu0 %v2582
        %v2724 = vpop.f32.mrb[0].mxu0
        %v2725 = vadd.f32 %v2616, %v2724
        %v2726 = vpop.f32.mrb[0].mxu0
        %v2727 = vpop.f32.mrb[0].mxu0
        %v2728 = vadd.f32 %v2616, %v2727
        %v2729 = vpop.f32.mrb[0].mxu0
        %2730 = vmatprep.mubr.bf16.mxu0 0
        %2731 = vmatmul.mubr.bf16.gmra.mrb[0].mxu0 %v2583
        %v2732 = vpop.f32.mrb[0].mxu0
        %v2733 = vadd.f32 %v2616, %v2732
        %v2734 = vpop.f32.mrb[0].mxu0
        %v2735 = vpop.f32.mrb[0].mxu0
        %v2736 = vadd.f32 %v2616, %v2735
        %v2737 = vpop.f32.mrb[0].mxu0
        %2738 = vmatprep.mubr.bf16.mxu0 0
        %2739 = vmatmul.mubr.bf16.gmra.mrb[0].mxu0 %v2584
        %v2740 = vpop.f32.mrb[0].mxu0
        %v2741 = vadd.f32 %v2616, %v2740
        %v2742 = vpop.f32.mrb[0].mxu0
        %v2743 = vpop.f32.mrb[0].mxu0
        %v2744 = vadd.f32 %v2616, %v2743
        %v2745 = vpop.f32.mrb[0].mxu0
        %2746 = vmatprep.mubr.bf16.mxu0 0
        %2747 = vmatmul.mubr.bf16.gmra.mrb[0].mxu0 %v2585
        %v2748 = vpop.f32.mrb[0].mxu0
        %v2749 = vadd.f32 %v2616, %v2748
        %v2750 = vpop.f32.mrb[0].mxu0
        %v2751 = vpop.f32.mrb[0].mxu0
        %v2752 = vadd.f32 %v2616, %v2751
        %v2753 = vpop.f32.mrb[0].mxu0
        %2754 = vmatprep.mubr.bf16.mxu0 0
        %2755 = vmatmul.mubr.bf16.gmra.mrb[0].mxu0 %v2586
        %v2756 = vpop.f32.mrb[0].mxu0
        %v2757 = vadd.f32 %v2616, %v2756
        %v2758 = vpop.f32.mrb[0].mxu0
        %v2759 = vpop.f32.mrb[0].mxu0
        %v2760 = vadd.f32 %v2616, %v2759
        %v2761 = vpop.f32.mrb[0].mxu0
        %2762 = vmatprep.mubr.bf16.mxu0 0
        %2763 = vmatmul.mubr.bf16.gmra.mrb[0].mxu0 %v2587
        %v2764 = vpop.f32.mrb[0].mxu0
        %v2765 = vadd.f32 %v2616, %v2764
        %v2766 = vpop.f32.mrb[0].mxu0
        %v2767 = vpop.f32.mrb[0].mxu0
        %v2768 = vadd.f32 %v2616, %v2767
        %v2769 = vpop.f32.mrb[0].mxu0
        %2770 = vmatprep.mubr.bf16.mxu0 0
        %2771 = vmatmul.mubr.bf16.gmra.mrb[0].mxu0 %v2588
        %v2772 = vpop.f32.mrb[0].mxu0
        %v2773 = vadd.f32 %v2616, %v2772
        %v2774 = vpop.f32.mrb[0].mxu0
        %v2775 = vpop.f32.mrb[0].mxu0
        %v2776 = vadd.f32 %v2616, %v2775
        %v2777 = vpop.f32.mrb[0].mxu0
        %2778 = vmatprep.mubr.bf16.mxu0 0
        %2779 = vmatmul.mubr.bf16.gmra.mrb[0].mxu0 %v2589
        %v2780 = vpop.f32.mrb[0].mxu0
        %v2781 = vadd.f32 %v2616, %v2780
        %v2782 = vpop.f32.mrb[0].mxu0
        %v2783 = vpop.f32.mrb[0].mxu0
        %v2784 = vadd.f32 %v2616, %v2783
        %v2785 = vpop.f32.mrb[0].mxu0
        %2786 = vmatprep.mubr.bf16.mxu0 0
        %2787 = vmatmul.mubr.bf16.gmra.mrb[0].mxu0 %v2590
        %v2788 = vpop.f32.mrb[0].mxu0
        %v2789 = vadd.f32 %v2616, %v2788
        %v2790 = vpop.f32.mrb[0].mxu0
        %v2791 = vpop.f32.mrb[0].mxu0
        %v2792 = vadd.f32 %v2616, %v2791
        %v2793 = vpop.f32.mrb[0].mxu0
        %2794 = vmatprep.mubr.bf16.mxu0 0
        %2795 = vmatmul.mubr.bf16.gmra.mrb[0].mxu0 %v2591
        %v2796 = vpop.f32.mrb[0].mxu0
        %v2797 = vadd.f32 %v2616, %v2796
        %v2798 = vpop.f32.mrb[0].mxu0
        %v2799 = vpop.f32.mrb[0].mxu0
        %v2800 = vadd.f32 %v2616, %v2799
        %v2801 = vpop.f32.mrb[0].mxu0
        %2802 = vmatprep.mubr.bf16.mxu0 0
        %2803 = vmatmul.mubr.bf16.gmra.mrb[0].mxu0 %v2592
        %v2804 = vpop.f32.mrb[0].mxu0
        %v2805 = vadd.f32 %v2616, %v2804
        %v2806 = vpop.f32.mrb[0].mxu0
        %v2807 = vpop.f32.mrb[0].mxu0
        %v2808 = vadd.f32 %v2616, %v2807
        %v2809 = vpop.f32.mrb[0].mxu0
        %2810 = vmatprep.mubr.bf16.mxu0 0
        %2811 = vmatmul.mubr.bf16.gmra.mrb[0].mxu0 %v2593
        %v2812 = vpop.f32.mrb[0].mxu0
        %v2813 = vadd.f32 %v2616, %v2812
        %v2814 = vpop.f32.mrb[0].mxu0
        %v2815 = vpop.f32.mrb[0].mxu0
        %v2816 = vadd.f32 %v2616, %v2815
        %v2817 = vpop.f32.mrb[0].mxu0
        %2818 = vmatprep.mubr.bf16.mxu0 0
        %2819 = vmatmul.mubr.bf16.gmra.mrb[0].mxu0 %v2594
        %v2820 = vpop.f32.mrb[0].mxu0
        %v2821 = vadd.f32 %v2616, %v2820
        %v2822 = vpop.f32.mrb[0].mxu0
        %v2823 = vpop.f32.mrb[0].mxu0
        %v2824 = vadd.f32 %v2616, %v2823
        %v2825 = vpop.f32.mrb[0].mxu0
        %2826 = vdwg.mxu0
        %v2827 = vxor.u32 %v2701, 2147483648
        %v2828 = vxor.u32 %v2704, 2147483648
        %v2829 = vxor.u32 %v2709, 2147483648
        %v2830 = vxor.u32 %v2712, 2147483648
        %v2831 = vxor.u32 %v2717, 2147483648
        %v2832 = vxor.u32 %v2720, 2147483648
        %v2833 = vxor.u32 %v2725, 2147483648
        %v2834 = vxor.u32 %v2728, 2147483648
        %v2835 = vxor.u32 %v2733, 2147483648
        %v2836 = vxor.u32 %v2736, 2147483648
        %v2837 = vxor.u32 %v2741, 2147483648
        %v2838 = vxor.u32 %v2744, 2147483648
        %v2839 = vxor.u32 %v2749, 2147483648
        %v2840 = vxor.u32 %v2752, 2147483648
        %v2841 = vxor.u32 %v2757, 2147483648
        %v2842 = vxor.u32 %v2760, 2147483648
        %v2843 = vxor.u32 %v2765, 2147483648
        %v2844 = vxor.u32 %v2768, 2147483648
        %v2845 = vxor.u32 %v2773, 2147483648
        %v2846 = vxor.u32 %v2776, 2147483648
        %v2847 = vxor.u32 %v2781, 2147483648
        %v2848 = vxor.u32 %v2784, 2147483648
        %v2849 = vxor.u32 %v2789, 2147483648
        %v2850 = vxor.u32 %v2792, 2147483648
        %v2851 = vxor.u32 %v2797, 2147483648
        %v2852 = vxor.u32 %v2800, 2147483648
        %v2853 = vxor.u32 %v2805, 2147483648
        %v2854 = vxor.u32 %v2808, 2147483648
        %v2855 = vxor.u32 %v2813, 2147483648
        %v2856 = vxor.u32 %v2816, 2147483648
        %v2857 = vxor.u32 %v2821, 2147483648
        %v2858 = vxor.u32 %v2824, 2147483648
        %v2859 = vmul.f32 %v2827, 1.442695
        %v2860 = vpow.pop %v2859
        %v2861 = vmul.f32 %v2828, 1.442695
        %v2862 = vpow.pop %v2861
        %v2863 = vmul.f32 %v2829, 1.442695
        %v2864 = vpow.pop %v2863
        %v2865 = vmul.f32 %v2830, 1.442695
        %v2866 = vpow.pop %v2865
        %v2867 = vmul.f32 %v2831, 1.442695
        %v2868 = vpow.pop %v2867
        %v2869 = vmul.f32 %v2832, 1.442695
        %v2870 = vpow.pop %v2869
        %v2871 = vmul.f32 %v2833, 1.442695
        %v2872 = vpow.pop %v2871
        %v2873 = vmul.f32 %v2834, 1.442695
        %v2874 = vpow.pop %v2873
        %v2875 = vmul.f32 %v2835, 1.442695
        %v2876 = vpow.pop %v2875
        %v2877 = vmul.f32 %v2836, 1.442695
        %v2878 = vpow.pop %v2877
        %v2879 = vmul.f32 %v2837, 1.442695
        %v2880 = vpow.pop %v2879
        %v2881 = vmul.f32 %v2838, 1.442695
        %v2882 = vpow.pop %v2881
        %v2883 = vmul.f32 %v2839, 1.442695
        %v2884 = vpow.pop %v2883
        %v2885 = vmul.f32 %v2840, 1.442695
        %v2886 = vpow.pop %v2885
        %v2887 = vmul.f32 %v2841, 1.442695
        %v2888 = vpow.pop %v2887
        %v2889 = vmul.f32 %v2842, 1.442695
        %v2890 = vpow.pop %v2889
        %v2891 = vmul.f32 %v2843, 1.442695
        %v2892 = vpow.pop %v2891
        %v2893 = vmul.f32 %v2844, 1.442695
        %v2894 = vpow.pop %v2893
        %v2895 = vmul.f32 %v2845, 1.442695
        %v2896 = vpow.pop %v2895
        %v2897 = vmul.f32 %v2846, 1.442695
        %v2898 = vpow.pop %v2897
        %v2899 = vmul.f32 %v2847, 1.442695
        %v2900 = vpow.pop %v2899
        %v2901 = vmul.f32 %v2848, 1.442695
        %v2902 = vpow.pop %v2901
        %v2903 = vmul.f32 %v2849, 1.442695
        %v2904 = vpow.pop %v2903
        %v2905 = vmul.f32 %v2850, 1.442695
        %v2906 = vpow.pop %v2905
        %v2907 = vmul.f32 %v2851, 1.442695
        %v2908 = vpow.pop %v2907
        %v2909 = vmul.f32 %v2852, 1.442695
        %v2910 = vpow.pop %v2909
        %v2911 = vmul.f32 %v2853, 1.442695
        %v2912 = vpow.pop %v2911
        %v2913 = vmul.f32 %v2854, 1.442695
        %v2914 = vpow.pop %v2913
        %v2915 = vmul.f32 %v2855, 1.442695
        %v2916 = vpow.pop %v2915
        %v2917 = vmul.f32 %v2856, 1.442695
        %v2918 = vpow.pop %v2917
        %v2919 = vmul.f32 %v2857, 1.442695
        %v2920 = vpow.pop %v2919
        %v2921 = vmul.f32 %v2858, 1.442695
        %v2922 = vpow.pop %v2921
        %v2923 = vadd.f32 %v2860, 1.0
        %v2924 = vadd.f32 %v2862, 1.0
        %v2925 = vadd.f32 %v2864, 1.0
        %v2926 = vadd.f32 %v2866, 1.0
        %v2927 = vadd.f32 %v2868, 1.0
        %v2928 = vadd.f32 %v2870, 1.0
        %v2929 = vadd.f32 %v2872, 1.0
        %v2930 = vadd.f32 %v2874, 1.0
        %v2931 = vadd.f32 %v2876, 1.0
        %v2932 = vadd.f32 %v2878, 1.0
        %v2933 = vadd.f32 %v2880, 1.0
        %v2934 = vadd.f32 %v2882, 1.0
        %v2935 = vadd.f32 %v2884, 1.0
        %v2936 = vadd.f32 %v2886, 1.0
        %v2937 = vadd.f32 %v2888, 1.0
        %v2938 = vadd.f32 %v2890, 1.0
        %v2939 = vadd.f32 %v2892, 1.0
        %v2940 = vadd.f32 %v2894, 1.0
        %v2941 = vadd.f32 %v2896, 1.0
        %v2942 = vadd.f32 %v2898, 1.0
        %v2943 = vadd.f32 %v2900, 1.0
        %v2944 = vadd.f32 %v2902, 1.0
        %v2945 = vadd.f32 %v2904, 1.0
        %v2946 = vadd.f32 %v2906, 1.0
        %v2947 = vadd.f32 %v2908, 1.0
        %v2948 = vadd.f32 %v2910, 1.0
        %v2949 = vadd.f32 %v2912, 1.0
        %v2950 = vadd.f32 %v2914, 1.0
        %v2951 = vadd.f32 %v2916, 1.0
        %v2952 = vadd.f32 %v2918, 1.0
        %v2953 = vadd.f32 %v2920, 1.0
        %v2954 = vadd.f32 %v2922, 1.0
        %v2955 = vrcp.pop %v2923
        %v2956 = vmul.f32 1.0, %v2955
        %v2957 = vrcp.pop %v2924
        %v2958 = vmul.f32 1.0, %v2957
        %v2959 = vrcp.pop %v2925
        %v2960 = vmul.f32 1.0, %v2959
        %v2961 = vrcp.pop %v2926
        %v2962 = vmul.f32 1.0, %v2961
        %v2963 = vrcp.pop %v2927
        %v2964 = vmul.f32 1.0, %v2963
        %v2965 = vrcp.pop %v2928
        %v2966 = vmul.f32 1.0, %v2965
        %v2967 = vrcp.pop %v2929
        %v2968 = vmul.f32 1.0, %v2967
        %v2969 = vrcp.pop %v2930
        %v2970 = vmul.f32 1.0, %v2969
        %v2971 = vrcp.pop %v2931
        %v2972 = vmul.f32 1.0, %v2971
        %v2973 = vrcp.pop %v2932
        %v2974 = vmul.f32 1.0, %v2973
        %v2975 = vrcp.pop %v2933
        %v2976 = vmul.f32 1.0, %v2975
        %v2977 = vrcp.pop %v2934
        %v2978 = vmul.f32 1.0, %v2977
        %v2979 = vrcp.pop %v2935
        %v2980 = vmul.f32 1.0, %v2979
        %v2981 = vrcp.pop %v2936
        %v2982 = vmul.f32 1.0, %v2981
        %v2983 = vrcp.pop %v2937
        %v2984 = vmul.f32 1.0, %v2983
        %v2985 = vrcp.pop %v2938
        %v2986 = vmul.f32 1.0, %v2985
        %v2987 = vrcp.pop %v2939
        %v2988 = vmul.f32 1.0, %v2987
        %v2989 = vrcp.pop %v2940
        %v2990 = vmul.f32 1.0, %v2989
        %v2991 = vrcp.pop %v2941
        %v2992 = vmul.f32 1.0, %v2991
        %v2993 = vrcp.pop %v2942
        %v2994 = vmul.f32 1.0, %v2993
        %v2995 = vrcp.pop %v2943
        %v2996 = vmul.f32 1.0, %v2995
        %v2997 = vrcp.pop %v2944
        %v2998 = vmul.f32 1.0, %v2997
        %v2999 = vrcp.pop %v2945
        %v3000 = vmul.f32 1.0, %v2999
        %v3001 = vrcp.pop %v2946
        %v3002 = vmul.f32 1.0, %v3001
        %v3003 = vrcp.pop %v2947
        %v3004 = vmul.f32 1.0, %v3003
        %v3005 = vrcp.pop %v2948
        %v3006 = vmul.f32 1.0, %v3005
        %v3007 = vrcp.pop %v2949
        %v3008 = vmul.f32 1.0, %v3007
        %v3009 = vrcp.pop %v2950
        %v3010 = vmul.f32 1.0, %v3009
        %v3011 = vrcp.pop %v2951
        %v3012 = vmul.f32 1.0, %v3011
        %v3013 = vrcp.pop %v2952
        %v3014 = vmul.f32 1.0, %v3013
        %v3015 = vrcp.pop %v2953
        %v3016 = vmul.f32 1.0, %v3015
        %v3017 = vrcp.pop %v2954
        %v3018 = vmul.f32 1.0, %v3017
        %v3019 = vmul.f32 %v2701, %v2956
        %v3020 = vmul.f32 %v2704, %v2958
        %v3021 = vmul.f32 %v2709, %v2960
        %v3022 = vmul.f32 %v2712, %v2962
        %v3023 = vmul.f32 %v2717, %v2964
        %v3024 = vmul.f32 %v2720, %v2966
        %v3025 = vmul.f32 %v2725, %v2968
        %v3026 = vmul.f32 %v2728, %v2970
        %v3027 = vmul.f32 %v2733, %v2972
        %v3028 = vmul.f32 %v2736, %v2974
        %v3029 = vmul.f32 %v2741, %v2976
        %v3030 = vmul.f32 %v2744, %v2978
        %v3031 = vmul.f32 %v2749, %v2980
        %v3032 = vmul.f32 %v2752, %v2982
        %v3033 = vmul.f32 %v2757, %v2984
        %v3034 = vmul.f32 %v2760, %v2986
        %v3035 = vmul.f32 %v2765, %v2988
        %v3036 = vmul.f32 %v2768, %v2990
        %v3037 = vmul.f32 %v2773, %v2992
        %v3038 = vmul.f32 %v2776, %v2994
        %v3039 = vmul.f32 %v2781, %v2996
        %v3040 = vmul.f32 %v2784, %v2998
        %v3041 = vmul.f32 %v2789, %v3000
        %v3042 = vmul.f32 %v2792, %v3002
        %v3043 = vmul.f32 %v2797, %v3004
        %v3044 = vmul.f32 %v2800, %v3006
        %v3045 = vmul.f32 %v2805, %v3008
        %v3046 = vmul.f32 %v2808, %v3010
        %v3047 = vmul.f32 %v2813, %v3012
        %v3048 = vmul.f32 %v2816, %v3014
        %v3049 = vmul.f32 %v2821, %v3016
        %v3050 = vmul.f32 %v2824, %v3018
        %v3051 = vpack.c.bf16 %v3020, %v3019
        %v3052 = vpack.c.bf16 %v3022, %v3021
        %v3053 = vpack.c.bf16 %v3024, %v3023
        %v3054 = vpack.c.bf16 %v3026, %v3025
        %v3055 = vpack.c.bf16 %v3028, %v3027
        %v3056 = vpack.c.bf16 %v3030, %v3029
        %v3057 = vpack.c.bf16 %v3032, %v3031
        %v3058 = vpack.c.bf16 %v3034, %v3033
        %v3059 = vpack.c.bf16 %v3036, %v3035
        %v3060 = vpack.c.bf16 %v3038, %v3037
        %v3061 = vpack.c.bf16 %v3040, %v3039
        %v3062 = vpack.c.bf16 %v3042, %v3041
        %v3063 = vpack.c.bf16 %v3044, %v3043
        %v3064 = vpack.c.bf16 %v3046, %v3045
        %v3065 = vpack.c.bf16 %v3048, %v3047
        %v3066 = vpack.c.bf16 %v3050, %v3049
        %v3067 = vld [vmem:[#allocation13] sm:$0xf]
        %v3068 = vld [vmem:[#allocation13 + $0x4] sm:$0xf]
        %v3069 = vld [vmem:[#allocation13 + $0x8] sm:$0xf]
        %v3070 = vld [vmem:[#allocation13 + $0xc] sm:$0xf]
        %v3071 = vld [vmem:[#allocation13 + $0x10] sm:$0xf]
        %v3072 = vld [vmem:[#allocation13 + $0x14] sm:$0xf]
        %v3073 = vld [vmem:[#allocation13 + $0x18] sm:$0xf]
        %v3074 = vld [vmem:[#allocation13 + $0x1c] sm:$0xf]
        %v3075 = vld [vmem:[#allocation13 + $0x20] sm:$0xf]
        %v3076 = vld [vmem:[#allocation13 + $0x24] sm:$0xf]
        %v3077 = vld [vmem:[#allocation13 + $0x28] sm:$0xf]
        %v3078 = vld [vmem:[#allocation13 + $0x2c] sm:$0xf]
        %v3079 = vld [vmem:[#allocation13 + $0x30] sm:$0xf]
        %v3080 = vld [vmem:[#allocation13 + $0x34] sm:$0xf]
        %v3081 = vld [vmem:[#allocation13 + $0x38] sm:$0xf]
        %v3082 = vld [vmem:[#allocation13 + $0x3c] sm:$0xf]
        %v3083 = vld [vmem:[%s12] sm:$0x1]
        %v3085 = vlaneseq
        %v3086 = vshrl.u32 %v3085, 7
        %v3087 = vsub.s32 0, %v3086
        %v3088 = vrot.slane %v3083, %v3087
        %v3106 = vunpack.c.l.b16 %v3067
        %v3107 = vunpack.c.l.b16 %v3068
        %v3108 = vunpack.c.l.b16 %v3069
        %v3109 = vunpack.c.l.b16 %v3070
        %v3110 = vunpack.c.l.b16 %v3071
        %v3111 = vunpack.c.l.b16 %v3072
        %v3112 = vunpack.c.l.b16 %v3073
        %v3113 = vunpack.c.l.b16 %v3074
        %v3114 = vunpack.c.l.b16 %v3075
        %v3115 = vunpack.c.l.b16 %v3076
        %v3116 = vunpack.c.l.b16 %v3077
        %v3117 = vunpack.c.l.b16 %v3078
        %v3118 = vunpack.c.l.b16 %v3079
        %v3119 = vunpack.c.l.b16 %v3080
        %v3120 = vunpack.c.l.b16 %v3081
        %v3121 = vunpack.c.l.b16 %v3082
        %v3122 = vpack.c.b16 %v3107, %v3106
        %v3123 = vpack.c.b16 %v3109, %v3108
        %v3124 = vpack.c.b16 %v3111, %v3110
        %v3125 = vpack.c.b16 %v3113, %v3112
        %v3126 = vpack.c.b16 %v3115, %v3114
        %v3127 = vpack.c.b16 %v3117, %v3116
        %v3128 = vpack.c.b16 %v3119, %v3118
        %v3129 = vpack.c.b16 %v3121, %v3120
        %3138 = vmatprep.subr.bf16.mxu0 0
        %3139 = vmatpush1.bf16.msra.mxu0 %v3122
        %3140 = vmatprep.subr.bf16.mxu0 0
        %3141 = vmatpush1.bf16.msra.mxu0 %v3123
        %3142 = vmatprep.subr.bf16.mxu0 0
        %3143 = vmatpush1.bf16.msra.mxu0 %v3124
        %3144 = vmatprep.subr.bf16.mxu0 0
        %3145 = vmatpush1.bf16.msra.mxu0 %v3125
        %3146 = vmatprep.subr.bf16.mxu0 0
        %3147 = vmatpush1.bf16.msra.mxu0 %v3126
        %3148 = vmatprep.subr.bf16.mxu0 0
        %3149 = vmatpush1.bf16.msra.mxu0 %v3127
        %3150 = vmatprep.subr.bf16.mxu0 0
        %3151 = vmatpush1.bf16.msra.mxu0 %v3128
        %3152 = vmatprep.subr.bf16.mxu0 0
        %3153 = vmatpush1.bf16.msra.mxu0 %v3129
        %3154 = vmatprep.subr.bf16.mxu0 0
        %3155 = vmatpush1.bf16.msra.mxu0 0
        %3156 = vmatprep.subr.bf16.mxu0 0
        %3157 = vmatpush1.bf16.msra.mxu0 0
        %3158 = vmatprep.subr.bf16.mxu0 0
        %3159 = vmatpush1.bf16.msra.mxu0 0
        %3160 = vmatprep.subr.bf16.mxu0 0
        %3161 = vmatpush1.bf16.msra.mxu0 0
        %3162 = vmatprep.subr.bf16.mxu0 0
        %3163 = vmatpush1.bf16.msra.mxu0 0
        %3164 = vmatprep.subr.bf16.mxu0 0
        %3165 = vmatpush1.bf16.msra.mxu0 0
        %3166 = vmatprep.subr.bf16.mxu0 0
        %3167 = vmatpush1.bf16.msra.mxu0 0
        %3168 = vmatprep.subr.bf16.mxu0 0
        %3169 = vmatpush1.bf16.msra.mxu0 0
        %3170 = vmatprep.mubr.bf16.mxu0 0
        %3171 = vmatmul.mubr.bf16.gmra.mrb[0].mxu0 %v3051
        %v3172 = vpop.f32.mrb[0].mxu0
        %v3173 = vadd.f32 %v3088, %v3172
        %v3174 = vpop.f32.mrb[0].mxu0
        %v3175 = vpop.f32.mrb[0].mxu0
        %v3176 = vadd.f32 %v3088, %v3175
        %v3177 = vpop.f32.mrb[0].mxu0
        %3178 = vmatprep.mubr.bf16.mxu0 0
        %3179 = vmatmul.mubr.bf16.gmra.mrb[0].mxu0 %v3052
        %v3180 = vpop.f32.mrb[0].mxu0
        %v3181 = vadd.f32 %v3088, %v3180
        %v3182 = vpop.f32.mrb[0].mxu0
        %v3183 = vpop.f32.mrb[0].mxu0
        %v3184 = vadd.f32 %v3088, %v3183
        %v3185 = vpop.f32.mrb[0].mxu0
        %3186 = vmatprep.mubr.bf16.mxu0 0
        %3187 = vmatmul.mubr.bf16.gmra.mrb[0].mxu0 %v3053
        %v3188 = vpop.f32.mrb[0].mxu0
        %v3189 = vadd.f32 %v3088, %v3188
        %v3190 = vpop.f32.mrb[0].mxu0
        %v3191 = vpop.f32.mrb[0].mxu0
        %v3192 = vadd.f32 %v3088, %v3191
        %v3193 = vpop.f32.mrb[0].mxu0
        %3194 = vmatprep.mubr.bf16.mxu0 0
        %3195 = vmatmul.mubr.bf16.gmra.mrb[0].mxu0 %v3054
        %v3196 = vpop.f32.mrb[0].mxu0
        %v3197 = vadd.f32 %v3088, %v3196
        %v3198 = vpop.f32.mrb[0].mxu0
        %v3199 = vpop.f32.mrb[0].mxu0
        %v3200 = vadd.f32 %v3088, %v3199
        %v3201 = vpop.f32.mrb[0].mxu0
        %3202 = vmatprep.mubr.bf16.mxu0 0
        %3203 = vmatmul.mubr.bf16.gmra.mrb[0].mxu0 %v3055
        %v3204 = vpop.f32.mrb[0].mxu0
        %v3205 = vadd.f32 %v3088, %v3204
        %v3206 = vpop.f32.mrb[0].mxu0
        %v3207 = vpop.f32.mrb[0].mxu0
        %v3208 = vadd.f32 %v3088, %v3207
        %v3209 = vpop.f32.mrb[0].mxu0
        %3210 = vmatprep.mubr.bf16.mxu0 0
        %3211 = vmatmul.mubr.bf16.gmra.mrb[0].mxu0 %v3056
        %v3212 = vpop.f32.mrb[0].mxu0
        %v3213 = vadd.f32 %v3088, %v3212
        %v3214 = vpop.f32.mrb[0].mxu0
        %v3215 = vpop.f32.mrb[0].mxu0
        %v3216 = vadd.f32 %v3088, %v3215
        %v3217 = vpop.f32.mrb[0].mxu0
        %3218 = vmatprep.mubr.bf16.mxu0 0
        %3219 = vmatmul.mubr.bf16.gmra.mrb[0].mxu0 %v3057
        %v3220 = vpop.f32.mrb[0].mxu0
        %v3221 = vadd.f32 %v3088, %v3220
        %v3222 = vpop.f32.mrb[0].mxu0
        %v3223 = vpop.f32.mrb[0].mxu0
        %v3224 = vadd.f32 %v3088, %v3223
        %v3225 = vpop.f32.mrb[0].mxu0
        %3226 = vmatprep.mubr.bf16.mxu0 0
        %3227 = vmatmul.mubr.bf16.gmra.mrb[0].mxu0 %v3058
        %v3228 = vpop.f32.mrb[0].mxu0
        %v3229 = vadd.f32 %v3088, %v3228
        %v3230 = vpop.f32.mrb[0].mxu0
        %v3231 = vpop.f32.mrb[0].mxu0
        %v3232 = vadd.f32 %v3088, %v3231
        %v3233 = vpop.f32.mrb[0].mxu0
        %3234 = vmatprep.mubr.bf16.mxu0 0
        %3235 = vmatmul.mubr.bf16.gmra.mrb[0].mxu0 %v3059
        %v3236 = vpop.f32.mrb[0].mxu0
        %v3237 = vadd.f32 %v3088, %v3236
        %v3238 = vpop.f32.mrb[0].mxu0
        %v3239 = vpop.f32.mrb[0].mxu0
        %v3240 = vadd.f32 %v3088, %v3239
        %v3241 = vpop.f32.mrb[0].mxu0
        %3242 = vmatprep.mubr.bf16.mxu0 0
        %3243 = vmatmul.mubr.bf16.gmra.mrb[0].mxu0 %v3060
        %v3244 = vpop.f32.mrb[0].mxu0
        %v3245 = vadd.f32 %v3088, %v3244
        %v3246 = vpop.f32.mrb[0].mxu0
        %v3247 = vpop.f32.mrb[0].mxu0
        %v3248 = vadd.f32 %v3088, %v3247
        %v3249 = vpop.f32.mrb[0].mxu0
        %3250 = vmatprep.mubr.bf16.mxu0 0
        %3251 = vmatmul.mubr.bf16.gmra.mrb[0].mxu0 %v3061
        %v3252 = vpop.f32.mrb[0].mxu0
        %v3253 = vadd.f32 %v3088, %v3252
        %v3254 = vpop.f32.mrb[0].mxu0
        %v3255 = vpop.f32.mrb[0].mxu0
        %v3256 = vadd.f32 %v3088, %v3255
        %v3257 = vpop.f32.mrb[0].mxu0
        %3258 = vmatprep.mubr.bf16.mxu0 0
        %3259 = vmatmul.mubr.bf16.gmra.mrb[0].mxu0 %v3062
        %v3260 = vpop.f32.mrb[0].mxu0
        %v3261 = vadd.f32 %v3088, %v3260
        %v3262 = vpop.f32.mrb[0].mxu0
        %v3263 = vpop.f32.mrb[0].mxu0
        %v3264 = vadd.f32 %v3088, %v3263
        %v3265 = vpop.f32.mrb[0].mxu0
        %3266 = vmatprep.mubr.bf16.mxu0 0
        %3267 = vmatmul.mubr.bf16.gmra.mrb[0].mxu0 %v3063
        %v3268 = vpop.f32.mrb[0].mxu0
        %v3269 = vadd.f32 %v3088, %v3268
        %v3270 = vpop.f32.mrb[0].mxu0
        %v3271 = vpop.f32.mrb[0].mxu0
        %v3272 = vadd.f32 %v3088, %v3271
        %v3273 = vpop.f32.mrb[0].mxu0
        %3274 = vmatprep.mubr.bf16.mxu0 0
        %3275 = vmatmul.mubr.bf16.gmra.mrb[0].mxu0 %v3064
        %v3276 = vpop.f32.mrb[0].mxu0
        %v3277 = vadd.f32 %v3088, %v3276
        %v3278 = vpop.f32.mrb[0].mxu0
        %v3279 = vpop.f32.mrb[0].mxu0
        %v3280 = vadd.f32 %v3088, %v3279
        %v3281 = vpop.f32.mrb[0].mxu0
        %3282 = vmatprep.mubr.bf16.mxu0 0
        %3283 = vmatmul.mubr.bf16.gmra.mrb[0].mxu0 %v3065
        %v3284 = vpop.f32.mrb[0].mxu0
        %v3285 = vadd.f32 %v3088, %v3284
        %v3286 = vpop.f32.mrb[0].mxu0
        %v3287 = vpop.f32.mrb[0].mxu0
        %v3288 = vadd.f32 %v3088, %v3287
        %v3289 = vpop.f32.mrb[0].mxu0
        %3290 = vmatprep.mubr.bf16.mxu0 0
        %3291 = vmatmul.mubr.bf16.gmra.mrb[0].mxu0 %v3066
        %v3292 = vpop.f32.mrb[0].mxu0
        %v3293 = vadd.f32 %v3088, %v3292
        %v3294 = vpop.f32.mrb[0].mxu0
        %v3295 = vpop.f32.mrb[0].mxu0
        %v3296 = vadd.f32 %v3088, %v3295
        %v3297 = vpop.f32.mrb[0].mxu0
        %3298 = vdwg.mxu0
        %v3299 = vxor.u32 %v3173, 2147483648
        %v3300 = vxor.u32 %v3176, 2147483648
        %v3301 = vxor.u32 %v3181, 2147483648
        %v3302 = vxor.u32 %v3184, 2147483648
        %v3303 = vxor.u32 %v3189, 2147483648
        %v3304 = vxor.u32 %v3192, 2147483648
        %v3305 = vxor.u32 %v3197, 2147483648
        %v3306 = vxor.u32 %v3200, 2147483648
        %v3307 = vxor.u32 %v3205, 2147483648
        %v3308 = vxor.u32 %v3208, 2147483648
        %v3309 = vxor.u32 %v3213, 2147483648
        %v3310 = vxor.u32 %v3216, 2147483648
        %v3311 = vxor.u32 %v3221, 2147483648
        %v3312 = vxor.u32 %v3224, 2147483648
        %v3313 = vxor.u32 %v3229, 2147483648
        %v3314 = vxor.u32 %v3232, 2147483648
        %v3315 = vxor.u32 %v3237, 2147483648
        %v3316 = vxor.u32 %v3240, 2147483648
        %v3317 = vxor.u32 %v3245, 2147483648
        %v3318 = vxor.u32 %v3248, 2147483648
        %v3319 = vxor.u32 %v3253, 2147483648
        %v3320 = vxor.u32 %v3256, 2147483648
        %v3321 = vxor.u32 %v3261, 2147483648
        %v3322 = vxor.u32 %v3264, 2147483648
        %v3323 = vxor.u32 %v3269, 2147483648
        %v3324 = vxor.u32 %v3272, 2147483648
        %v3325 = vxor.u32 %v3277, 2147483648
        %v3326 = vxor.u32 %v3280, 2147483648
        %v3327 = vxor.u32 %v3285, 2147483648
        %v3328 = vxor.u32 %v3288, 2147483648
        %v3329 = vxor.u32 %v3293, 2147483648
        %v3330 = vxor.u32 %v3296, 2147483648
        %v3331 = vmul.f32 %v3299, 1.442695
        %v3332 = vpow.pop %v3331
        %v3333 = vmul.f32 %v3300, 1.442695
        %v3334 = vpow.pop %v3333
        %v3335 = vmul.f32 %v3301, 1.442695
        %v3336 = vpow.pop %v3335
        %v3337 = vmul.f32 %v3302, 1.442695
        %v3338 = vpow.pop %v3337
        %v3339 = vmul.f32 %v3303, 1.442695
        %v3340 = vpow.pop %v3339
        %v3341 = vmul.f32 %v3304, 1.442695
        %v3342 = vpow.pop %v3341
        %v3343 = vmul.f32 %v3305, 1.442695
        %v3344 = vpow.pop %v3343
        %v3345 = vmul.f32 %v3306, 1.442695
        %v3346 = vpow.pop %v3345
        %v3347 = vmul.f32 %v3307, 1.442695
        %v3348 = vpow.pop %v3347
        %v3349 = vmul.f32 %v3308, 1.442695
        %v3350 = vpow.pop %v3349
        %v3351 = vmul.f32 %v3309, 1.442695
        %v3352 = vpow.pop %v3351
        %v3353 = vmul.f32 %v3310, 1.442695
        %v3354 = vpow.pop %v3353
        %v3355 = vmul.f32 %v3311, 1.442695
        %v3356 = vpow.pop %v3355
        %v3357 = vmul.f32 %v3312, 1.442695
        %v3358 = vpow.pop %v3357
        %v3359 = vmul.f32 %v3313, 1.442695
        %v3360 = vpow.pop %v3359
        %v3361 = vmul.f32 %v3314, 1.442695
        %v3362 = vpow.pop %v3361
        %v3363 = vmul.f32 %v3315, 1.442695
        %v3364 = vpow.pop %v3363
        %v3365 = vmul.f32 %v3316, 1.442695
        %v3366 = vpow.pop %v3365
        %v3367 = vmul.f32 %v3317, 1.442695
        %v3368 = vpow.pop %v3367
        %v3369 = vmul.f32 %v3318, 1.442695
        %v3370 = vpow.pop %v3369
        %v3371 = vmul.f32 %v3319, 1.442695
        %v3372 = vpow.pop %v3371
        %v3373 = vmul.f32 %v3320, 1.442695
        %v3374 = vpow.pop %v3373
        %v3375 = vmul.f32 %v3321, 1.442695
        %v3376 = vpow.pop %v3375
        %v3377 = vmul.f32 %v3322, 1.442695
        %v3378 = vpow.pop %v3377
        %v3379 = vmul.f32 %v3323, 1.442695
        %v3380 = vpow.pop %v3379
        %v3381 = vmul.f32 %v3324, 1.442695
        %v3382 = vpow.pop %v3381
        %v3383 = vmul.f32 %v3325, 1.442695
        %v3384 = vpow.pop %v3383
        %v3385 = vmul.f32 %v3326, 1.442695
        %v3386 = vpow.pop %v3385
        %v3387 = vmul.f32 %v3327, 1.442695
        %v3388 = vpow.pop %v3387
        %v3389 = vmul.f32 %v3328, 1.442695
        %v3390 = vpow.pop %v3389
        %v3391 = vmul.f32 %v3329, 1.442695
        %v3392 = vpow.pop %v3391
        %v3393 = vmul.f32 %v3330, 1.442695
        %v3394 = vpow.pop %v3393
        %v3395 = vadd.f32 %v3332, 1.0
        %v3396 = vadd.f32 %v3334, 1.0
        %v3397 = vadd.f32 %v3336, 1.0
        %v3398 = vadd.f32 %v3338, 1.0
        %v3399 = vadd.f32 %v3340, 1.0
        %v3400 = vadd.f32 %v3342, 1.0
        %v3401 = vadd.f32 %v3344, 1.0
        %v3402 = vadd.f32 %v3346, 1.0
        %v3403 = vadd.f32 %v3348, 1.0
        %v3404 = vadd.f32 %v3350, 1.0
        %v3405 = vadd.f32 %v3352, 1.0
        %v3406 = vadd.f32 %v3354, 1.0
        %v3407 = vadd.f32 %v3356, 1.0
        %v3408 = vadd.f32 %v3358, 1.0
        %v3409 = vadd.f32 %v3360, 1.0
        %v3410 = vadd.f32 %v3362, 1.0
        %v3411 = vadd.f32 %v3364, 1.0
        %v3412 = vadd.f32 %v3366, 1.0
        %v3413 = vadd.f32 %v3368, 1.0
        %v3414 = vadd.f32 %v3370, 1.0
        %v3415 = vadd.f32 %v3372, 1.0
        %v3416 = vadd.f32 %v3374, 1.0
        %v3417 = vadd.f32 %v3376, 1.0
        %v3418 = vadd.f32 %v3378, 1.0
        %v3419 = vadd.f32 %v3380, 1.0
        %v3420 = vadd.f32 %v3382, 1.0
        %v3421 = vadd.f32 %v3384, 1.0
        %v3422 = vadd.f32 %v3386, 1.0
        %v3423 = vadd.f32 %v3388, 1.0
        %v3424 = vadd.f32 %v3390, 1.0
        %v3425 = vadd.f32 %v3392, 1.0
        %v3426 = vadd.f32 %v3394, 1.0
        %v3427 = vrcp.pop %v3395
        %v3428 = vmul.f32 1.0, %v3427
        %v3429 = vrcp.pop %v3396
        %v3430 = vmul.f32 1.0, %v3429
        %v3431 = vrcp.pop %v3397
        %v3432 = vmul.f32 1.0, %v3431
        %v3433 = vrcp.pop %v3398
        %v3434 = vmul.f32 1.0, %v3433
        %v3435 = vrcp.pop %v3399
        %v3436 = vmul.f32 1.0, %v3435
        %v3437 = vrcp.pop %v3400
        %v3438 = vmul.f32 1.0, %v3437
        %v3439 = vrcp.pop %v3401
        %v3440 = vmul.f32 1.0, %v3439
        %v3441 = vrcp.pop %v3402
        %v3442 = vmul.f32 1.0, %v3441
        %v3443 = vrcp.pop %v3403
        %v3444 = vmul.f32 1.0, %v3443
        %v3445 = vrcp.pop %v3404
        %v3446 = vmul.f32 1.0, %v3445
        %v3447 = vrcp.pop %v3405
        %v3448 = vmul.f32 1.0, %v3447
        %v3449 = vrcp.pop %v3406
        %v3450 = vmul.f32 1.0, %v3449
        %v3451 = vrcp.pop %v3407
        %v3452 = vmul.f32 1.0, %v3451
        %v3453 = vrcp.pop %v3408
        %v3454 = vmul.f32 1.0, %v3453
        %v3455 = vrcp.pop %v3409
        %v3456 = vmul.f32 1.0, %v3455
        %v3457 = vrcp.pop %v3410
        %v3458 = vmul.f32 1.0, %v3457
        %v3459 = vrcp.pop %v3411
        %v3460 = vmul.f32 1.0, %v3459
        %v3461 = vrcp.pop %v3412
        %v3462 = vmul.f32 1.0, %v3461
        %v3463 = vrcp.pop %v3413
        %v3464 = vmul.f32 1.0, %v3463
        %v3465 = vrcp.pop %v3414
        %v3466 = vmul.f32 1.0, %v3465
        %v3467 = vrcp.pop %v3415
        %v3468 = vmul.f32 1.0, %v3467
        %v3469 = vrcp.pop %v3416
        %v3470 = vmul.f32 1.0, %v3469
        %v3471 = vrcp.pop %v3417
        %v3472 = vmul.f32 1.0, %v3471
        %v3473 = vrcp.pop %v3418
        %v3474 = vmul.f32 1.0, %v3473
        %v3475 = vrcp.pop %v3419
        %v3476 = vmul.f32 1.0, %v3475
        %v3477 = vrcp.pop %v3420
        %v3478 = vmul.f32 1.0, %v3477
        %v3479 = vrcp.pop %v3421
        %v3480 = vmul.f32 1.0, %v3479
        %v3481 = vrcp.pop %v3422
        %v3482 = vmul.f32 1.0, %v3481
        %v3483 = vrcp.pop %v3423
        %v3484 = vmul.f32 1.0, %v3483
        %v3485 = vrcp.pop %v3424
        %v3486 = vmul.f32 1.0, %v3485
        %v3487 = vrcp.pop %v3425
        %v3488 = vmul.f32 1.0, %v3487
        %v3489 = vrcp.pop %v3426
        %v3490 = vmul.f32 1.0, %v3489
        %v3491 = vmul.f32 %v3173, %v3428
        %v3492 = vmul.f32 %v3176, %v3430
        %v3493 = vmul.f32 %v3181, %v3432
        %v3494 = vmul.f32 %v3184, %v3434
        %v3495 = vmul.f32 %v3189, %v3436
        %v3496 = vmul.f32 %v3192, %v3438
        %v3497 = vmul.f32 %v3197, %v3440
        %v3498 = vmul.f32 %v3200, %v3442
        %v3499 = vmul.f32 %v3205, %v3444
        %v3500 = vmul.f32 %v3208, %v3446
        %v3501 = vmul.f32 %v3213, %v3448
        %v3502 = vmul.f32 %v3216, %v3450
        %v3503 = vmul.f32 %v3221, %v3452
        %v3504 = vmul.f32 %v3224, %v3454
        %v3505 = vmul.f32 %v3229, %v3456
        %v3506 = vmul.f32 %v3232, %v3458
        %v3507 = vmul.f32 %v3237, %v3460
        %v3508 = vmul.f32 %v3240, %v3462
        %v3509 = vmul.f32 %v3245, %v3464
        %v3510 = vmul.f32 %v3248, %v3466
        %v3511 = vmul.f32 %v3253, %v3468
        %v3512 = vmul.f32 %v3256, %v3470
        %v3513 = vmul.f32 %v3261, %v3472
        %v3514 = vmul.f32 %v3264, %v3474
        %v3515 = vmul.f32 %v3269, %v3476
        %v3516 = vmul.f32 %v3272, %v3478
        %v3517 = vmul.f32 %v3277, %v3480
        %v3518 = vmul.f32 %v3280, %v3482
        %v3519 = vmul.f32 %v3285, %v3484
        %v3520 = vmul.f32 %v3288, %v3486
        %v3521 = vmul.f32 %v3293, %v3488
        %v3522 = vmul.f32 %v3296, %v3490
        %v3523 = vpack.c.bf16 %v3492, %v3491
        %v3524 = vpack.c.bf16 %v3494, %v3493
        %v3525 = vpack.c.bf16 %v3496, %v3495
        %v3526 = vpack.c.bf16 %v3498, %v3497
        %v3527 = vpack.c.bf16 %v3500, %v3499
        %v3528 = vpack.c.bf16 %v3502, %v3501
        %v3529 = vpack.c.bf16 %v3504, %v3503
        %v3530 = vpack.c.bf16 %v3506, %v3505
        %v3531 = vpack.c.bf16 %v3508, %v3507
        %v3532 = vpack.c.bf16 %v3510, %v3509
        %v3533 = vpack.c.bf16 %v3512, %v3511
        %v3534 = vpack.c.bf16 %v3514, %v3513
        %v3535 = vpack.c.bf16 %v3516, %v3515
        %v3536 = vpack.c.bf16 %v3518, %v3517
        %v3537 = vpack.c.bf16 %v3520, %v3519
        %v3538 = vpack.c.bf16 %v3522, %v3521
        %v3539 = vld [vmem:[#allocation14] sm:$0xf]
        %v3540 = vld [vmem:[#allocation14 + $0x4] sm:$0xf]
        %v3541 = vld [vmem:[#allocation14 + $0x8] sm:$0xf]
        %v3542 = vld [vmem:[#allocation14 + $0xc] sm:$0xf]
        %v3543 = vld [vmem:[#allocation14 + $0x10] sm:$0xf]
        %v3544 = vld [vmem:[#allocation14 + $0x14] sm:$0xf]
        %v3545 = vld [vmem:[#allocation14 + $0x18] sm:$0xf]
        %v3546 = vld [vmem:[#allocation14 + $0x1c] sm:$0xf]
        %v3547 = vld [vmem:[#allocation14 + $0x20] sm:$0xf]
        %v3548 = vld [vmem:[#allocation14 + $0x24] sm:$0xf]
        %v3549 = vld [vmem:[#allocation14 + $0x28] sm:$0xf]
        %v3550 = vld [vmem:[#allocation14 + $0x2c] sm:$0xf]
        %v3551 = vld [vmem:[#allocation14 + $0x30] sm:$0xf]
        %v3552 = vld [vmem:[#allocation14 + $0x34] sm:$0xf]
        %v3553 = vld [vmem:[#allocation14 + $0x38] sm:$0xf]
        %v3554 = vld [vmem:[#allocation14 + $0x3c] sm:$0xf]
        %v3555 = vld [vmem:[%s14] sm:$0x1]
        %v3557 = vlaneseq
        %v3558 = vshrl.u32 %v3557, 7
        %v3559 = vsub.s32 0, %v3558
        %v3560 = vrot.slane %v3555, %v3559
        %v3578 = vunpack.c.l.b16 %v3539
        %v3579 = vunpack.c.l.b16 %v3540
        %v3580 = vunpack.c.l.b16 %v3541
        %v3581 = vunpack.c.l.b16 %v3542
        %v3582 = vunpack.c.l.b16 %v3543
        %v3583 = vunpack.c.l.b16 %v3544
        %v3584 = vunpack.c.l.b16 %v3545
        %v3585 = vunpack.c.l.b16 %v3546
        %v3586 = vunpack.c.l.b16 %v3547
        %v3587 = vunpack.c.l.b16 %v3548
        %v3588 = vunpack.c.l.b16 %v3549
        %v3589 = vunpack.c.l.b16 %v3550
        %v3590 = vunpack.c.l.b16 %v3551
        %v3591 = vunpack.c.l.b16 %v3552
        %v3592 = vunpack.c.l.b16 %v3553
        %v3593 = vunpack.c.l.b16 %v3554
        %v3594 = vpack.c.b16 %v3579, %v3578
        %v3595 = vpack.c.b16 %v3581, %v3580
        %v3596 = vpack.c.b16 %v3583, %v3582
        %v3597 = vpack.c.b16 %v3585, %v3584
        %v3598 = vpack.c.b16 %v3587, %v3586
        %v3599 = vpack.c.b16 %v3589, %v3588
        %v3600 = vpack.c.b16 %v3591, %v3590
        %v3601 = vpack.c.b16 %v3593, %v3592
        %3610 = vmatprep.subr.bf16.mxu0 0
        %3611 = vmatpush1.bf16.msra.mxu0 %v3594
        %3612 = vmatprep.subr.bf16.mxu0 0
        %3613 = vmatpush1.bf16.msra.mxu0 %v3595
        %3614 = vmatprep.subr.bf16.mxu0 0
        %3615 = vmatpush1.bf16.msra.mxu0 %v3596
        %3616 = vmatprep.subr.bf16.mxu0 0
        %3617 = vmatpush1.bf16.msra.mxu0 %v3597
        %3618 = vmatprep.subr.bf16.mxu0 0
        %3619 = vmatpush1.bf16.msra.mxu0 %v3598
        %3620 = vmatprep.subr.bf16.mxu0 0
        %3621 = vmatpush1.bf16.msra.mxu0 %v3599
        %3622 = vmatprep.subr.bf16.mxu0 0
        %3623 = vmatpush1.bf16.msra.mxu0 %v3600
        %3624 = vmatprep.subr.bf16.mxu0 0
        %3625 = vmatpush1.bf16.msra.mxu0 %v3601
        %3626 = vmatprep.subr.bf16.mxu0 0
        %3627 = vmatpush1.bf16.msra.mxu0 0
        %3628 = vmatprep.subr.bf16.mxu0 0
        %3629 = vmatpush1.bf16.msra.mxu0 0
        %3630 = vmatprep.subr.bf16.mxu0 0
        %3631 = vmatpush1.bf16.msra.mxu0 0
        %3632 = vmatprep.subr.bf16.mxu0 0
        %3633 = vmatpush1.bf16.msra.mxu0 0
        %3634 = vmatprep.subr.bf16.mxu0 0
        %3635 = vmatpush1.bf16.msra.mxu0 0
        %3636 = vmatprep.subr.bf16.mxu0 0
        %3637 = vmatpush1.bf16.msra.mxu0 0
        %3638 = vmatprep.subr.bf16.mxu0 0
        %3639 = vmatpush1.bf16.msra.mxu0 0
        %3640 = vmatprep.subr.bf16.mxu0 0
        %3641 = vmatpush1.bf16.msra.mxu0 0
        %3642 = vmatprep.mubr.bf16.mxu0 0
        %3643 = vmatmul.mubr.bf16.gmra.mrb[0].mxu0 %v3523
        %v3644 = vpop.f32.mrb[0].mxu0
        %v3645 = vadd.f32 %v3560, %v3644
        %v3646 = vpop.f32.mrb[0].mxu0
        %v3647 = vpop.f32.mrb[0].mxu0
        %v3648 = vadd.f32 %v3560, %v3647
        %v3649 = vpop.f32.mrb[0].mxu0
        %3650 = vmatprep.mubr.bf16.mxu0 0
        %3651 = vmatmul.mubr.bf16.gmra.mrb[0].mxu0 %v3524
        %v3652 = vpop.f32.mrb[0].mxu0
        %v3653 = vadd.f32 %v3560, %v3652
        %v3654 = vpop.f32.mrb[0].mxu0
        %v3655 = vpop.f32.mrb[0].mxu0
        %v3656 = vadd.f32 %v3560, %v3655
        %v3657 = vpop.f32.mrb[0].mxu0
        %3658 = vmatprep.mubr.bf16.mxu0 0
        %3659 = vmatmul.mubr.bf16.gmra.mrb[0].mxu0 %v3525
        %v3660 = vpop.f32.mrb[0].mxu0
        %v3661 = vadd.f32 %v3560, %v3660
        %v3662 = vpop.f32.mrb[0].mxu0
        %v3663 = vpop.f32.mrb[0].mxu0
        %v3664 = vadd.f32 %v3560, %v3663
        %v3665 = vpop.f32.mrb[0].mxu0
        %3666 = vmatprep.mubr.bf16.mxu0 0
        %3667 = vmatmul.mubr.bf16.gmra.mrb[0].mxu0 %v3526
        %v3668 = vpop.f32.mrb[0].mxu0
        %v3669 = vadd.f32 %v3560, %v3668
        %v3670 = vpop.f32.mrb[0].mxu0
        %v3671 = vpop.f32.mrb[0].mxu0
        %v3672 = vadd.f32 %v3560, %v3671
        %v3673 = vpop.f32.mrb[0].mxu0
        %3674 = vmatprep.mubr.bf16.mxu0 0
        %3675 = vmatmul.mubr.bf16.gmra.mrb[0].mxu0 %v3527
        %v3676 = vpop.f32.mrb[0].mxu0
        %v3677 = vadd.f32 %v3560, %v3676
        %v3678 = vpop.f32.mrb[0].mxu0
        %v3679 = vpop.f32.mrb[0].mxu0
        %v3680 = vadd.f32 %v3560, %v3679
        %v3681 = vpop.f32.mrb[0].mxu0
        %3682 = vmatprep.mubr.bf16.mxu0 0
        %3683 = vmatmul.mubr.bf16.gmra.mrb[0].mxu0 %v3528
        %v3684 = vpop.f32.mrb[0].mxu0
        %v3685 = vadd.f32 %v3560, %v3684
        %v3686 = vpop.f32.mrb[0].mxu0
        %v3687 = vpop.f32.mrb[0].mxu0
        %v3688 = vadd.f32 %v3560, %v3687
        %v3689 = vpop.f32.mrb[0].mxu0
        %3690 = vmatprep.mubr.bf16.mxu0 0
        %3691 = vmatmul.mubr.bf16.gmra.mrb[0].mxu0 %v3529
        %v3692 = vpop.f32.mrb[0].mxu0
        %v3693 = vadd.f32 %v3560, %v3692
        %v3694 = vpop.f32.mrb[0].mxu0
        %v3695 = vpop.f32.mrb[0].mxu0
        %v3696 = vadd.f32 %v3560, %v3695
        %v3697 = vpop.f32.mrb[0].mxu0
        %3698 = vmatprep.mubr.bf16.mxu0 0
        %3699 = vmatmul.mubr.bf16.gmra.mrb[0].mxu0 %v3530
        %v3700 = vpop.f32.mrb[0].mxu0
        %v3701 = vadd.f32 %v3560, %v3700
        %v3702 = vpop.f32.mrb[0].mxu0
        %v3703 = vpop.f32.mrb[0].mxu0
        %v3704 = vadd.f32 %v3560, %v3703
        %v3705 = vpop.f32.mrb[0].mxu0
        %3706 = vmatprep.mubr.bf16.mxu0 0
        %3707 = vmatmul.mubr.bf16.gmra.mrb[0].mxu0 %v3531
        %v3708 = vpop.f32.mrb[0].mxu0
        %v3709 = vadd.f32 %v3560, %v3708
        %v3710 = vpop.f32.mrb[0].mxu0
        %v3711 = vpop.f32.mrb[0].mxu0
        %v3712 = vadd.f32 %v3560, %v3711
        %v3713 = vpop.f32.mrb[0].mxu0
        %3714 = vmatprep.mubr.bf16.mxu0 0
        %3715 = vmatmul.mubr.bf16.gmra.mrb[0].mxu0 %v3532
        %v3716 = vpop.f32.mrb[0].mxu0
        %v3717 = vadd.f32 %v3560, %v3716
        %v3718 = vpop.f32.mrb[0].mxu0
        %v3719 = vpop.f32.mrb[0].mxu0
        %v3720 = vadd.f32 %v3560, %v3719
        %v3721 = vpop.f32.mrb[0].mxu0
        %3722 = vmatprep.mubr.bf16.mxu0 0
        %3723 = vmatmul.mubr.bf16.gmra.mrb[0].mxu0 %v3533
        %v3724 = vpop.f32.mrb[0].mxu0
        %v3725 = vadd.f32 %v3560, %v3724
        %v3726 = vpop.f32.mrb[0].mxu0
        %v3727 = vpop.f32.mrb[0].mxu0
        %v3728 = vadd.f32 %v3560, %v3727
        %v3729 = vpop.f32.mrb[0].mxu0
        %3730 = vmatprep.mubr.bf16.mxu0 0
        %3731 = vmatmul.mubr.bf16.gmra.mrb[0].mxu0 %v3534
        %v3732 = vpop.f32.mrb[0].mxu0
        %v3733 = vadd.f32 %v3560, %v3732
        %v3734 = vpop.f32.mrb[0].mxu0
        %v3735 = vpop.f32.mrb[0].mxu0
        %v3736 = vadd.f32 %v3560, %v3735
        %v3737 = vpop.f32.mrb[0].mxu0
        %3738 = vmatprep.mubr.bf16.mxu0 0
        %3739 = vmatmul.mubr.bf16.gmra.mrb[0].mxu0 %v3535
        %v3740 = vpop.f32.mrb[0].mxu0
        %v3741 = vadd.f32 %v3560, %v3740
        %v3742 = vpop.f32.mrb[0].mxu0
        %v3743 = vpop.f32.mrb[0].mxu0
        %v3744 = vadd.f32 %v3560, %v3743
        %v3745 = vpop.f32.mrb[0].mxu0
        %3746 = vmatprep.mubr.bf16.mxu0 0
        %3747 = vmatmul.mubr.bf16.gmra.mrb[0].mxu0 %v3536
        %v3748 = vpop.f32.mrb[0].mxu0
        %v3749 = vadd.f32 %v3560, %v3748
        %v3750 = vpop.f32.mrb[0].mxu0
        %v3751 = vpop.f32.mrb[0].mxu0
        %v3752 = vadd.f32 %v3560, %v3751
        %v3753 = vpop.f32.mrb[0].mxu0
        %3754 = vmatprep.mubr.bf16.mxu0 0
        %3755 = vmatmul.mubr.bf16.gmra.mrb[0].mxu0 %v3537
        %v3756 = vpop.f32.mrb[0].mxu0
        %v3757 = vadd.f32 %v3560, %v3756
        %v3758 = vpop.f32.mrb[0].mxu0
        %v3759 = vpop.f32.mrb[0].mxu0
        %v3760 = vadd.f32 %v3560, %v3759
        %v3761 = vpop.f32.mrb[0].mxu0
        %3762 = vmatprep.mubr.bf16.mxu0 0
        %3763 = vmatmul.mubr.bf16.gmra.mrb[0].mxu0 %v3538
        %v3764 = vpop.f32.mrb[0].mxu0
        %v3765 = vadd.f32 %v3560, %v3764
        %v3766 = vpop.f32.mrb[0].mxu0
        %v3767 = vpop.f32.mrb[0].mxu0
        %v3768 = vadd.f32 %v3560, %v3767
        %v3769 = vpop.f32.mrb[0].mxu0
        %3770 = vdwg.mxu0
        %3771 = vst [vmem:[%s645] sm:$0xff] %v3645
        %3772 = vst [vmem:[%s645 + $0x8] sm:$0xff] %v3648
        %3773 = vst [vmem:[%s645 + $0x10] sm:$0xff] %v3653
        %3774 = vst [vmem:[%s645 + $0x18] sm:$0xff] %v3656
        %3775 = vst [vmem:[%s645 + $0x20] sm:$0xff] %v3661
        %3776 = vst [vmem:[%s645 + $0x28] sm:$0xff] %v3664
        %3777 = vst [vmem:[%s645 + $0x30] sm:$0xff] %v3669
        %3778 = vst [vmem:[%s645 + $0x38] sm:$0xff] %v3672
        %3779 = vst [vmem:[%s645 + $0x40] sm:$0xff] %v3677
        %3780 = vst [vmem:[%s645 + $0x48] sm:$0xff] %v3680
        %3781 = vst [vmem:[%s645 + $0x50] sm:$0xff] %v3685
        %3782 = vst [vmem:[%s645 + $0x58] sm:$0xff] %v3688
        %3783 = vst [vmem:[%s645 + $0x60] sm:$0xff] %v3693
        %3784 = vst [vmem:[%s645 + $0x68] sm:$0xff] %v3696
        %3785 = vst [vmem:[%s645 + $0x70] sm:$0xff] %v3701
        %3786 = vst [vmem:[%s645 + $0x78] sm:$0xff] %v3704
        %3787 = vst [vmem:[%s645 + $0x80] sm:$0xff] %v3709
        %3788 = vst [vmem:[%s645 + $0x88] sm:$0xff] %v3712
        %3789 = vst [vmem:[%s645 + $0x90] sm:$0xff] %v3717
        %3790 = vst [vmem:[%s645 + $0x98] sm:$0xff] %v3720
        %3791 = vst [vmem:[%s645 + $0xa0] sm:$0xff] %v3725
        %3792 = vst [vmem:[%s645 + $0xa8] sm:$0xff] %v3728
        %3793 = vst [vmem:[%s645 + $0xb0] sm:$0xff] %v3733
        %3794 = vst [vmem:[%s645 + $0xb8] sm:$0xff] %v3736
        %3795 = vst [vmem:[%s645 + $0xc0] sm:$0xff] %v3741
        %3796 = vst [vmem:[%s645 + $0xc8] sm:$0xff] %v3744
        %3797 = vst [vmem:[%s645 + $0xd0] sm:$0xff] %v3749
        %3798 = vst [vmem:[%s645 + $0xd8] sm:$0xff] %v3752
        %3799 = vst [vmem:[%s645 + $0xe0] sm:$0xff] %v3757
        %3800 = vst [vmem:[%s645 + $0xe8] sm:$0xff] %v3760
        %3801 = vst [vmem:[%s645 + $0xf0] sm:$0xff] %v3765
        %3802 = vst [vmem:[%s645 + $0xf8] sm:$0xff] %v3768
        %s3803 = sand.u32 %s369, 1
        %s3804 = scalar_lea.sflag [#allocation4], %s3803
        %s3805 = sand.u32 %s369, 1
        %s3806 = smul.addr %s3805, 256
        %s3807 = scalar_lea.vmem [#allocation16], %s3806
        %s3808 = sand.u32 %s395, 1
        %s3809 = scalar_lea.sflag [#allocation18], %s3808
        %s3810 = sand.u32 %s395, 1
        %s3811 = smul.addr %s3810, 8
        %s3812 = scalar_lea.vmem [#allocation17], %s3811
        // Predicated region
        $region113: #{tpu_custom_call.1} parent=79 // pred_check
          %p3813 = pneg %p379
        $region114: #{tpu_custom_call.1} parent=79 // pred_check_branch
          %3815 = sbr.rel (%p3813) target = $region116
        $region115: #{tpu_custom_call.1} parent=79 // pred_region
          %s3816 = smul.u32 32, %s41
          %s3818 = ssub.s32 4096, 4096
          %3819 = vsyncadd %s3804, %s3818
          %s3820 = smul.addr %s3816, 128
          %s3821 = scalar_lea.hbm %s15, %s3820
          %s3822 = sshll.u32 %s3807, 4
          %s3823 = int_to_ptr.vmem [resolvable:$true] %s3822
          %3828 = dma.vmem_to_hbm [thread:$0]  %s3823, 4096, %s3821, %s3804, 128, 128, 8
        $region116: #{tpu_custom_call.1} parent=79 // pred_fallthru
          _
        // Predicated region
        $region117: #{tpu_custom_call.1} parent=79 // pred_check
          %p3829 = pneg %p405
        $region118: #{tpu_custom_call.1} parent=79 // pred_check_branch
          %3831 = sbr.rel (%p3829) target = $region120
        $region119: #{tpu_custom_call.1} parent=79 // pred_region
          %s3833 = ssub.s32 128, 128
          %3834 = vsyncadd %s3809, %s3833
          %s3835 = smul.addr %s41, 128
          %s3836 = scalar_lea.hbm %s16, %s3835
          %s3838 = sshll.u32 %s3812, 4
          %s3839 = int_to_ptr.vmem [resolvable:$true] %s3838
          %3841 = dma.vmem_to_hbm [thread:$0]  %s3839, 128, %s3836, %s3809
        $region120: #{tpu_custom_call.1} parent=79 // pred_fallthru
          _
      $region80: #{tpu_custom_call.1} parent=5 // pred_fallthru
        _
      %p3842 = scmp.le.s32.totalorder 2, %s36
      // Predicated region
      $region121: #{tpu_custom_call.1} parent=5 // pred_check
        %p3843 = pneg %p3842
      $region122: #{tpu_custom_call.1} parent=5 // pred_check_branch
        %3845 = sbr.rel (%p3843) target = $region124
      $region123: #{tpu_custom_call.1} parent=5 // pred_region
        %s3846 = ssub.s32 %s36, 2
        // Predicated region
        $region125: #{tpu_custom_call.1} parent=123 // pred_check
          %p3847 = pneg %p385
        $region126: #{tpu_custom_call.1} parent=123 // pred_check_branch
          %3849 = sbr.rel (%p3847) target = $region128
        $region127: #{tpu_custom_call.1} parent=123 // pred_region
          %s3850 = sand.u32 %s370, 1
          %s3851 = scalar_lea.sflag [#allocation4], %s3850
          %s3852 = sand.u32 %s370, 1
          %s3853 = smul.addr %s3852, 256
          %s3854 = scalar_lea.vmem [#allocation16], %s3853
          %3855 = dma.done %s3851, 4096
        $region128: #{tpu_custom_call.1} parent=123 // pred_fallthru
          _
        // Predicated region
        $region129: #{tpu_custom_call.1} parent=123 // pred_check
          %p3856 = pneg %p411
        $region130: #{tpu_custom_call.1} parent=123 // pred_check_branch
          %3858 = sbr.rel (%p3856) target = $region132
        $region131: #{tpu_custom_call.1} parent=123 // pred_region
          %s3859 = sand.u32 %s396, 1
          %s3860 = scalar_lea.sflag [#allocation18], %s3859
          %s3861 = sand.u32 %s396, 1
          %s3862 = smul.addr %s3861, 8
          %s3863 = scalar_lea.vmem [#allocation17], %s3862
          %3864 = dma.done %s3860, 128
        $region132: #{tpu_custom_call.1} parent=123 // pred_fallthru
          _
      $region124: #{tpu_custom_call.1} parent=5 // pred_fallthru
        _
    $region6: #{tpu_custom_call.1} parent=1 // loop_footer
      %s40 = sadd.s32 1, %s36
    $region7: #{tpu_custom_call.1} parent=1 // loop_footer_branch
      %35 = sbr.rel target = $region3
    $region8: #{tpu_custom_call.1} parent=1 // loop_exit
      _
    %3865 = vsyncpa [#allocation3], 1
    %s3866 = scalar_lea.sflag [#allocation3], 1
    %3867 = vsyncpa %s3866, 1
    %3868 = vsyncpa [#allocation6], 1
    %3869 = vsyncpa [#allocation9], 1
    %3870 = vsyncpa [#allocation12], 1
    %3871 = vsyncpa [#allocation15], 1
    %3872 = vsyncpa [#allocation4], 1
    %s3873 = scalar_lea.sflag [#allocation4], 1
    %3874 = vsyncpa %s3873, 1
    %3875 = vsyncpa [#allocation18], 1
    %s3876 = scalar_lea.sflag [#allocation18], 1
    %3877 = vsyncpa %s3876, 1

</llo_original>
